<compile_context>
chip_gen: v5e
topology: v5e:2x2
jax: 0.10.0
libtpu: 0.0.40
codegen_flags: <defaults>
</compile_context>

<pallas_src>
import jax
import jax.numpy as jnp
from jax.experimental import pallas as pl
from jax.experimental.pallas import tpu as pltpu


# ---------------------------------------------------------------------------
# Static problem geometry (minimal clean input size for the three convs).
# ---------------------------------------------------------------------------
_H_IN = 36                  # input spatial: 36 -> 8 -> 3 -> 1 through the convs
_S2D = 4                    # space-to-depth factor == stride of conv1
_X2 = _H_IN // _S2D         # 9  : spatial size after space-to-depth(4)
_C2D = _S2D * _S2D * 3      # 48 : s2d channels, ordered (hr, wr, cin)
_OH1, _OH2, _OH3 = 8, 3, 1  # conv output spatial sizes
_CPAD = 128                 # every conv output padded to 128 lanes
_B = 8                      # batch elements per grid step (sublane-aligned)


def _encoder_fused_kernel(x_ref, w1_ref, b1_ref, w2_ref, b2_ref,
                          w3_ref, b3_ref, o_ref, a1_ref):
    """Fused conv1+conv2+conv3 (+ReLU) for a block of _B batch elements.

    All matmul rows are ordered (spatial..., batch) so every per-tap LHS is a
    whole, sublane-aligned (B, 128) tile — no single-row gathers anywhere.
    """
    f32 = jnp.float32

    # ---- Layer 1: Conv2d(3,32,8,s=4)+ReLU.  After space-to-depth(4) this is
    #      a 2x2 stride-1 conv over 48 channels: 9x9 -> 8x8.
    acc1 = jnp.zeros((_OH1 * _OH1 * _B, _CPAD), f32)
    for p in range(2):
        for q in range(2):
            # Contiguous window slice; reshape is a pure vreg-array reindex.
            lhs = x_ref[p:p + _OH1, q:q + _OH1, :, :].reshape(
                _OH1 * _OH1 * _B, _C2D)                        # (512, 48)
            acc1 = acc1 + jnp.dot(lhs, w1_ref[p, q],
                                  preferred_element_type=f32)
    a1 = jnp.maximum(acc1 + b1_ref[...], 0.0)                  # (512, 128)
    # Park layer-1 activations in VMEM scratch laid out (oh, ow, b, c) so each
    # layer-2 tap read below is a contiguous aligned (B, 128) tile load.
    a1_ref[...] = a1.reshape(_OH1, _OH1, _B, _CPAD)

    # ---- Layer 2: Conv2d(32,64,4,s=2)+ReLU: 8x8 -> 3x3.
    acc2 = jnp.zeros((_OH2 * _OH2 * _B, _CPAD), f32)
    for kh in range(4):
        for kw in range(4):
            # 9 aligned (B, 128) tiles stacked along M -> one dense M=72 dot
            # per tap (weights loaded into the MXU once per tap).
            lhs = jnp.concatenate(
                [a1_ref[2 * oh + kh, 2 * ow + kw]
                 for oh in range(_OH2) for ow in range(_OH2)], axis=0)
            acc2 = acc2 + jnp.dot(lhs, w2_ref[kh, kw],
                                  preferred_element_type=f32)
    a2 = jnp.maximum(acc2 + b2_ref[...], 0.0).reshape(_OH2 * _OH2, _B, _CPAD)

    # ---- Layer 3: Conv2d(64,64,3,s=1)+ReLU: 3x3 -> 1x1 (M = _B per tap).
    acc3 = jnp.zeros((_B, _CPAD), f32)
    for kh in range(3):
        for kw in range(3):
            acc3 = acc3 + jnp.dot(a2[kh * _OH2 + kw], w3_ref[kh, kw],
                                  preferred_element_type=f32)
    # Final spatial is 1x1, so NHWC flatten == PyTorch's NCHW flatten.
    # Lane-dense (B, 128) output block; wrapper slices the 64 real channels.
    o_ref[...] = jnp.maximum(acc3 + b3_ref[...], 0.0)


def _space_to_depth_t(x_nchw):
    """(Np,3,36,36) NCHW -> (9, 9, Np, 48); channel order (hr, wr, cin)."""
    Np = x_nchw.shape[0]
    x = x_nchw.transpose(0, 2, 3, 1)                        # NHWC
    x = x.reshape(Np, _X2, _S2D, _X2, _S2D, 3)              # (n,h2,hr,w2,wr,c)
    x = x.transpose(1, 3, 0, 2, 4, 5)                       # (h2,w2,n,hr,wr,c)
    return x.reshape(_X2, _X2, Np, _C2D)


def prepare_params(params):
    """One-time weight prep (tap-major, lane-padded).  Call once, reuse."""
    (w1, b1), (w2, b2), (w3, b3) = params
    # Layer 1: fold stride-4 into the space-to-depth view -> 2x2 taps of (48, Cout).
    w1t = w1.reshape(32, 3, 2, 4, 2, 4)             # (co, c, p, hr, q, wr)
    w1t = w1t.transpose(2, 4, 3, 5, 1, 0)           # (p, q, hr, wr, c, co)
    w1t = w1t.reshape(2, 2, _C2D, 32)
    w1p = jnp.pad(w1t, ((0, 0), (0, 0), (0, 0), (0, _CPAD - 32)))
    b1p = jnp.pad(b1, (0, _CPAD - 32)).reshape(1, _CPAD)
    # Layer 2: (kh, kw, cin, cout), cin/cout zero-padded to 128.
    w2t = w2.transpose(2, 3, 1, 0)                  # (4, 4, 32, 64)
    w2p = jnp.pad(w2t, ((0, 0), (0, 0), (0, _CPAD - 32), (0, _CPAD - 64)))
    b2p = jnp.pad(b2, (0, _CPAD - 64)).reshape(1, _CPAD)
    # Layer 3.
    w3t = w3.transpose(2, 3, 1, 0)                  # (3, 3, 64, 64)
    w3p = jnp.pad(w3t, ((0, 0), (0, 0), (0, _CPAD - 64), (0, _CPAD - 64)))
    b3p = jnp.pad(b3, (0, _CPAD - 64)).reshape(1, _CPAD)
    return (w1p, b1p, w2p, b2p, w3p, b3p)


@jax.jit
def encoder_forward(x, prepped):
    """x: (N, 3, 36, 36) f32 NCHW.  prepped: output of prepare_params()."""
    w1p, b1p, w2p, b2p, w3p, b3p = prepped
    N, C, H, W = x.shape
    assert (C, H, W) == (3, _H_IN, _H_IN), (C, H, W)
    n_pad = (-N) % _B
    if n_pad:
        x = jnp.pad(x, ((0, n_pad), (0, 0), (0, 0), (0, 0)))
    Np = N + n_pad
    xs2d = _space_to_depth_t(x)                              # (9, 9, Np, 48)

    grid_spec = pltpu.PrefetchScalarGridSpec(
        num_scalar_prefetch=0,
        grid=(Np // _B,),
        in_specs=[
            pl.BlockSpec((_X2, _X2, _B, _C2D), lambda n: (0, 0, n, 0)),
            pl.BlockSpec((2, 2, _C2D, _CPAD), lambda n: (0, 0, 0, 0)),
            pl.BlockSpec((1, _CPAD), lambda n: (0, 0)),
            pl.BlockSpec((4, 4, _CPAD, _CPAD), lambda n: (0, 0, 0, 0)),
            pl.BlockSpec((1, _CPAD), lambda n: (0, 0)),
            pl.BlockSpec((3, 3, _CPAD, _CPAD), lambda n: (0, 0, 0, 0)),
            pl.BlockSpec((1, _CPAD), lambda n: (0, 0)),
        ],
        out_specs=pl.BlockSpec((_B, _CPAD), lambda n: (n, 0)),
        scratch_shapes=[pltpu.VMEM((_OH1, _OH1, _B, _CPAD), jnp.float32)],
    )
    out = pl.pallas_call(
        _encoder_fused_kernel,
        out_shape=jax.ShapeDtypeStruct((Np, _CPAD), jnp.float32),
        grid_spec=grid_spec,
        compiler_params=pltpu.CompilerParams(
            dimension_semantics=("parallel",),       # shard grid over TCs (v7x)
            vmem_limit_bytes=32 * 1024 * 1024,       # explicit; footprint ~4 MiB
        ),
    )(xs2d, w1p, b1p, w2p, b2p, w3p, b3p)
    return out[:N, :64]


# ---------------------------------------------------------------------------
# Init + pure-JAX reference (XLA convs) for the correctness check.
# ---------------------------------------------------------------------------
_CONV_SPECS = [(3, 32, 8), (32, 64, 4), (64, 64, 3)]   # (Cin, Cout, kernel)
_STRIDES = (4, 2, 1)


def init_encoder_params(key):
    """Deterministic init mimicking PyTorch Conv2d default (uniform +-1/sqrt(fan_in))."""
    params = []
    for i, (cin, cout, k) in enumerate(_CONV_SPECS):
        kw_, kb_ = jax.random.split(jax.random.fold_in(key, i))
        bound = 1.0 / jnp.sqrt(jnp.float32(cin * k * k))
        w = jax.random.uniform(kw_, (cout, cin, k, k), jnp.float32, -bound, bound)
        b = jax.random.uniform(kb_, (cout,), jnp.float32, -bound, bound)
        params.append((w, b))
    return params


def encoder_reference(x, params):
    for (w, b), s in zip(params, _STRIDES):
        y = jax.lax.conv_general_dilated(
            x, w, (s, s), "VALID", dimension_numbers=("NCHW", "OIHW", "NCHW"))
        x = jax.nn.relu(y + b[None, :, None, None])
    return x.reshape(x.shape[0], -1)


if __name__ == "__main__":
    key = jax.random.PRNGKey(0)
    xkey, pkey = jax.random.split(key)
    # NCHW, 3 channels, 36x36 spatial (36 -> 8 -> 3 -> 1); batch 32 -> 4 grid steps.
    N = 32
    x = jax.random.normal(xkey, (N, 3, _H_IN, _H_IN), jnp.float32)
    params = init_encoder_params(pkey)

    prepped = jax.block_until_ready(prepare_params(params))   # one-time prep
    out = jax.block_until_ready(encoder_forward(x, prepped))
    ref = encoder_reference(x, params)

    assert out.shape == (N, 64), out.shape
    max_err = float(jnp.max(jnp.abs(out - ref)))
    assert jnp.allclose(out, ref, atol=1e-4, rtol=1e-4), max_err
    print("KERNEL_OK")
</pallas_src>

<mosaic_0001>
module attributes {stable_mosaic.version = 11 : i64} {
  func.func @_encoder_fused_kernel(%arg0: i32, %arg1: memref<9x9x8x48xf32, #tpu.memory_space<vmem>>, %arg2: memref<2x2x48x128xf32, #tpu.memory_space<vmem>>, %arg3: memref<1x128xf32, #tpu.memory_space<vmem>>, %arg4: memref<4x4x128x128xf32, #tpu.memory_space<vmem>>, %arg5: memref<1x128xf32, #tpu.memory_space<vmem>>, %arg6: memref<3x3x128x128xf32, #tpu.memory_space<vmem>>, %arg7: memref<1x128xf32, #tpu.memory_space<vmem>>, %arg8: memref<8x128xf32, #tpu.memory_space<vmem>>, %arg9: memref<8x8x8x128xf32, #tpu.memory_space<vmem>>) attributes {dimension_semantics = [#tpu.dimension_semantics<parallel>], iteration_bounds = array<i64: 4>, scalar_prefetch = 0 : i64, scratch_operands = 1 : i64, tpu.core_type = #tpu.core_type<tc>, window_params = [{transform_indices = @transform_0, window_bounds = array<i64: 9, 9, 8, 48>}, {pipeline_mode = #tpu.pipeline_mode<synchronous>, transform_indices = @transform_1, window_bounds = array<i64: 2, 2, 48, 128>}, {pipeline_mode = #tpu.pipeline_mode<synchronous>, transform_indices = @transform_2, window_bounds = array<i64: 1, 128>}, {pipeline_mode = #tpu.pipeline_mode<synchronous>, transform_indices = @transform_3, window_bounds = array<i64: 4, 4, 128, 128>}, {pipeline_mode = #tpu.pipeline_mode<synchronous>, transform_indices = @transform_4, window_bounds = array<i64: 1, 128>}, {pipeline_mode = #tpu.pipeline_mode<synchronous>, transform_indices = @transform_5, window_bounds = array<i64: 3, 3, 128, 128>}, {pipeline_mode = #tpu.pipeline_mode<synchronous>, transform_indices = @transform_6, window_bounds = array<i64: 1, 128>}, {transform_indices = @transform_7, window_bounds = array<i64: 8, 128>}]} {
    %cst = arith.constant 0.000000e+00 : f32
    %0 = vector.broadcast %cst : f32 to vector<512x128xf32>
    %c0 = arith.constant 0 : index
    %c0_0 = arith.constant 0 : index
    %c0_1 = arith.constant 0 : index
    %c0_2 = arith.constant 0 : index
    %1 = vector.load %arg1[%c0, %c0_0, %c0_1, %c0_2] : memref<9x9x8x48xf32, #tpu.memory_space<vmem>>, vector<8x8x8x48xf32>
    %2 = vector.shape_cast %1 : vector<8x8x8x48xf32> to vector<512x48xf32>
    %c0_3 = arith.constant 0 : index
    %c0_4 = arith.constant 0 : index
    %c0_5 = arith.constant 0 : index
    %c0_6 = arith.constant 0 : index
    %3 = vector.load %arg2[%c0_3, %c0_4, %c0_5, %c0_6] : memref<2x2x48x128xf32, #tpu.memory_space<vmem>>, vector<1x1x48x128xf32>
    %4 = vector.shape_cast %3 : vector<1x1x48x128xf32> to vector<48x128xf32>
    %cst_7 = arith.constant dense<0.000000e+00> : vector<512x128xf32>
    %5 = tpu.matmul %2, %4, %cst_7 {dimension_numbers = #tpu.dot_dimension_numbers<[1], [0], [0], [1], [0, 0, 1, 1], [], []>} : vector<512x48xf32>, vector<48x128xf32>, vector<512x128xf32> -> vector<512x128xf32>
    %6 = arith.addf %0, %5 : vector<512x128xf32>
    %c0_8 = arith.constant 0 : index
    %c1 = arith.constant 1 : index
    %c0_9 = arith.constant 0 : index
    %c0_10 = arith.constant 0 : index
    %7 = vector.load %arg1[%c0_8, %c1, %c0_9, %c0_10] : memref<9x9x8x48xf32, #tpu.memory_space<vmem>>, vector<8x8x8x48xf32>
    %8 = vector.shape_cast %7 : vector<8x8x8x48xf32> to vector<512x48xf32>
    %c0_11 = arith.constant 0 : index
    %c1_12 = arith.constant 1 : index
    %c0_13 = arith.constant 0 : index
    %c0_14 = arith.constant 0 : index
    %9 = vector.load %arg2[%c0_11, %c1_12, %c0_13, %c0_14] : memref<2x2x48x128xf32, #tpu.memory_space<vmem>>, vector<1x1x48x128xf32>
    %10 = vector.shape_cast %9 : vector<1x1x48x128xf32> to vector<48x128xf32>
    %cst_15 = arith.constant dense<0.000000e+00> : vector<512x128xf32>
    %11 = tpu.matmul %8, %10, %cst_15 {dimension_numbers = #tpu.dot_dimension_numbers<[1], [0], [0], [1], [0, 0, 1, 1], [], []>} : vector<512x48xf32>, vector<48x128xf32>, vector<512x128xf32> -> vector<512x128xf32>
    %12 = arith.addf %6, %11 : vector<512x128xf32>
    %c1_16 = arith.constant 1 : index
    %c0_17 = arith.constant 0 : index
    %c0_18 = arith.constant 0 : index
    %c0_19 = arith.constant 0 : index
    %13 = vector.load %arg1[%c1_16, %c0_17, %c0_18, %c0_19] : memref<9x9x8x48xf32, #tpu.memory_space<vmem>>, vector<8x8x8x48xf32>
    %14 = vector.shape_cast %13 : vector<8x8x8x48xf32> to vector<512x48xf32>
    %c1_20 = arith.constant 1 : index
    %c0_21 = arith.constant 0 : index
    %c0_22 = arith.constant 0 : index
    %c0_23 = arith.constant 0 : index
    %15 = vector.load %arg2[%c1_20, %c0_21, %c0_22, %c0_23] : memref<2x2x48x128xf32, #tpu.memory_space<vmem>>, vector<1x1x48x128xf32>
    %16 = vector.shape_cast %15 : vector<1x1x48x128xf32> to vector<48x128xf32>
    %cst_24 = arith.constant dense<0.000000e+00> : vector<512x128xf32>
    %17 = tpu.matmul %14, %16, %cst_24 {dimension_numbers = #tpu.dot_dimension_numbers<[1], [0], [0], [1], [0, 0, 1, 1], [], []>} : vector<512x48xf32>, vector<48x128xf32>, vector<512x128xf32> -> vector<512x128xf32>
    %18 = arith.addf %12, %17 : vector<512x128xf32>
    %c1_25 = arith.constant 1 : index
    %c1_26 = arith.constant 1 : index
    %c0_27 = arith.constant 0 : index
    %c0_28 = arith.constant 0 : index
    %19 = vector.load %arg1[%c1_25, %c1_26, %c0_27, %c0_28] : memref<9x9x8x48xf32, #tpu.memory_space<vmem>>, vector<8x8x8x48xf32>
    %20 = vector.shape_cast %19 : vector<8x8x8x48xf32> to vector<512x48xf32>
    %c1_29 = arith.constant 1 : index
    %c1_30 = arith.constant 1 : index
    %c0_31 = arith.constant 0 : index
    %c0_32 = arith.constant 0 : index
    %21 = vector.load %arg2[%c1_29, %c1_30, %c0_31, %c0_32] : memref<2x2x48x128xf32, #tpu.memory_space<vmem>>, vector<1x1x48x128xf32>
    %22 = vector.shape_cast %21 : vector<1x1x48x128xf32> to vector<48x128xf32>
    %cst_33 = arith.constant dense<0.000000e+00> : vector<512x128xf32>
    %23 = tpu.matmul %20, %22, %cst_33 {dimension_numbers = #tpu.dot_dimension_numbers<[1], [0], [0], [1], [0, 0, 1, 1], [], []>} : vector<512x48xf32>, vector<48x128xf32>, vector<512x128xf32> -> vector<512x128xf32>
    %24 = arith.addf %18, %23 : vector<512x128xf32>
    %c0_34 = arith.constant 0 : index
    %c0_35 = arith.constant 0 : index
    %25 = vector.load %arg3[%c0_34, %c0_35] : memref<1x128xf32, #tpu.memory_space<vmem>>, vector<1x128xf32>
    %26 = vector.broadcast %25 : vector<1x128xf32> to vector<512x128xf32>
    %27 = arith.addf %24, %26 : vector<512x128xf32>
    %cst_36 = arith.constant 0.000000e+00 : f32
    %28 = vector.broadcast %cst_36 : f32 to vector<512x128xf32>
    %29 = arith.maximumf %27, %28 : vector<512x128xf32>
    %30 = vector.shape_cast %29 : vector<512x128xf32> to vector<8x8x8x128xf32>
    %c0_37 = arith.constant 0 : index
    %c0_38 = arith.constant 0 : index
    %c0_39 = arith.constant 0 : index
    %c0_40 = arith.constant 0 : index
    %31 = vector.load %arg9[%c0_37, %c0_38, %c0_39, %c0_40] : memref<8x8x8x128xf32, #tpu.memory_space<vmem>>, vector<8x8x8x128xf32>
    tpu.vector_store %arg9[%c0_37, %c0_38, %c0_39, %c0_40], %30 {strides = array<i32>} : memref<8x8x8x128xf32, #tpu.memory_space<vmem>>, vector<8x8x8x128xf32>,
    %cst_41 = arith.constant 0.000000e+00 : f32
    %32 = vector.broadcast %cst_41 : f32 to vector<72x128xf32>
    %c0_42 = arith.constant 0 : index
    %c0_43 = arith.constant 0 : index
    %c0_44 = arith.constant 0 : index
    %c0_45 = arith.constant 0 : index
    %33 = vector.load %arg9[%c0_42, %c0_43, %c0_44, %c0_45] : memref<8x8x8x128xf32, #tpu.memory_space<vmem>>, vector<1x1x8x128xf32>
    %34 = vector.shape_cast %33 : vector<1x1x8x128xf32> to vector<8x128xf32>
    %c0_46 = arith.constant 0 : index
    %c2 = arith.constant 2 : index
    %c0_47 = arith.constant 0 : index
    %c0_48 = arith.constant 0 : index
    %35 = vector.load %arg9[%c0_46, %c2, %c0_47, %c0_48] : memref<8x8x8x128xf32, #tpu.memory_space<vmem>>, vector<1x1x8x128xf32>
    %36 = vector.shape_cast %35 : vector<1x1x8x128xf32> to vector<8x128xf32>
    %c0_49 = arith.constant 0 : index
    %c4 = arith.constant 4 : index
    %c0_50 = arith.constant 0 : index
    %c0_51 = arith.constant 0 : index
    %37 = vector.load %arg9[%c0_49, %c4, %c0_50, %c0_51] : memref<8x8x8x128xf32, #tpu.memory_space<vmem>>, vector<1x1x8x128xf32>
    %38 = vector.shape_cast %37 : vector<1x1x8x128xf32> to vector<8x128xf32>
    %c2_52 = arith.constant 2 : index
    %c0_53 = arith.constant 0 : index
    %c0_54 = arith.constant 0 : index
    %c0_55 = arith.constant 0 : index
    %39 = vector.load %arg9[%c2_52, %c0_53, %c0_54, %c0_55] : memref<8x8x8x128xf32, #tpu.memory_space<vmem>>, vector<1x1x8x128xf32>
    %40 = vector.shape_cast %39 : vector<1x1x8x128xf32> to vector<8x128xf32>
    %c2_56 = arith.constant 2 : index
    %c2_57 = arith.constant 2 : index
    %c0_58 = arith.constant 0 : index
    %c0_59 = arith.constant 0 : index
    %41 = vector.load %arg9[%c2_56, %c2_57, %c0_58, %c0_59] : memref<8x8x8x128xf32, #tpu.memory_space<vmem>>, vector<1x1x8x128xf32>
    %42 = vector.shape_cast %41 : vector<1x1x8x128xf32> to vector<8x128xf32>
    %c2_60 = arith.constant 2 : index
    %c4_61 = arith.constant 4 : index
    %c0_62 = arith.constant 0 : index
    %c0_63 = arith.constant 0 : index
    %43 = vector.load %arg9[%c2_60, %c4_61, %c0_62, %c0_63] : memref<8x8x8x128xf32, #tpu.memory_space<vmem>>, vector<1x1x8x128xf32>
    %44 = vector.shape_cast %43 : vector<1x1x8x128xf32> to vector<8x128xf32>
    %c4_64 = arith.constant 4 : index
    %c0_65 = arith.constant 0 : index
    %c0_66 = arith.constant 0 : index
    %c0_67 = arith.constant 0 : index
    %45 = vector.load %arg9[%c4_64, %c0_65, %c0_66, %c0_67] : memref<8x8x8x128xf32, #tpu.memory_space<vmem>>, vector<1x1x8x128xf32>
    %46 = vector.shape_cast %45 : vector<1x1x8x128xf32> to vector<8x128xf32>
    %c4_68 = arith.constant 4 : index
    %c2_69 = arith.constant 2 : index
    %c0_70 = arith.constant 0 : index
    %c0_71 = arith.constant 0 : index
    %47 = vector.load %arg9[%c4_68, %c2_69, %c0_70, %c0_71] : memref<8x8x8x128xf32, #tpu.memory_space<vmem>>, vector<1x1x8x128xf32>
    %48 = vector.shape_cast %47 : vector<1x1x8x128xf32> to vector<8x128xf32>
    %c4_72 = arith.constant 4 : index
    %c4_73 = arith.constant 4 : index
    %c0_74 = arith.constant 0 : index
    %c0_75 = arith.constant 0 : index
    %49 = vector.load %arg9[%c4_72, %c4_73, %c0_74, %c0_75] : memref<8x8x8x128xf32, #tpu.memory_space<vmem>>, vector<1x1x8x128xf32>
    %50 = vector.shape_cast %49 : vector<1x1x8x128xf32> to vector<8x128xf32>
    %51 = tpu.concatenate %34, %36, %38, %40, %42, %44, %46, %48, %50 in 0 : vector<8x128xf32>, vector<8x128xf32>, vector<8x128xf32>, vector<8x128xf32>, vector<8x128xf32>, vector<8x128xf32>, vector<8x128xf32>, vector<8x128xf32>, vector<8x128xf32> -> vector<72x128xf32>
    %c0_76 = arith.constant 0 : index
    %c0_77 = arith.constant 0 : index
    %c0_78 = arith.constant 0 : index
    %c0_79 = arith.constant 0 : index
    %52 = vector.load %arg4[%c0_76, %c0_77, %c0_78, %c0_79] : memref<4x4x128x128xf32, #tpu.memory_space<vmem>>, vector<1x1x128x128xf32>
    %53 = vector.shape_cast %52 : vector<1x1x128x128xf32> to vector<128x128xf32>
    %cst_80 = arith.constant dense<0.000000e+00> : vector<72x128xf32>
    %54 = tpu.matmul %51, %53, %cst_80 {dimension_numbers = #tpu.dot_dimension_numbers<[1], [0], [0], [1], [0, 0, 1, 1], [], []>} : vector<72x128xf32>, vector<128x128xf32>, vector<72x128xf32> -> vector<72x128xf32>
    %55 = arith.addf %32, %54 : vector<72x128xf32>
    %c0_81 = arith.constant 0 : index
    %c1_82 = arith.constant 1 : index
    %c0_83 = arith.constant 0 : index
    %c0_84 = arith.constant 0 : index
    %56 = vector.load %arg9[%c0_81, %c1_82, %c0_83, %c0_84] : memref<8x8x8x128xf32, #tpu.memory_space<vmem>>, vector<1x1x8x128xf32>
    %57 = vector.shape_cast %56 : vector<1x1x8x128xf32> to vector<8x128xf32>
    %c0_85 = arith.constant 0 : index
    %c3 = arith.constant 3 : index
    %c0_86 = arith.constant 0 : index
    %c0_87 = arith.constant 0 : index
    %58 = vector.load %arg9[%c0_85, %c3, %c0_86, %c0_87] : memref<8x8x8x128xf32, #tpu.memory_space<vmem>>, vector<1x1x8x128xf32>
    %59 = vector.shape_cast %58 : vector<1x1x8x128xf32> to vector<8x128xf32>
    %c0_88 = arith.constant 0 : index
    %c5 = arith.constant 5 : index
    %c0_89 = arith.constant 0 : index
    %c0_90 = arith.constant 0 : index
    %60 = vector.load %arg9[%c0_88, %c5, %c0_89, %c0_90] : memref<8x8x8x128xf32, #tpu.memory_space<vmem>>, vector<1x1x8x128xf32>
    %61 = vector.shape_cast %60 : vector<1x1x8x128xf32> to vector<8x128xf32>
    %c2_91 = arith.constant 2 : index
    %c1_92 = arith.constant 1 : index
    %c0_93 = arith.constant 0 : index
    %c0_94 = arith.constant 0 : index
    %62 = vector.load %arg9[%c2_91, %c1_92, %c0_93, %c0_94] : memref<8x8x8x128xf32, #tpu.memory_space<vmem>>, vector<1x1x8x128xf32>
    %63 = vector.shape_cast %62 : vector<1x1x8x128xf32> to vector<8x128xf32>
    %c2_95 = arith.constant 2 : index
    %c3_96 = arith.constant 3 : index
    %c0_97 = arith.constant 0 : index
    %c0_98 = arith.constant 0 : index
    %64 = vector.load %arg9[%c2_95, %c3_96, %c0_97, %c0_98] : memref<8x8x8x128xf32, #tpu.memory_space<vmem>>, vector<1x1x8x128xf32>
    %65 = vector.shape_cast %64 : vector<1x1x8x128xf32> to vector<8x128xf32>
    %c2_99 = arith.constant 2 : index
    %c5_100 = arith.constant 5 : index
    %c0_101 = arith.constant 0 : index
    %c0_102 = arith.constant 0 : index
    %66 = vector.load %arg9[%c2_99, %c5_100, %c0_101, %c0_102] : memref<8x8x8x128xf32, #tpu.memory_space<vmem>>, vector<1x1x8x128xf32>
    %67 = vector.shape_cast %66 : vector<1x1x8x128xf32> to vector<8x128xf32>
    %c4_103 = arith.constant 4 : index
    %c1_104 = arith.constant 1 : index
    %c0_105 = arith.constant 0 : index
    %c0_106 = arith.constant 0 : index
    %68 = vector.load %arg9[%c4_103, %c1_104, %c0_105, %c0_106] : memref<8x8x8x128xf32, #tpu.memory_space<vmem>>, vector<1x1x8x128xf32>
    %69 = vector.shape_cast %68 : vector<1x1x8x128xf32> to vector<8x128xf32>
    %c4_107 = arith.constant 4 : index
    %c3_108 = arith.constant 3 : index
    %c0_109 = arith.constant 0 : index
    %c0_110 = arith.constant 0 : index
    %70 = vector.load %arg9[%c4_107, %c3_108, %c0_109, %c0_110] : memref<8x8x8x128xf32, #tpu.memory_space<vmem>>, vector<1x1x8x128xf32>
    %71 = vector.shape_cast %70 : vector<1x1x8x128xf32> to vector<8x128xf32>
    %c4_111 = arith.constant 4 : index
    %c5_112 = arith.constant 5 : index
    %c0_113 = arith.constant 0 : index
    %c0_114 = arith.constant 0 : index
    %72 = vector.load %arg9[%c4_111, %c5_112, %c0_113, %c0_114] : memref<8x8x8x128xf32, #tpu.memory_space<vmem>>, vector<1x1x8x128xf32>
    %73 = vector.shape_cast %72 : vector<1x1x8x128xf32> to vector<8x128xf32>
    %74 = tpu.concatenate %57, %59, %61, %63, %65, %67, %69, %71, %73 in 0 : vector<8x128xf32>, vector<8x128xf32>, vector<8x128xf32>, vector<8x128xf32>, vector<8x128xf32>, vector<8x128xf32>, vector<8x128xf32>, vector<8x128xf32>, vector<8x128xf32> -> vector<72x128xf32>
    %c0_115 = arith.constant 0 : index
    %c1_116 = arith.constant 1 : index
    %c0_117 = arith.constant 0 : index
    %c0_118 = arith.constant 0 : index
    %75 = vector.load %arg4[%c0_115, %c1_116, %c0_117, %c0_118] : memref<4x4x128x128xf32, #tpu.memory_space<vmem>>, vector<1x1x128x128xf32>
    %76 = vector.shape_cast %75 : vector<1x1x128x128xf32> to vector<128x128xf32>
    %cst_119 = arith.constant dense<0.000000e+00> : vector<72x128xf32>
    %77 = tpu.matmul %74, %76, %cst_119 {dimension_numbers = #tpu.dot_dimension_numbers<[1], [0], [0], [1], [0, 0, 1, 1], [], []>} : vector<72x128xf32>, vector<128x128xf32>, vector<72x128xf32> -> vector<72x128xf32>
    %78 = arith.addf %55, %77 : vector<72x128xf32>
    %c0_120 = arith.constant 0 : index
    %c2_121 = arith.constant 2 : index
    %c0_122 = arith.constant 0 : index
    %c0_123 = arith.constant 0 : index
    %79 = vector.load %arg9[%c0_120, %c2_121, %c0_122, %c0_123] : memref<8x8x8x128xf32, #tpu.memory_space<vmem>>, vector<1x1x8x128xf32>
    %80 = vector.shape_cast %79 : vector<1x1x8x128xf32> to vector<8x128xf32>
    %c0_124 = arith.constant 0 : index
    %c4_125 = arith.constant 4 : index
    %c0_126 = arith.constant 0 : index
    %c0_127 = arith.constant 0 : index
    %81 = vector.load %arg9[%c0_124, %c4_125, %c0_126, %c0_127] : memref<8x8x8x128xf32, #tpu.memory_space<vmem>>, vector<1x1x8x128xf32>
    %82 = vector.shape_cast %81 : vector<1x1x8x128xf32> to vector<8x128xf32>
    %c0_128 = arith.constant 0 : index
    %c6 = arith.constant 6 : index
    %c0_129 = arith.constant 0 : index
    %c0_130 = arith.constant 0 : index
    %83 = vector.load %arg9[%c0_128, %c6, %c0_129, %c0_130] : memref<8x8x8x128xf32, #tpu.memory_space<vmem>>, vector<1x1x8x128xf32>
    %84 = vector.shape_cast %83 : vector<1x1x8x128xf32> to vector<8x128xf32>
    %c2_131 = arith.constant 2 : index
    %c2_132 = arith.constant 2 : index
    %c0_133 = arith.constant 0 : index
    %c0_134 = arith.constant 0 : index
    %85 = vector.load %arg9[%c2_131, %c2_132, %c0_133, %c0_134] : memref<8x8x8x128xf32, #tpu.memory_space<vmem>>, vector<1x1x8x128xf32>
    %86 = vector.shape_cast %85 : vector<1x1x8x128xf32> to vector<8x128xf32>
    %c2_135 = arith.constant 2 : index
    %c4_136 = arith.constant 4 : index
    %c0_137 = arith.constant 0 : index
    %c0_138 = arith.constant 0 : index
    %87 = vector.load %arg9[%c2_135, %c4_136, %c0_137, %c0_138] : memref<8x8x8x128xf32, #tpu.memory_space<vmem>>, vector<1x1x8x128xf32>
    %88 = vector.shape_cast %87 : vector<1x1x8x128xf32> to vector<8x128xf32>
    %c2_139 = arith.constant 2 : index
    %c6_140 = arith.constant 6 : index
    %c0_141 = arith.constant 0 : index
    %c0_142 = arith.constant 0 : index
    %89 = vector.load %arg9[%c2_139, %c6_140, %c0_141, %c0_142] : memref<8x8x8x128xf32, #tpu.memory_space<vmem>>, vector<1x1x8x128xf32>
    %90 = vector.shape_cast %89 : vector<1x1x8x128xf32> to vector<8x128xf32>
    %c4_143 = arith.constant 4 : index
    %c2_144 = arith.constant 2 : index
    %c0_145 = arith.constant 0 : index
    %c0_146 = arith.constant 0 : index
    %91 = vector.load %arg9[%c4_143, %c2_144, %c0_145, %c0_146] : memref<8x8x8x128xf32, #tpu.memory_space<vmem>>, vector<1x1x8x128xf32>
    %92 = vector.shape_cast %91 : vector<1x1x8x128xf32> to vector<8x128xf32>
    %c4_147 = arith.constant 4 : index
    %c4_148 = arith.constant 4 : index
    %c0_149 = arith.constant 0 : index
    %c0_150 = arith.constant 0 : index
    %93 = vector.load %arg9[%c4_147, %c4_148, %c0_149, %c0_150] : memref<8x8x8x128xf32, #tpu.memory_space<vmem>>, vector<1x1x8x128xf32>
    %94 = vector.shape_cast %93 : vector<1x1x8x128xf32> to vector<8x128xf32>
    %c4_151 = arith.constant 4 : index
    %c6_152 = arith.constant 6 : index
    %c0_153 = arith.constant 0 : index
    %c0_154 = arith.constant 0 : index
    %95 = vector.load %arg9[%c4_151, %c6_152, %c0_153, %c0_154] : memref<8x8x8x128xf32, #tpu.memory_space<vmem>>, vector<1x1x8x128xf32>
    %96 = vector.shape_cast %95 : vector<1x1x8x128xf32> to vector<8x128xf32>
    %97 = tpu.concatenate %80, %82, %84, %86, %88, %90, %92, %94, %96 in 0 : vector<8x128xf32>, vector<8x128xf32>, vector<8x128xf32>, vector<8x128xf32>, vector<8x128xf32>, vector<8x128xf32>, vector<8x128xf32>, vector<8x128xf32>, vector<8x128xf32> -> vector<72x128xf32>
    %c0_155 = arith.constant 0 : index
    %c2_156 = arith.constant 2 : index
    %c0_157 = arith.constant 0 : index
    %c0_158 = arith.constant 0 : index
    %98 = vector.load %arg4[%c0_155, %c2_156, %c0_157, %c0_158] : memref<4x4x128x128xf32, #tpu.memory_space<vmem>>, vector<1x1x128x128xf32>
    %99 = vector.shape_cast %98 : vector<1x1x128x128xf32> to vector<128x128xf32>
    %cst_159 = arith.constant dense<0.000000e+00> : vector<72x128xf32>
    %100 = tpu.matmul %97, %99, %cst_159 {dimension_numbers = #tpu.dot_dimension_numbers<[1], [0], [0], [1], [0, 0, 1, 1], [], []>} : vector<72x128xf32>, vector<128x128xf32>, vector<72x128xf32> -> vector<72x128xf32>
    %101 = arith.addf %78, %100 : vector<72x128xf32>
    %c0_160 = arith.constant 0 : index
    %c3_161 = arith.constant 3 : index
    %c0_162 = arith.constant 0 : index
    %c0_163 = arith.constant 0 : index
    %102 = vector.load %arg9[%c0_160, %c3_161, %c0_162, %c0_163] : memref<8x8x8x128xf32, #tpu.memory_space<vmem>>, vector<1x1x8x128xf32>
    %103 = vector.shape_cast %102 : vector<1x1x8x128xf32> to vector<8x128xf32>
    %c0_164 = arith.constant 0 : index
    %c5_165 = arith.constant 5 : index
    %c0_166 = arith.constant 0 : index
    %c0_167 = arith.constant 0 : index
    %104 = vector.load %arg9[%c0_164, %c5_165, %c0_166, %c0_167] : memref<8x8x8x128xf32, #tpu.memory_space<vmem>>, vector<1x1x8x128xf32>
    %105 = vector.shape_cast %104 : vector<1x1x8x128xf32> to vector<8x128xf32>
    %c0_168 = arith.constant 0 : index
    %c7 = arith.constant 7 : index
    %c0_169 = arith.constant 0 : index
    %c0_170 = arith.constant 0 : index
    %106 = vector.load %arg9[%c0_168, %c7, %c0_169, %c0_170] : memref<8x8x8x128xf32, #tpu.memory_space<vmem>>, vector<1x1x8x128xf32>
    %107 = vector.shape_cast %106 : vector<1x1x8x128xf32> to vector<8x128xf32>
    %c2_171 = arith.constant 2 : index
    %c3_172 = arith.constant 3 : index
    %c0_173 = arith.constant 0 : index
    %c0_174 = arith.constant 0 : index
    %108 = vector.load %arg9[%c2_171, %c3_172, %c0_173, %c0_174] : memref<8x8x8x128xf32, #tpu.memory_space<vmem>>, vector<1x1x8x128xf32>
    %109 = vector.shape_cast %108 : vector<1x1x8x128xf32> to vector<8x128xf32>
    %c2_175 = arith.constant 2 : index
    %c5_176 = arith.constant 5 : index
    %c0_177 = arith.constant 0 : index
    %c0_178 = arith.constant 0 : index
    %110 = vector.load %arg9[%c2_175, %c5_176, %c0_177, %c0_178] : memref<8x8x8x128xf32, #tpu.memory_space<vmem>>, vector<1x1x8x128xf32>
    %111 = vector.shape_cast %110 : vector<1x1x8x128xf32> to vector<8x128xf32>
    %c2_179 = arith.constant 2 : index
    %c7_180 = arith.constant 7 : index
    %c0_181 = arith.constant 0 : index
    %c0_182 = arith.constant 0 : index
    %112 = vector.load %arg9[%c2_179, %c7_180, %c0_181, %c0_182] : memref<8x8x8x128xf32, #tpu.memory_space<vmem>>, vector<1x1x8x128xf32>
    %113 = vector.shape_cast %112 : vector<1x1x8x128xf32> to vector<8x128xf32>
    %c4_183 = arith.constant 4 : index
    %c3_184 = arith.constant 3 : index
    %c0_185 = arith.constant 0 : index
    %c0_186 = arith.constant 0 : index
    %114 = vector.load %arg9[%c4_183, %c3_184, %c0_185, %c0_186] : memref<8x8x8x128xf32, #tpu.memory_space<vmem>>, vector<1x1x8x128xf32>
    %115 = vector.shape_cast %114 : vector<1x1x8x128xf32> to vector<8x128xf32>
    %c4_187 = arith.constant 4 : index
    %c5_188 = arith.constant 5 : index
    %c0_189 = arith.constant 0 : index
    %c0_190 = arith.constant 0 : index
    %116 = vector.load %arg9[%c4_187, %c5_188, %c0_189, %c0_190] : memref<8x8x8x128xf32, #tpu.memory_space<vmem>>, vector<1x1x8x128xf32>
    %117 = vector.shape_cast %116 : vector<1x1x8x128xf32> to vector<8x128xf32>
    %c4_191 = arith.constant 4 : index
    %c7_192 = arith.constant 7 : index
    %c0_193 = arith.constant 0 : index
    %c0_194 = arith.constant 0 : index
    %118 = vector.load %arg9[%c4_191, %c7_192, %c0_193, %c0_194] : memref<8x8x8x128xf32, #tpu.memory_space<vmem>>, vector<1x1x8x128xf32>
    %119 = vector.shape_cast %118 : vector<1x1x8x128xf32> to vector<8x128xf32>
    %120 = tpu.concatenate %103, %105, %107, %109, %111, %113, %115, %117, %119 in 0 : vector<8x128xf32>, vector<8x128xf32>, vector<8x128xf32>, vector<8x128xf32>, vector<8x128xf32>, vector<8x128xf32>, vector<8x128xf32>, vector<8x128xf32>, vector<8x128xf32> -> vector<72x128xf32>
    %c0_195 = arith.constant 0 : index
    %c3_196 = arith.constant 3 : index
    %c0_197 = arith.constant 0 : index
    %c0_198 = arith.constant 0 : index
    %121 = vector.load %arg4[%c0_195, %c3_196, %c0_197, %c0_198] : memref<4x4x128x128xf32, #tpu.memory_space<vmem>>, vector<1x1x128x128xf32>
    %122 = vector.shape_cast %121 : vector<1x1x128x128xf32> to vector<128x128xf32>
    %cst_199 = arith.constant dense<0.000000e+00> : vector<72x128xf32>
    %123 = tpu.matmul %120, %122, %cst_199 {dimension_numbers = #tpu.dot_dimension_numbers<[1], [0], [0], [1], [0, 0, 1, 1], [], []>} : vector<72x128xf32>, vector<128x128xf32>, vector<72x128xf32> -> vector<72x128xf32>
    %124 = arith.addf %101, %123 : vector<72x128xf32>
    %c1_200 = arith.constant 1 : index
    %c0_201 = arith.constant 0 : index
    %c0_202 = arith.constant 0 : index
    %c0_203 = arith.constant 0 : index
    %125 = vector.load %arg9[%c1_200, %c0_201, %c0_202, %c0_203] : memref<8x8x8x128xf32, #tpu.memory_space<vmem>>, vector<1x1x8x128xf32>
    %126 = vector.shape_cast %125 : vector<1x1x8x128xf32> to vector<8x128xf32>
    %c1_204 = arith.constant 1 : index
    %c2_205 = arith.constant 2 : index
    %c0_206 = arith.constant 0 : index
    %c0_207 = arith.constant 0 : index
    %127 = vector.load %arg9[%c1_204, %c2_205, %c0_206, %c0_207] : memref<8x8x8x128xf32, #tpu.memory_space<vmem>>, vector<1x1x8x128xf32>
    %128 = vector.shape_cast %127 : vector<1x1x8x128xf32> to vector<8x128xf32>
    %c1_208 = arith.constant 1 : index
    %c4_209 = arith.constant 4 : index
    %c0_210 = arith.constant 0 : index
    %c0_211 = arith.constant 0 : index
    %129 = vector.load %arg9[%c1_208, %c4_209, %c0_210, %c0_211] : memref<8x8x8x128xf32, #tpu.memory_space<vmem>>, vector<1x1x8x128xf32>
    %130 = vector.shape_cast %129 : vector<1x1x8x128xf32> to vector<8x128xf32>
    %c3_212 = arith.constant 3 : index
    %c0_213 = arith.constant 0 : index
    %c0_214 = arith.constant 0 : index
    %c0_215 = arith.constant 0 : index
    %131 = vector.load %arg9[%c3_212, %c0_213, %c0_214, %c0_215] : memref<8x8x8x128xf32, #tpu.memory_space<vmem>>, vector<1x1x8x128xf32>
    %132 = vector.shape_cast %131 : vector<1x1x8x128xf32> to vector<8x128xf32>
    %c3_216 = arith.constant 3 : index
    %c2_217 = arith.constant 2 : index
    %c0_218 = arith.constant 0 : index
    %c0_219 = arith.constant 0 : index
    %133 = vector.load %arg9[%c3_216, %c2_217, %c0_218, %c0_219] : memref<8x8x8x128xf32, #tpu.memory_space<vmem>>, vector<1x1x8x128xf32>
    %134 = vector.shape_cast %133 : vector<1x1x8x128xf32> to vector<8x128xf32>
    %c3_220 = arith.constant 3 : index
    %c4_221 = arith.constant 4 : index
    %c0_222 = arith.constant 0 : index
    %c0_223 = arith.constant 0 : index
    %135 = vector.load %arg9[%c3_220, %c4_221, %c0_222, %c0_223] : memref<8x8x8x128xf32, #tpu.memory_space<vmem>>, vector<1x1x8x128xf32>
    %136 = vector.shape_cast %135 : vector<1x1x8x128xf32> to vector<8x128xf32>
    %c5_224 = arith.constant 5 : index
    %c0_225 = arith.constant 0 : index
    %c0_226 = arith.constant 0 : index
    %c0_227 = arith.constant 0 : index
    %137 = vector.load %arg9[%c5_224, %c0_225, %c0_226, %c0_227] : memref<8x8x8x128xf32, #tpu.memory_space<vmem>>, vector<1x1x8x128xf32>
    %138 = vector.shape_cast %137 : vector<1x1x8x128xf32> to vector<8x128xf32>
    %c5_228 = arith.constant 5 : index
    %c2_229 = arith.constant 2 : index
    %c0_230 = arith.constant 0 : index
    %c0_231 = arith.constant 0 : index
    %139 = vector.load %arg9[%c5_228, %c2_229, %c0_230, %c0_231] : memref<8x8x8x128xf32, #tpu.memory_space<vmem>>, vector<1x1x8x128xf32>
    %140 = vector.shape_cast %139 : vector<1x1x8x128xf32> to vector<8x128xf32>
    %c5_232 = arith.constant 5 : index
    %c4_233 = arith.constant 4 : index
    %c0_234 = arith.constant 0 : index
    %c0_235 = arith.constant 0 : index
    %141 = vector.load %arg9[%c5_232, %c4_233, %c0_234, %c0_235] : memref<8x8x8x128xf32, #tpu.memory_space<vmem>>, vector<1x1x8x128xf32>
    %142 = vector.shape_cast %141 : vector<1x1x8x128xf32> to vector<8x128xf32>
    %143 = tpu.concatenate %126, %128, %130, %132, %134, %136, %138, %140, %142 in 0 : vector<8x128xf32>, vector<8x128xf32>, vector<8x128xf32>, vector<8x128xf32>, vector<8x128xf32>, vector<8x128xf32>, vector<8x128xf32>, vector<8x128xf32>, vector<8x128xf32> -> vector<72x128xf32>
    %c1_236 = arith.constant 1 : index
    %c0_237 = arith.constant 0 : index
    %c0_238 = arith.constant 0 : index
    %c0_239 = arith.constant 0 : index
    %144 = vector.load %arg4[%c1_236, %c0_237, %c0_238, %c0_239] : memref<4x4x128x128xf32, #tpu.memory_space<vmem>>, vector<1x1x128x128xf32>
    %145 = vector.shape_cast %144 : vector<1x1x128x128xf32> to vector<128x128xf32>
    %cst_240 = arith.constant dense<0.000000e+00> : vector<72x128xf32>
    %146 = tpu.matmul %143, %145, %cst_240 {dimension_numbers = #tpu.dot_dimension_numbers<[1], [0], [0], [1], [0, 0, 1, 1], [], []>} : vector<72x128xf32>, vector<128x128xf32>, vector<72x128xf32> -> vector<72x128xf32>
    %147 = arith.addf %124, %146 : vector<72x128xf32>
    %c1_241 = arith.constant 1 : index
    %c1_242 = arith.constant 1 : index
    %c0_243 = arith.constant 0 : index
    %c0_244 = arith.constant 0 : index
    %148 = vector.load %arg9[%c1_241, %c1_242, %c0_243, %c0_244] : memref<8x8x8x128xf32, #tpu.memory_space<vmem>>, vector<1x1x8x128xf32>
    %149 = vector.shape_cast %148 : vector<1x1x8x128xf32> to vector<8x128xf32>
    %c1_245 = arith.constant 1 : index
    %c3_246 = arith.constant 3 : index
    %c0_247 = arith.constant 0 : index
    %c0_248 = arith.constant 0 : index
    %150 = vector.load %arg9[%c1_245, %c3_246, %c0_247, %c0_248] : memref<8x8x8x128xf32, #tpu.memory_space<vmem>>, vector<1x1x8x128xf32>
    %151 = vector.shape_cast %150 : vector<1x1x8x128xf32> to vector<8x128xf32>
    %c1_249 = arith.constant 1 : index
    %c5_250 = arith.constant 5 : index
    %c0_251 = arith.constant 0 : index
    %c0_252 = arith.constant 0 : index
    %152 = vector.load %arg9[%c1_249, %c5_250, %c0_251, %c0_252] : memref<8x8x8x128xf32, #tpu.memory_space<vmem>>, vector<1x1x8x128xf32>
    %153 = vector.shape_cast %152 : vector<1x1x8x128xf32> to vector<8x128xf32>
    %c3_253 = arith.constant 3 : index
    %c1_254 = arith.constant 1 : index
    %c0_255 = arith.constant 0 : index
    %c0_256 = arith.constant 0 : index
    %154 = vector.load %arg9[%c3_253, %c1_254, %c0_255, %c0_256] : memref<8x8x8x128xf32, #tpu.memory_space<vmem>>, vector<1x1x8x128xf32>
    %155 = vector.shape_cast %154 : vector<1x1x8x128xf32> to vector<8x128xf32>
    %c3_257 = arith.constant 3 : index
    %c3_258 = arith.constant 3 : index
    %c0_259 = arith.constant 0 : index
    %c0_260 = arith.constant 0 : index
    %156 = vector.load %arg9[%c3_257, %c3_258, %c0_259, %c0_260] : memref<8x8x8x128xf32, #tpu.memory_space<vmem>>, vector<1x1x8x128xf32>
    %157 = vector.shape_cast %156 : vector<1x1x8x128xf32> to vector<8x128xf32>
    %c3_261 = arith.constant 3 : index
    %c5_262 = arith.constant 5 : index
    %c0_263 = arith.constant 0 : index
    %c0_264 = arith.constant 0 : index
    %158 = vector.load %arg9[%c3_261, %c5_262, %c0_263, %c0_264] : memref<8x8x8x128xf32, #tpu.memory_space<vmem>>, vector<1x1x8x128xf32>
    %159 = vector.shape_cast %158 : vector<1x1x8x128xf32> to vector<8x128xf32>
    %c5_265 = arith.constant 5 : index
    %c1_266 = arith.constant 1 : index
    %c0_267 = arith.constant 0 : index
    %c0_268 = arith.constant 0 : index
    %160 = vector.load %arg9[%c5_265, %c1_266, %c0_267, %c0_268] : memref<8x8x8x128xf32, #tpu.memory_space<vmem>>, vector<1x1x8x128xf32>
    %161 = vector.shape_cast %160 : vector<1x1x8x128xf32> to vector<8x128xf32>
    %c5_269 = arith.constant 5 : index
    %c3_270 = arith.constant 3 : index
    %c0_271 = arith.constant 0 : index
    %c0_272 = arith.constant 0 : index
    %162 = vector.load %arg9[%c5_269, %c3_270, %c0_271, %c0_272] : memref<8x8x8x128xf32, #tpu.memory_space<vmem>>, vector<1x1x8x128xf32>
    %163 = vector.shape_cast %162 : vector<1x1x8x128xf32> to vector<8x128xf32>
    %c5_273 = arith.constant 5 : index
    %c5_274 = arith.constant 5 : index
    %c0_275 = arith.constant 0 : index
    %c0_276 = arith.constant 0 : index
    %164 = vector.load %arg9[%c5_273, %c5_274, %c0_275, %c0_276] : memref<8x8x8x128xf32, #tpu.memory_space<vmem>>, vector<1x1x8x128xf32>
    %165 = vector.shape_cast %164 : vector<1x1x8x128xf32> to vector<8x128xf32>
    %166 = tpu.concatenate %149, %151, %153, %155, %157, %159, %161, %163, %165 in 0 : vector<8x128xf32>, vector<8x128xf32>, vector<8x128xf32>, vector<8x128xf32>, vector<8x128xf32>, vector<8x128xf32>, vector<8x128xf32>, vector<8x128xf32>, vector<8x128xf32> -> vector<72x128xf32>
    %c1_277 = arith.constant 1 : index
    %c1_278 = arith.constant 1 : index
    %c0_279 = arith.constant 0 : index
    %c0_280 = arith.constant 0 : index
    %167 = vector.load %arg4[%c1_277, %c1_278, %c0_279, %c0_280] : memref<4x4x128x128xf32, #tpu.memory_space<vmem>>, vector<1x1x128x128xf32>
    %168 = vector.shape_cast %167 : vector<1x1x128x128xf32> to vector<128x128xf32>
    %cst_281 = arith.constant dense<0.000000e+00> : vector<72x128xf32>
    %169 = tpu.matmul %166, %168, %cst_281 {dimension_numbers = #tpu.dot_dimension_numbers<[1], [0], [0], [1], [0, 0, 1, 1], [], []>} : vector<72x128xf32>, vector<128x128xf32>, vector<72x128xf32> -> vector<72x128xf32>
    %170 = arith.addf %147, %169 : vector<72x128xf32>
    %c1_282 = arith.constant 1 : index
    %c2_283 = arith.constant 2 : index
    %c0_284 = arith.constant 0 : index
    %c0_285 = arith.constant 0 : index
    %171 = vector.load %arg9[%c1_282, %c2_283, %c0_284, %c0_285] : memref<8x8x8x128xf32, #tpu.memory_space<vmem>>, vector<1x1x8x128xf32>
    %172 = vector.shape_cast %171 : vector<1x1x8x128xf32> to vector<8x128xf32>
    %c1_286 = arith.constant 1 : index
    %c4_287 = arith.constant 4 : index
    %c0_288 = arith.constant 0 : index
    %c0_289 = arith.constant 0 : index
    %173 = vector.load %arg9[%c1_286, %c4_287, %c0_288, %c0_289] : memref<8x8x8x128xf32, #tpu.memory_space<vmem>>, vector<1x1x8x128xf32>
    %174 = vector.shape_cast %173 : vector<1x1x8x128xf32> to vector<8x128xf32>
    %c1_290 = arith.constant 1 : index
    %c6_291 = arith.constant 6 : index
    %c0_292 = arith.constant 0 : index
    %c0_293 = arith.constant 0 : index
    %175 = vector.load %arg9[%c1_290, %c6_291, %c0_292, %c0_293] : memref<8x8x8x128xf32, #tpu.memory_space<vmem>>, vector<1x1x8x128xf32>
    %176 = vector.shape_cast %175 : vector<1x1x8x128xf32> to vector<8x128xf32>
    %c3_294 = arith.constant 3 : index
    %c2_295 = arith.constant 2 : index
    %c0_296 = arith.constant 0 : index
    %c0_297 = arith.constant 0 : index
    %177 = vector.load %arg9[%c3_294, %c2_295, %c0_296, %c0_297] : memref<8x8x8x128xf32, #tpu.memory_space<vmem>>, vector<1x1x8x128xf32>
    %178 = vector.shape_cast %177 : vector<1x1x8x128xf32> to vector<8x128xf32>
    %c3_298 = arith.constant 3 : index
    %c4_299 = arith.constant 4 : index
    %c0_300 = arith.constant 0 : index
    %c0_301 = arith.constant 0 : index
    %179 = vector.load %arg9[%c3_298, %c4_299, %c0_300, %c0_301] : memref<8x8x8x128xf32, #tpu.memory_space<vmem>>, vector<1x1x8x128xf32>
    %180 = vector.shape_cast %179 : vector<1x1x8x128xf32> to vector<8x128xf32>
    %c3_302 = arith.constant 3 : index
    %c6_303 = arith.constant 6 : index
    %c0_304 = arith.constant 0 : index
    %c0_305 = arith.constant 0 : index
    %181 = vector.load %arg9[%c3_302, %c6_303, %c0_304, %c0_305] : memref<8x8x8x128xf32, #tpu.memory_space<vmem>>, vector<1x1x8x128xf32>
    %182 = vector.shape_cast %181 : vector<1x1x8x128xf32> to vector<8x128xf32>
    %c5_306 = arith.constant 5 : index
    %c2_307 = arith.constant 2 : index
    %c0_308 = arith.constant 0 : index
    %c0_309 = arith.constant 0 : index
    %183 = vector.load %arg9[%c5_306, %c2_307, %c0_308, %c0_309] : memref<8x8x8x128xf32, #tpu.memory_space<vmem>>, vector<1x1x8x128xf32>
    %184 = vector.shape_cast %183 : vector<1x1x8x128xf32> to vector<8x128xf32>
    %c5_310 = arith.constant 5 : index
    %c4_311 = arith.constant 4 : index
    %c0_312 = arith.constant 0 : index
    %c0_313 = arith.constant 0 : index
    %185 = vector.load %arg9[%c5_310, %c4_311, %c0_312, %c0_313] : memref<8x8x8x128xf32, #tpu.memory_space<vmem>>, vector<1x1x8x128xf32>
    %186 = vector.shape_cast %185 : vector<1x1x8x128xf32> to vector<8x128xf32>
    %c5_314 = arith.constant 5 : index
    %c6_315 = arith.constant 6 : index
    %c0_316 = arith.constant 0 : index
    %c0_317 = arith.constant 0 : index
    %187 = vector.load %arg9[%c5_314, %c6_315, %c0_316, %c0_317] : memref<8x8x8x128xf32, #tpu.memory_space<vmem>>, vector<1x1x8x128xf32>
    %188 = vector.shape_cast %187 : vector<1x1x8x128xf32> to vector<8x128xf32>
    %189 = tpu.concatenate %172, %174, %176, %178, %180, %182, %184, %186, %188 in 0 : vector<8x128xf32>, vector<8x128xf32>, vector<8x128xf32>, vector<8x128xf32>, vector<8x128xf32>, vector<8x128xf32>, vector<8x128xf32>, vector<8x128xf32>, vector<8x128xf32> -> vector<72x128xf32>
    %c1_318 = arith.constant 1 : index
    %c2_319 = arith.constant 2 : index
    %c0_320 = arith.constant 0 : index
    %c0_321 = arith.constant 0 : index
    %190 = vector.load %arg4[%c1_318, %c2_319, %c0_320, %c0_321] : memref<4x4x128x128xf32, #tpu.memory_space<vmem>>, vector<1x1x128x128xf32>
    %191 = vector.shape_cast %190 : vector<1x1x128x128xf32> to vector<128x128xf32>
    %cst_322 = arith.constant dense<0.000000e+00> : vector<72x128xf32>
    %192 = tpu.matmul %189, %191, %cst_322 {dimension_numbers = #tpu.dot_dimension_numbers<[1], [0], [0], [1], [0, 0, 1, 1], [], []>} : vector<72x128xf32>, vector<128x128xf32>, vector<72x128xf32> -> vector<72x128xf32>
    %193 = arith.addf %170, %192 : vector<72x128xf32>
    %c1_323 = arith.constant 1 : index
    %c3_324 = arith.constant 3 : index
    %c0_325 = arith.constant 0 : index
    %c0_326 = arith.constant 0 : index
    %194 = vector.load %arg9[%c1_323, %c3_324, %c0_325, %c0_326] : memref<8x8x8x128xf32, #tpu.memory_space<vmem>>, vector<1x1x8x128xf32>
    %195 = vector.shape_cast %194 : vector<1x1x8x128xf32> to vector<8x128xf32>
    %c1_327 = arith.constant 1 : index
    %c5_328 = arith.constant 5 : index
    %c0_329 = arith.constant 0 : index
    %c0_330 = arith.constant 0 : index
    %196 = vector.load %arg9[%c1_327, %c5_328, %c0_329, %c0_330] : memref<8x8x8x128xf32, #tpu.memory_space<vmem>>, vector<1x1x8x128xf32>
    %197 = vector.shape_cast %196 : vector<1x1x8x128xf32> to vector<8x128xf32>
    %c1_331 = arith.constant 1 : index
    %c7_332 = arith.constant 7 : index
    %c0_333 = arith.constant 0 : index
    %c0_334 = arith.constant 0 : index
    %198 = vector.load %arg9[%c1_331, %c7_332, %c0_333, %c0_334] : memref<8x8x8x128xf32, #tpu.memory_space<vmem>>, vector<1x1x8x128xf32>
    %199 = vector.shape_cast %198 : vector<1x1x8x128xf32> to vector<8x128xf32>
    %c3_335 = arith.constant 3 : index
    %c3_336 = arith.constant 3 : index
    %c0_337 = arith.constant 0 : index
    %c0_338 = arith.constant 0 : index
    %200 = vector.load %arg9[%c3_335, %c3_336, %c0_337, %c0_338] : memref<8x8x8x128xf32, #tpu.memory_space<vmem>>, vector<1x1x8x128xf32>
    %201 = vector.shape_cast %200 : vector<1x1x8x128xf32> to vector<8x128xf32>
    %c3_339 = arith.constant 3 : index
    %c5_340 = arith.constant 5 : index
    %c0_341 = arith.constant 0 : index
    %c0_342 = arith.constant 0 : index
    %202 = vector.load %arg9[%c3_339, %c5_340, %c0_341, %c0_342] : memref<8x8x8x128xf32, #tpu.memory_space<vmem>>, vector<1x1x8x128xf32>
    %203 = vector.shape_cast %202 : vector<1x1x8x128xf32> to vector<8x128xf32>
    %c3_343 = arith.constant 3 : index
    %c7_344 = arith.constant 7 : index
    %c0_345 = arith.constant 0 : index
    %c0_346 = arith.constant 0 : index
    %204 = vector.load %arg9[%c3_343, %c7_344, %c0_345, %c0_346] : memref<8x8x8x128xf32, #tpu.memory_space<vmem>>, vector<1x1x8x128xf32>
    %205 = vector.shape_cast %204 : vector<1x1x8x128xf32> to vector<8x128xf32>
    %c5_347 = arith.constant 5 : index
    %c3_348 = arith.constant 3 : index
    %c0_349 = arith.constant 0 : index
    %c0_350 = arith.constant 0 : index
    %206 = vector.load %arg9[%c5_347, %c3_348, %c0_349, %c0_350] : memref<8x8x8x128xf32, #tpu.memory_space<vmem>>, vector<1x1x8x128xf32>
    %207 = vector.shape_cast %206 : vector<1x1x8x128xf32> to vector<8x128xf32>
    %c5_351 = arith.constant 5 : index
    %c5_352 = arith.constant 5 : index
    %c0_353 = arith.constant 0 : index
    %c0_354 = arith.constant 0 : index
    %208 = vector.load %arg9[%c5_351, %c5_352, %c0_353, %c0_354] : memref<8x8x8x128xf32, #tpu.memory_space<vmem>>, vector<1x1x8x128xf32>
    %209 = vector.shape_cast %208 : vector<1x1x8x128xf32> to vector<8x128xf32>
    %c5_355 = arith.constant 5 : index
    %c7_356 = arith.constant 7 : index
    %c0_357 = arith.constant 0 : index
    %c0_358 = arith.constant 0 : index
    %210 = vector.load %arg9[%c5_355, %c7_356, %c0_357, %c0_358] : memref<8x8x8x128xf32, #tpu.memory_space<vmem>>, vector<1x1x8x128xf32>
    %211 = vector.shape_cast %210 : vector<1x1x8x128xf32> to vector<8x128xf32>
    %212 = tpu.concatenate %195, %197, %199, %201, %203, %205, %207, %209, %211 in 0 : vector<8x128xf32>, vector<8x128xf32>, vector<8x128xf32>, vector<8x128xf32>, vector<8x128xf32>, vector<8x128xf32>, vector<8x128xf32>, vector<8x128xf32>, vector<8x128xf32> -> vector<72x128xf32>
    %c1_359 = arith.constant 1 : index
    %c3_360 = arith.constant 3 : index
    %c0_361 = arith.constant 0 : index
    %c0_362 = arith.constant 0 : index
    %213 = vector.load %arg4[%c1_359, %c3_360, %c0_361, %c0_362] : memref<4x4x128x128xf32, #tpu.memory_space<vmem>>, vector<1x1x128x128xf32>
    %214 = vector.shape_cast %213 : vector<1x1x128x128xf32> to vector<128x128xf32>
    %cst_363 = arith.constant dense<0.000000e+00> : vector<72x128xf32>
    %215 = tpu.matmul %212, %214, %cst_363 {dimension_numbers = #tpu.dot_dimension_numbers<[1], [0], [0], [1], [0, 0, 1, 1], [], []>} : vector<72x128xf32>, vector<128x128xf32>, vector<72x128xf32> -> vector<72x128xf32>
    %216 = arith.addf %193, %215 : vector<72x128xf32>
    %c2_364 = arith.constant 2 : index
    %c0_365 = arith.constant 0 : index
    %c0_366 = arith.constant 0 : index
    %c0_367 = arith.constant 0 : index
    %217 = vector.load %arg9[%c2_364, %c0_365, %c0_366, %c0_367] : memref<8x8x8x128xf32, #tpu.memory_space<vmem>>, vector<1x1x8x128xf32>
    %218 = vector.shape_cast %217 : vector<1x1x8x128xf32> to vector<8x128xf32>
    %c2_368 = arith.constant 2 : index
    %c2_369 = arith.constant 2 : index
    %c0_370 = arith.constant 0 : index
    %c0_371 = arith.constant 0 : index
    %219 = vector.load %arg9[%c2_368, %c2_369, %c0_370, %c0_371] : memref<8x8x8x128xf32, #tpu.memory_space<vmem>>, vector<1x1x8x128xf32>
    %220 = vector.shape_cast %219 : vector<1x1x8x128xf32> to vector<8x128xf32>
    %c2_372 = arith.constant 2 : index
    %c4_373 = arith.constant 4 : index
    %c0_374 = arith.constant 0 : index
    %c0_375 = arith.constant 0 : index
    %221 = vector.load %arg9[%c2_372, %c4_373, %c0_374, %c0_375] : memref<8x8x8x128xf32, #tpu.memory_space<vmem>>, vector<1x1x8x128xf32>
    %222 = vector.shape_cast %221 : vector<1x1x8x128xf32> to vector<8x128xf32>
    %c4_376 = arith.constant 4 : index
    %c0_377 = arith.constant 0 : index
    %c0_378 = arith.constant 0 : index
    %c0_379 = arith.constant 0 : index
    %223 = vector.load %arg9[%c4_376, %c0_377, %c0_378, %c0_379] : memref<8x8x8x128xf32, #tpu.memory_space<vmem>>, vector<1x1x8x128xf32>
    %224 = vector.shape_cast %223 : vector<1x1x8x128xf32> to vector<8x128xf32>
    %c4_380 = arith.constant 4 : index
    %c2_381 = arith.constant 2 : index
    %c0_382 = arith.constant 0 : index
    %c0_383 = arith.constant 0 : index
    %225 = vector.load %arg9[%c4_380, %c2_381, %c0_382, %c0_383] : memref<8x8x8x128xf32, #tpu.memory_space<vmem>>, vector<1x1x8x128xf32>
    %226 = vector.shape_cast %225 : vector<1x1x8x128xf32> to vector<8x128xf32>
    %c4_384 = arith.constant 4 : index
    %c4_385 = arith.constant 4 : index
    %c0_386 = arith.constant 0 : index
    %c0_387 = arith.constant 0 : index
    %227 = vector.load %arg9[%c4_384, %c4_385, %c0_386, %c0_387] : memref<8x8x8x128xf32, #tpu.memory_space<vmem>>, vector<1x1x8x128xf32>
    %228 = vector.shape_cast %227 : vector<1x1x8x128xf32> to vector<8x128xf32>
    %c6_388 = arith.constant 6 : index
    %c0_389 = arith.constant 0 : index
    %c0_390 = arith.constant 0 : index
    %c0_391 = arith.constant 0 : index
    %229 = vector.load %arg9[%c6_388, %c0_389, %c0_390, %c0_391] : memref<8x8x8x128xf32, #tpu.memory_space<vmem>>, vector<1x1x8x128xf32>
    %230 = vector.shape_cast %229 : vector<1x1x8x128xf32> to vector<8x128xf32>
    %c6_392 = arith.constant 6 : index
    %c2_393 = arith.constant 2 : index
    %c0_394 = arith.constant 0 : index
    %c0_395 = arith.constant 0 : index
    %231 = vector.load %arg9[%c6_392, %c2_393, %c0_394, %c0_395] : memref<8x8x8x128xf32, #tpu.memory_space<vmem>>, vector<1x1x8x128xf32>
    %232 = vector.shape_cast %231 : vector<1x1x8x128xf32> to vector<8x128xf32>
    %c6_396 = arith.constant 6 : index
    %c4_397 = arith.constant 4 : index
    %c0_398 = arith.constant 0 : index
    %c0_399 = arith.constant 0 : index
    %233 = vector.load %arg9[%c6_396, %c4_397, %c0_398, %c0_399] : memref<8x8x8x128xf32, #tpu.memory_space<vmem>>, vector<1x1x8x128xf32>
    %234 = vector.shape_cast %233 : vector<1x1x8x128xf32> to vector<8x128xf32>
    %235 = tpu.concatenate %218, %220, %222, %224, %226, %228, %230, %232, %234 in 0 : vector<8x128xf32>, vector<8x128xf32>, vector<8x128xf32>, vector<8x128xf32>, vector<8x128xf32>, vector<8x128xf32>, vector<8x128xf32>, vector<8x128xf32>, vector<8x128xf32> -> vector<72x128xf32>
    %c2_400 = arith.constant 2 : index
    %c0_401 = arith.constant 0 : index
    %c0_402 = arith.constant 0 : index
    %c0_403 = arith.constant 0 : index
    %236 = vector.load %arg4[%c2_400, %c0_401, %c0_402, %c0_403] : memref<4x4x128x128xf32, #tpu.memory_space<vmem>>, vector<1x1x128x128xf32>
    %237 = vector.shape_cast %236 : vector<1x1x128x128xf32> to vector<128x128xf32>
    %cst_404 = arith.constant dense<0.000000e+00> : vector<72x128xf32>
    %238 = tpu.matmul %235, %237, %cst_404 {dimension_numbers = #tpu.dot_dimension_numbers<[1], [0], [0], [1], [0, 0, 1, 1], [], []>} : vector<72x128xf32>, vector<128x128xf32>, vector<72x128xf32> -> vector<72x128xf32>
    %239 = arith.addf %216, %238 : vector<72x128xf32>
    %c2_405 = arith.constant 2 : index
    %c1_406 = arith.constant 1 : index
    %c0_407 = arith.constant 0 : index
    %c0_408 = arith.constant 0 : index
    %240 = vector.load %arg9[%c2_405, %c1_406, %c0_407, %c0_408] : memref<8x8x8x128xf32, #tpu.memory_space<vmem>>, vector<1x1x8x128xf32>
    %241 = vector.shape_cast %240 : vector<1x1x8x128xf32> to vector<8x128xf32>
    %c2_409 = arith.constant 2 : index
    %c3_410 = arith.constant 3 : index
    %c0_411 = arith.constant 0 : index
    %c0_412 = arith.constant 0 : index
    %242 = vector.load %arg9[%c2_409, %c3_410, %c0_411, %c0_412] : memref<8x8x8x128xf32, #tpu.memory_space<vmem>>, vector<1x1x8x128xf32>
    %243 = vector.shape_cast %242 : vector<1x1x8x128xf32> to vector<8x128xf32>
    %c2_413 = arith.constant 2 : index
    %c5_414 = arith.constant 5 : index
    %c0_415 = arith.constant 0 : index
    %c0_416 = arith.constant 0 : index
    %244 = vector.load %arg9[%c2_413, %c5_414, %c0_415, %c0_416] : memref<8x8x8x128xf32, #tpu.memory_space<vmem>>, vector<1x1x8x128xf32>
    %245 = vector.shape_cast %244 : vector<1x1x8x128xf32> to vector<8x128xf32>
    %c4_417 = arith.constant 4 : index
    %c1_418 = arith.constant 1 : index
    %c0_419 = arith.constant 0 : index
    %c0_420 = arith.constant 0 : index
    %246 = vector.load %arg9[%c4_417, %c1_418, %c0_419, %c0_420] : memref<8x8x8x128xf32, #tpu.memory_space<vmem>>, vector<1x1x8x128xf32>
    %247 = vector.shape_cast %246 : vector<1x1x8x128xf32> to vector<8x128xf32>
    %c4_421 = arith.constant 4 : index
    %c3_422 = arith.constant 3 : index
    %c0_423 = arith.constant 0 : index
    %c0_424 = arith.constant 0 : index
    %248 = vector.load %arg9[%c4_421, %c3_422, %c0_423, %c0_424] : memref<8x8x8x128xf32, #tpu.memory_space<vmem>>, vector<1x1x8x128xf32>
    %249 = vector.shape_cast %248 : vector<1x1x8x128xf32> to vector<8x128xf32>
    %c4_425 = arith.constant 4 : index
    %c5_426 = arith.constant 5 : index
    %c0_427 = arith.constant 0 : index
    %c0_428 = arith.constant 0 : index
    %250 = vector.load %arg9[%c4_425, %c5_426, %c0_427, %c0_428] : memref<8x8x8x128xf32, #tpu.memory_space<vmem>>, vector<1x1x8x128xf32>
    %251 = vector.shape_cast %250 : vector<1x1x8x128xf32> to vector<8x128xf32>
    %c6_429 = arith.constant 6 : index
    %c1_430 = arith.constant 1 : index
    %c0_431 = arith.constant 0 : index
    %c0_432 = arith.constant 0 : index
    %252 = vector.load %arg9[%c6_429, %c1_430, %c0_431, %c0_432] : memref<8x8x8x128xf32, #tpu.memory_space<vmem>>, vector<1x1x8x128xf32>
    %253 = vector.shape_cast %252 : vector<1x1x8x128xf32> to vector<8x128xf32>
    %c6_433 = arith.constant 6 : index
    %c3_434 = arith.constant 3 : index
    %c0_435 = arith.constant 0 : index
    %c0_436 = arith.constant 0 : index
    %254 = vector.load %arg9[%c6_433, %c3_434, %c0_435, %c0_436] : memref<8x8x8x128xf32, #tpu.memory_space<vmem>>, vector<1x1x8x128xf32>
    %255 = vector.shape_cast %254 : vector<1x1x8x128xf32> to vector<8x128xf32>
    %c6_437 = arith.constant 6 : index
    %c5_438 = arith.constant 5 : index
    %c0_439 = arith.constant 0 : index
    %c0_440 = arith.constant 0 : index
    %256 = vector.load %arg9[%c6_437, %c5_438, %c0_439, %c0_440] : memref<8x8x8x128xf32, #tpu.memory_space<vmem>>, vector<1x1x8x128xf32>
    %257 = vector.shape_cast %256 : vector<1x1x8x128xf32> to vector<8x128xf32>
    %258 = tpu.concatenate %241, %243, %245, %247, %249, %251, %253, %255, %257 in 0 : vector<8x128xf32>, vector<8x128xf32>, vector<8x128xf32>, vector<8x128xf32>, vector<8x128xf32>, vector<8x128xf32>, vector<8x128xf32>, vector<8x128xf32>, vector<8x128xf32> -> vector<72x128xf32>
    %c2_441 = arith.constant 2 : index
    %c1_442 = arith.constant 1 : index
    %c0_443 = arith.constant 0 : index
    %c0_444 = arith.constant 0 : index
    %259 = vector.load %arg4[%c2_441, %c1_442, %c0_443, %c0_444] : memref<4x4x128x128xf32, #tpu.memory_space<vmem>>, vector<1x1x128x128xf32>
    %260 = vector.shape_cast %259 : vector<1x1x128x128xf32> to vector<128x128xf32>
    %cst_445 = arith.constant dense<0.000000e+00> : vector<72x128xf32>
    %261 = tpu.matmul %258, %260, %cst_445 {dimension_numbers = #tpu.dot_dimension_numbers<[1], [0], [0], [1], [0, 0, 1, 1], [], []>} : vector<72x128xf32>, vector<128x128xf32>, vector<72x128xf32> -> vector<72x128xf32>
    %262 = arith.addf %239, %261 : vector<72x128xf32>
    %c2_446 = arith.constant 2 : index
    %c2_447 = arith.constant 2 : index
    %c0_448 = arith.constant 0 : index
    %c0_449 = arith.constant 0 : index
    %263 = vector.load %arg9[%c2_446, %c2_447, %c0_448, %c0_449] : memref<8x8x8x128xf32, #tpu.memory_space<vmem>>, vector<1x1x8x128xf32>
    %264 = vector.shape_cast %263 : vector<1x1x8x128xf32> to vector<8x128xf32>
    %c2_450 = arith.constant 2 : index
    %c4_451 = arith.constant 4 : index
    %c0_452 = arith.constant 0 : index
    %c0_453 = arith.constant 0 : index
    %265 = vector.load %arg9[%c2_450, %c4_451, %c0_452, %c0_453] : memref<8x8x8x128xf32, #tpu.memory_space<vmem>>, vector<1x1x8x128xf32>
    %266 = vector.shape_cast %265 : vector<1x1x8x128xf32> to vector<8x128xf32>
    %c2_454 = arith.constant 2 : index
    %c6_455 = arith.constant 6 : index
    %c0_456 = arith.constant 0 : index
    %c0_457 = arith.constant 0 : index
    %267 = vector.load %arg9[%c2_454, %c6_455, %c0_456, %c0_457] : memref<8x8x8x128xf32, #tpu.memory_space<vmem>>, vector<1x1x8x128xf32>
    %268 = vector.shape_cast %267 : vector<1x1x8x128xf32> to vector<8x128xf32>
    %c4_458 = arith.constant 4 : index
    %c2_459 = arith.constant 2 : index
    %c0_460 = arith.constant 0 : index
    %c0_461 = arith.constant 0 : index
    %269 = vector.load %arg9[%c4_458, %c2_459, %c0_460, %c0_461] : memref<8x8x8x128xf32, #tpu.memory_space<vmem>>, vector<1x1x8x128xf32>
    %270 = vector.shape_cast %269 : vector<1x1x8x128xf32> to vector<8x128xf32>
    %c4_462 = arith.constant 4 : index
    %c4_463 = arith.constant 4 : index
    %c0_464 = arith.constant 0 : index
    %c0_465 = arith.constant 0 : index
    %271 = vector.load %arg9[%c4_462, %c4_463, %c0_464, %c0_465] : memref<8x8x8x128xf32, #tpu.memory_space<vmem>>, vector<1x1x8x128xf32>
    %272 = vector.shape_cast %271 : vector<1x1x8x128xf32> to vector<8x128xf32>
    %c4_466 = arith.constant 4 : index
    %c6_467 = arith.constant 6 : index
    %c0_468 = arith.constant 0 : index
    %c0_469 = arith.constant 0 : index
    %273 = vector.load %arg9[%c4_466, %c6_467, %c0_468, %c0_469] : memref<8x8x8x128xf32, #tpu.memory_space<vmem>>, vector<1x1x8x128xf32>
    %274 = vector.shape_cast %273 : vector<1x1x8x128xf32> to vector<8x128xf32>
    %c6_470 = arith.constant 6 : index
    %c2_471 = arith.constant 2 : index
    %c0_472 = arith.constant 0 : index
    %c0_473 = arith.constant 0 : index
    %275 = vector.load %arg9[%c6_470, %c2_471, %c0_472, %c0_473] : memref<8x8x8x128xf32, #tpu.memory_space<vmem>>, vector<1x1x8x128xf32>
    %276 = vector.shape_cast %275 : vector<1x1x8x128xf32> to vector<8x128xf32>
    %c6_474 = arith.constant 6 : index
    %c4_475 = arith.constant 4 : index
    %c0_476 = arith.constant 0 : index
    %c0_477 = arith.constant 0 : index
    %277 = vector.load %arg9[%c6_474, %c4_475, %c0_476, %c0_477] : memref<8x8x8x128xf32, #tpu.memory_space<vmem>>, vector<1x1x8x128xf32>
    %278 = vector.shape_cast %277 : vector<1x1x8x128xf32> to vector<8x128xf32>
    %c6_478 = arith.constant 6 : index
    %c6_479 = arith.constant 6 : index
    %c0_480 = arith.constant 0 : index
    %c0_481 = arith.constant 0 : index
    %279 = vector.load %arg9[%c6_478, %c6_479, %c0_480, %c0_481] : memref<8x8x8x128xf32, #tpu.memory_space<vmem>>, vector<1x1x8x128xf32>
    %280 = vector.shape_cast %279 : vector<1x1x8x128xf32> to vector<8x128xf32>
    %281 = tpu.concatenate %264, %266, %268, %270, %272, %274, %276, %278, %280 in 0 : vector<8x128xf32>, vector<8x128xf32>, vector<8x128xf32>, vector<8x128xf32>, vector<8x128xf32>, vector<8x128xf32>, vector<8x128xf32>, vector<8x128xf32>, vector<8x128xf32> -> vector<72x128xf32>
    %c2_482 = arith.constant 2 : index
    %c2_483 = arith.constant 2 : index
    %c0_484 = arith.constant 0 : index
    %c0_485 = arith.constant 0 : index
    %282 = vector.load %arg4[%c2_482, %c2_483, %c0_484, %c0_485] : memref<4x4x128x128xf32, #tpu.memory_space<vmem>>, vector<1x1x128x128xf32>
    %283 = vector.shape_cast %282 : vector<1x1x128x128xf32> to vector<128x128xf32>
    %cst_486 = arith.constant dense<0.000000e+00> : vector<72x128xf32>
    %284 = tpu.matmul %281, %283, %cst_486 {dimension_numbers = #tpu.dot_dimension_numbers<[1], [0], [0], [1], [0, 0, 1, 1], [], []>} : vector<72x128xf32>, vector<128x128xf32>, vector<72x128xf32> -> vector<72x128xf32>
    %285 = arith.addf %262, %284 : vector<72x128xf32>
    %c2_487 = arith.constant 2 : index
    %c3_488 = arith.constant 3 : index
    %c0_489 = arith.constant 0 : index
    %c0_490 = arith.constant 0 : index
    %286 = vector.load %arg9[%c2_487, %c3_488, %c0_489, %c0_490] : memref<8x8x8x128xf32, #tpu.memory_space<vmem>>, vector<1x1x8x128xf32>
    %287 = vector.shape_cast %286 : vector<1x1x8x128xf32> to vector<8x128xf32>
    %c2_491 = arith.constant 2 : index
    %c5_492 = arith.constant 5 : index
    %c0_493 = arith.constant 0 : index
    %c0_494 = arith.constant 0 : index
    %288 = vector.load %arg9[%c2_491, %c5_492, %c0_493, %c0_494] : memref<8x8x8x128xf32, #tpu.memory_space<vmem>>, vector<1x1x8x128xf32>
    %289 = vector.shape_cast %288 : vector<1x1x8x128xf32> to vector<8x128xf32>
    %c2_495 = arith.constant 2 : index
    %c7_496 = arith.constant 7 : index
    %c0_497 = arith.constant 0 : index
    %c0_498 = arith.constant 0 : index
    %290 = vector.load %arg9[%c2_495, %c7_496, %c0_497, %c0_498] : memref<8x8x8x128xf32, #tpu.memory_space<vmem>>, vector<1x1x8x128xf32>
    %291 = vector.shape_cast %290 : vector<1x1x8x128xf32> to vector<8x128xf32>
    %c4_499 = arith.constant 4 : index
    %c3_500 = arith.constant 3 : index
    %c0_501 = arith.constant 0 : index
    %c0_502 = arith.constant 0 : index
    %292 = vector.load %arg9[%c4_499, %c3_500, %c0_501, %c0_502] : memref<8x8x8x128xf32, #tpu.memory_space<vmem>>, vector<1x1x8x128xf32>
    %293 = vector.shape_cast %292 : vector<1x1x8x128xf32> to vector<8x128xf32>
    %c4_503 = arith.constant 4 : index
    %c5_504 = arith.constant 5 : index
    %c0_505 = arith.constant 0 : index
    %c0_506 = arith.constant 0 : index
    %294 = vector.load %arg9[%c4_503, %c5_504, %c0_505, %c0_506] : memref<8x8x8x128xf32, #tpu.memory_space<vmem>>, vector<1x1x8x128xf32>
    %295 = vector.shape_cast %294 : vector<1x1x8x128xf32> to vector<8x128xf32>
    %c4_507 = arith.constant 4 : index
    %c7_508 = arith.constant 7 : index
    %c0_509 = arith.constant 0 : index
    %c0_510 = arith.constant 0 : index
    %296 = vector.load %arg9[%c4_507, %c7_508, %c0_509, %c0_510] : memref<8x8x8x128xf32, #tpu.memory_space<vmem>>, vector<1x1x8x128xf32>
    %297 = vector.shape_cast %296 : vector<1x1x8x128xf32> to vector<8x128xf32>
    %c6_511 = arith.constant 6 : index
    %c3_512 = arith.constant 3 : index
    %c0_513 = arith.constant 0 : index
    %c0_514 = arith.constant 0 : index
    %298 = vector.load %arg9[%c6_511, %c3_512, %c0_513, %c0_514] : memref<8x8x8x128xf32, #tpu.memory_space<vmem>>, vector<1x1x8x128xf32>
    %299 = vector.shape_cast %298 : vector<1x1x8x128xf32> to vector<8x128xf32>
    %c6_515 = arith.constant 6 : index
    %c5_516 = arith.constant 5 : index
    %c0_517 = arith.constant 0 : index
    %c0_518 = arith.constant 0 : index
    %300 = vector.load %arg9[%c6_515, %c5_516, %c0_517, %c0_518] : memref<8x8x8x128xf32, #tpu.memory_space<vmem>>, vector<1x1x8x128xf32>
    %301 = vector.shape_cast %300 : vector<1x1x8x128xf32> to vector<8x128xf32>
    %c6_519 = arith.constant 6 : index
    %c7_520 = arith.constant 7 : index
    %c0_521 = arith.constant 0 : index
    %c0_522 = arith.constant 0 : index
    %302 = vector.load %arg9[%c6_519, %c7_520, %c0_521, %c0_522] : memref<8x8x8x128xf32, #tpu.memory_space<vmem>>, vector<1x1x8x128xf32>
    %303 = vector.shape_cast %302 : vector<1x1x8x128xf32> to vector<8x128xf32>
    %304 = tpu.concatenate %287, %289, %291, %293, %295, %297, %299, %301, %303 in 0 : vector<8x128xf32>, vector<8x128xf32>, vector<8x128xf32>, vector<8x128xf32>, vector<8x128xf32>, vector<8x128xf32>, vector<8x128xf32>, vector<8x128xf32>, vector<8x128xf32> -> vector<72x128xf32>
    %c2_523 = arith.constant 2 : index
    %c3_524 = arith.constant 3 : index
    %c0_525 = arith.constant 0 : index
    %c0_526 = arith.constant 0 : index
    %305 = vector.load %arg4[%c2_523, %c3_524, %c0_525, %c0_526] : memref<4x4x128x128xf32, #tpu.memory_space<vmem>>, vector<1x1x128x128xf32>
    %306 = vector.shape_cast %305 : vector<1x1x128x128xf32> to vector<128x128xf32>
    %cst_527 = arith.constant dense<0.000000e+00> : vector<72x128xf32>
    %307 = tpu.matmul %304, %306, %cst_527 {dimension_numbers = #tpu.dot_dimension_numbers<[1], [0], [0], [1], [0, 0, 1, 1], [], []>} : vector<72x128xf32>, vector<128x128xf32>, vector<72x128xf32> -> vector<72x128xf32>
    %308 = arith.addf %285, %307 : vector<72x128xf32>
    %c3_528 = arith.constant 3 : index
    %c0_529 = arith.constant 0 : index
    %c0_530 = arith.constant 0 : index
    %c0_531 = arith.constant 0 : index
    %309 = vector.load %arg9[%c3_528, %c0_529, %c0_530, %c0_531] : memref<8x8x8x128xf32, #tpu.memory_space<vmem>>, vector<1x1x8x128xf32>
    %310 = vector.shape_cast %309 : vector<1x1x8x128xf32> to vector<8x128xf32>
    %c3_532 = arith.constant 3 : index
    %c2_533 = arith.constant 2 : index
    %c0_534 = arith.constant 0 : index
    %c0_535 = arith.constant 0 : index
    %311 = vector.load %arg9[%c3_532, %c2_533, %c0_534, %c0_535] : memref<8x8x8x128xf32, #tpu.memory_space<vmem>>, vector<1x1x8x128xf32>
    %312 = vector.shape_cast %311 : vector<1x1x8x128xf32> to vector<8x128xf32>
    %c3_536 = arith.constant 3 : index
    %c4_537 = arith.constant 4 : index
    %c0_538 = arith.constant 0 : index
    %c0_539 = arith.constant 0 : index
    %313 = vector.load %arg9[%c3_536, %c4_537, %c0_538, %c0_539] : memref<8x8x8x128xf32, #tpu.memory_space<vmem>>, vector<1x1x8x128xf32>
    %314 = vector.shape_cast %313 : vector<1x1x8x128xf32> to vector<8x128xf32>
    %c5_540 = arith.constant 5 : index
    %c0_541 = arith.constant 0 : index
    %c0_542 = arith.constant 0 : index
    %c0_543 = arith.constant 0 : index
    %315 = vector.load %arg9[%c5_540, %c0_541, %c0_542, %c0_543] : memref<8x8x8x128xf32, #tpu.memory_space<vmem>>, vector<1x1x8x128xf32>
    %316 = vector.shape_cast %315 : vector<1x1x8x128xf32> to vector<8x128xf32>
    %c5_544 = arith.constant 5 : index
    %c2_545 = arith.constant 2 : index
    %c0_546 = arith.constant 0 : index
    %c0_547 = arith.constant 0 : index
    %317 = vector.load %arg9[%c5_544, %c2_545, %c0_546, %c0_547] : memref<8x8x8x128xf32, #tpu.memory_space<vmem>>, vector<1x1x8x128xf32>
    %318 = vector.shape_cast %317 : vector<1x1x8x128xf32> to vector<8x128xf32>
    %c5_548 = arith.constant 5 : index
    %c4_549 = arith.constant 4 : index
    %c0_550 = arith.constant 0 : index
    %c0_551 = arith.constant 0 : index
    %319 = vector.load %arg9[%c5_548, %c4_549, %c0_550, %c0_551] : memref<8x8x8x128xf32, #tpu.memory_space<vmem>>, vector<1x1x8x128xf32>
    %320 = vector.shape_cast %319 : vector<1x1x8x128xf32> to vector<8x128xf32>
    %c7_552 = arith.constant 7 : index
    %c0_553 = arith.constant 0 : index
    %c0_554 = arith.constant 0 : index
    %c0_555 = arith.constant 0 : index
    %321 = vector.load %arg9[%c7_552, %c0_553, %c0_554, %c0_555] : memref<8x8x8x128xf32, #tpu.memory_space<vmem>>, vector<1x1x8x128xf32>
    %322 = vector.shape_cast %321 : vector<1x1x8x128xf32> to vector<8x128xf32>
    %c7_556 = arith.constant 7 : index
    %c2_557 = arith.constant 2 : index
    %c0_558 = arith.constant 0 : index
    %c0_559 = arith.constant 0 : index
    %323 = vector.load %arg9[%c7_556, %c2_557, %c0_558, %c0_559] : memref<8x8x8x128xf32, #tpu.memory_space<vmem>>, vector<1x1x8x128xf32>
    %324 = vector.shape_cast %323 : vector<1x1x8x128xf32> to vector<8x128xf32>
    %c7_560 = arith.constant 7 : index
    %c4_561 = arith.constant 4 : index
    %c0_562 = arith.constant 0 : index
    %c0_563 = arith.constant 0 : index
    %325 = vector.load %arg9[%c7_560, %c4_561, %c0_562, %c0_563] : memref<8x8x8x128xf32, #tpu.memory_space<vmem>>, vector<1x1x8x128xf32>
    %326 = vector.shape_cast %325 : vector<1x1x8x128xf32> to vector<8x128xf32>
    %327 = tpu.concatenate %310, %312, %314, %316, %318, %320, %322, %324, %326 in 0 : vector<8x128xf32>, vector<8x128xf32>, vector<8x128xf32>, vector<8x128xf32>, vector<8x128xf32>, vector<8x128xf32>, vector<8x128xf32>, vector<8x128xf32>, vector<8x128xf32> -> vector<72x128xf32>
    %c3_564 = arith.constant 3 : index
    %c0_565 = arith.constant 0 : index
    %c0_566 = arith.constant 0 : index
    %c0_567 = arith.constant 0 : index
    %328 = vector.load %arg4[%c3_564, %c0_565, %c0_566, %c0_567] : memref<4x4x128x128xf32, #tpu.memory_space<vmem>>, vector<1x1x128x128xf32>
    %329 = vector.shape_cast %328 : vector<1x1x128x128xf32> to vector<128x128xf32>
    %cst_568 = arith.constant dense<0.000000e+00> : vector<72x128xf32>
    %330 = tpu.matmul %327, %329, %cst_568 {dimension_numbers = #tpu.dot_dimension_numbers<[1], [0], [0], [1], [0, 0, 1, 1], [], []>} : vector<72x128xf32>, vector<128x128xf32>, vector<72x128xf32> -> vector<72x128xf32>
    %331 = arith.addf %308, %330 : vector<72x128xf32>
    %c3_569 = arith.constant 3 : index
    %c1_570 = arith.constant 1 : index
    %c0_571 = arith.constant 0 : index
    %c0_572 = arith.constant 0 : index
    %332 = vector.load %arg9[%c3_569, %c1_570, %c0_571, %c0_572] : memref<8x8x8x128xf32, #tpu.memory_space<vmem>>, vector<1x1x8x128xf32>
    %333 = vector.shape_cast %332 : vector<1x1x8x128xf32> to vector<8x128xf32>
    %c3_573 = arith.constant 3 : index
    %c3_574 = arith.constant 3 : index
    %c0_575 = arith.constant 0 : index
    %c0_576 = arith.constant 0 : index
    %334 = vector.load %arg9[%c3_573, %c3_574, %c0_575, %c0_576] : memref<8x8x8x128xf32, #tpu.memory_space<vmem>>, vector<1x1x8x128xf32>
    %335 = vector.shape_cast %334 : vector<1x1x8x128xf32> to vector<8x128xf32>
    %c3_577 = arith.constant 3 : index
    %c5_578 = arith.constant 5 : index
    %c0_579 = arith.constant 0 : index
    %c0_580 = arith.constant 0 : index
    %336 = vector.load %arg9[%c3_577, %c5_578, %c0_579, %c0_580] : memref<8x8x8x128xf32, #tpu.memory_space<vmem>>, vector<1x1x8x128xf32>
    %337 = vector.shape_cast %336 : vector<1x1x8x128xf32> to vector<8x128xf32>
    %c5_581 = arith.constant 5 : index
    %c1_582 = arith.constant 1 : index
    %c0_583 = arith.constant 0 : index
    %c0_584 = arith.constant 0 : index
    %338 = vector.load %arg9[%c5_581, %c1_582, %c0_583, %c0_584] : memref<8x8x8x128xf32, #tpu.memory_space<vmem>>, vector<1x1x8x128xf32>
    %339 = vector.shape_cast %338 : vector<1x1x8x128xf32> to vector<8x128xf32>
    %c5_585 = arith.constant 5 : index
    %c3_586 = arith.constant 3 : index
    %c0_587 = arith.constant 0 : index
    %c0_588 = arith.constant 0 : index
    %340 = vector.load %arg9[%c5_585, %c3_586, %c0_587, %c0_588] : memref<8x8x8x128xf32, #tpu.memory_space<vmem>>, vector<1x1x8x128xf32>
    %341 = vector.shape_cast %340 : vector<1x1x8x128xf32> to vector<8x128xf32>
    %c5_589 = arith.constant 5 : index
    %c5_590 = arith.constant 5 : index
    %c0_591 = arith.constant 0 : index
    %c0_592 = arith.constant 0 : index
    %342 = vector.load %arg9[%c5_589, %c5_590, %c0_591, %c0_592] : memref<8x8x8x128xf32, #tpu.memory_space<vmem>>, vector<1x1x8x128xf32>
    %343 = vector.shape_cast %342 : vector<1x1x8x128xf32> to vector<8x128xf32>
    %c7_593 = arith.constant 7 : index
    %c1_594 = arith.constant 1 : index
    %c0_595 = arith.constant 0 : index
    %c0_596 = arith.constant 0 : index
    %344 = vector.load %arg9[%c7_593, %c1_594, %c0_595, %c0_596] : memref<8x8x8x128xf32, #tpu.memory_space<vmem>>, vector<1x1x8x128xf32>
    %345 = vector.shape_cast %344 : vector<1x1x8x128xf32> to vector<8x128xf32>
    %c7_597 = arith.constant 7 : index
    %c3_598 = arith.constant 3 : index
    %c0_599 = arith.constant 0 : index
    %c0_600 = arith.constant 0 : index
    %346 = vector.load %arg9[%c7_597, %c3_598, %c0_599, %c0_600] : memref<8x8x8x128xf32, #tpu.memory_space<vmem>>, vector<1x1x8x128xf32>
    %347 = vector.shape_cast %346 : vector<1x1x8x128xf32> to vector<8x128xf32>
    %c7_601 = arith.constant 7 : index
    %c5_602 = arith.constant 5 : index
    %c0_603 = arith.constant 0 : index
    %c0_604 = arith.constant 0 : index
    %348 = vector.load %arg9[%c7_601, %c5_602, %c0_603, %c0_604] : memref<8x8x8x128xf32, #tpu.memory_space<vmem>>, vector<1x1x8x128xf32>
    %349 = vector.shape_cast %348 : vector<1x1x8x128xf32> to vector<8x128xf32>
    %350 = tpu.concatenate %333, %335, %337, %339, %341, %343, %345, %347, %349 in 0 : vector<8x128xf32>, vector<8x128xf32>, vector<8x128xf32>, vector<8x128xf32>, vector<8x128xf32>, vector<8x128xf32>, vector<8x128xf32>, vector<8x128xf32>, vector<8x128xf32> -> vector<72x128xf32>
    %c3_605 = arith.constant 3 : index
    %c1_606 = arith.constant 1 : index
    %c0_607 = arith.constant 0 : index
    %c0_608 = arith.constant 0 : index
    %351 = vector.load %arg4[%c3_605, %c1_606, %c0_607, %c0_608] : memref<4x4x128x128xf32, #tpu.memory_space<vmem>>, vector<1x1x128x128xf32>
    %352 = vector.shape_cast %351 : vector<1x1x128x128xf32> to vector<128x128xf32>
    %cst_609 = arith.constant dense<0.000000e+00> : vector<72x128xf32>
    %353 = tpu.matmul %350, %352, %cst_609 {dimension_numbers = #tpu.dot_dimension_numbers<[1], [0], [0], [1], [0, 0, 1, 1], [], []>} : vector<72x128xf32>, vector<128x128xf32>, vector<72x128xf32> -> vector<72x128xf32>
    %354 = arith.addf %331, %353 : vector<72x128xf32>
    %c3_610 = arith.constant 3 : index
    %c2_611 = arith.constant 2 : index
    %c0_612 = arith.constant 0 : index
    %c0_613 = arith.constant 0 : index
    %355 = vector.load %arg9[%c3_610, %c2_611, %c0_612, %c0_613] : memref<8x8x8x128xf32, #tpu.memory_space<vmem>>, vector<1x1x8x128xf32>
    %356 = vector.shape_cast %355 : vector<1x1x8x128xf32> to vector<8x128xf32>
    %c3_614 = arith.constant 3 : index
    %c4_615 = arith.constant 4 : index
    %c0_616 = arith.constant 0 : index
    %c0_617 = arith.constant 0 : index
    %357 = vector.load %arg9[%c3_614, %c4_615, %c0_616, %c0_617] : memref<8x8x8x128xf32, #tpu.memory_space<vmem>>, vector<1x1x8x128xf32>
    %358 = vector.shape_cast %357 : vector<1x1x8x128xf32> to vector<8x128xf32>
    %c3_618 = arith.constant 3 : index
    %c6_619 = arith.constant 6 : index
    %c0_620 = arith.constant 0 : index
    %c0_621 = arith.constant 0 : index
    %359 = vector.load %arg9[%c3_618, %c6_619, %c0_620, %c0_621] : memref<8x8x8x128xf32, #tpu.memory_space<vmem>>, vector<1x1x8x128xf32>
    %360 = vector.shape_cast %359 : vector<1x1x8x128xf32> to vector<8x128xf32>
    %c5_622 = arith.constant 5 : index
    %c2_623 = arith.constant 2 : index
    %c0_624 = arith.constant 0 : index
    %c0_625 = arith.constant 0 : index
    %361 = vector.load %arg9[%c5_622, %c2_623, %c0_624, %c0_625] : memref<8x8x8x128xf32, #tpu.memory_space<vmem>>, vector<1x1x8x128xf32>
    %362 = vector.shape_cast %361 : vector<1x1x8x128xf32> to vector<8x128xf32>
    %c5_626 = arith.constant 5 : index
    %c4_627 = arith.constant 4 : index
    %c0_628 = arith.constant 0 : index
    %c0_629 = arith.constant 0 : index
    %363 = vector.load %arg9[%c5_626, %c4_627, %c0_628, %c0_629] : memref<8x8x8x128xf32, #tpu.memory_space<vmem>>, vector<1x1x8x128xf32>
    %364 = vector.shape_cast %363 : vector<1x1x8x128xf32> to vector<8x128xf32>
    %c5_630 = arith.constant 5 : index
    %c6_631 = arith.constant 6 : index
    %c0_632 = arith.constant 0 : index
    %c0_633 = arith.constant 0 : index
    %365 = vector.load %arg9[%c5_630, %c6_631, %c0_632, %c0_633] : memref<8x8x8x128xf32, #tpu.memory_space<vmem>>, vector<1x1x8x128xf32>
    %366 = vector.shape_cast %365 : vector<1x1x8x128xf32> to vector<8x128xf32>
    %c7_634 = arith.constant 7 : index
    %c2_635 = arith.constant 2 : index
    %c0_636 = arith.constant 0 : index
    %c0_637 = arith.constant 0 : index
    %367 = vector.load %arg9[%c7_634, %c2_635, %c0_636, %c0_637] : memref<8x8x8x128xf32, #tpu.memory_space<vmem>>, vector<1x1x8x128xf32>
    %368 = vector.shape_cast %367 : vector<1x1x8x128xf32> to vector<8x128xf32>
    %c7_638 = arith.constant 7 : index
    %c4_639 = arith.constant 4 : index
    %c0_640 = arith.constant 0 : index
    %c0_641 = arith.constant 0 : index
    %369 = vector.load %arg9[%c7_638, %c4_639, %c0_640, %c0_641] : memref<8x8x8x128xf32, #tpu.memory_space<vmem>>, vector<1x1x8x128xf32>
    %370 = vector.shape_cast %369 : vector<1x1x8x128xf32> to vector<8x128xf32>
    %c7_642 = arith.constant 7 : index
    %c6_643 = arith.constant 6 : index
    %c0_644 = arith.constant 0 : index
    %c0_645 = arith.constant 0 : index
    %371 = vector.load %arg9[%c7_642, %c6_643, %c0_644, %c0_645] : memref<8x8x8x128xf32, #tpu.memory_space<vmem>>, vector<1x1x8x128xf32>
    %372 = vector.shape_cast %371 : vector<1x1x8x128xf32> to vector<8x128xf32>
    %373 = tpu.concatenate %356, %358, %360, %362, %364, %366, %368, %370, %372 in 0 : vector<8x128xf32>, vector<8x128xf32>, vector<8x128xf32>, vector<8x128xf32>, vector<8x128xf32>, vector<8x128xf32>, vector<8x128xf32>, vector<8x128xf32>, vector<8x128xf32> -> vector<72x128xf32>
    %c3_646 = arith.constant 3 : index
    %c2_647 = arith.constant 2 : index
    %c0_648 = arith.constant 0 : index
    %c0_649 = arith.constant 0 : index
    %374 = vector.load %arg4[%c3_646, %c2_647, %c0_648, %c0_649] : memref<4x4x128x128xf32, #tpu.memory_space<vmem>>, vector<1x1x128x128xf32>
    %375 = vector.shape_cast %374 : vector<1x1x128x128xf32> to vector<128x128xf32>
    %cst_650 = arith.constant dense<0.000000e+00> : vector<72x128xf32>
    %376 = tpu.matmul %373, %375, %cst_650 {dimension_numbers = #tpu.dot_dimension_numbers<[1], [0], [0], [1], [0, 0, 1, 1], [], []>} : vector<72x128xf32>, vector<128x128xf32>, vector<72x128xf32> -> vector<72x128xf32>
    %377 = arith.addf %354, %376 : vector<72x128xf32>
    %c3_651 = arith.constant 3 : index
    %c3_652 = arith.constant 3 : index
    %c0_653 = arith.constant 0 : index
    %c0_654 = arith.constant 0 : index
    %378 = vector.load %arg9[%c3_651, %c3_652, %c0_653, %c0_654] : memref<8x8x8x128xf32, #tpu.memory_space<vmem>>, vector<1x1x8x128xf32>
    %379 = vector.shape_cast %378 : vector<1x1x8x128xf32> to vector<8x128xf32>
    %c3_655 = arith.constant 3 : index
    %c5_656 = arith.constant 5 : index
    %c0_657 = arith.constant 0 : index
    %c0_658 = arith.constant 0 : index
    %380 = vector.load %arg9[%c3_655, %c5_656, %c0_657, %c0_658] : memref<8x8x8x128xf32, #tpu.memory_space<vmem>>, vector<1x1x8x128xf32>
    %381 = vector.shape_cast %380 : vector<1x1x8x128xf32> to vector<8x128xf32>
    %c3_659 = arith.constant 3 : index
    %c7_660 = arith.constant 7 : index
    %c0_661 = arith.constant 0 : index
    %c0_662 = arith.constant 0 : index
    %382 = vector.load %arg9[%c3_659, %c7_660, %c0_661, %c0_662] : memref<8x8x8x128xf32, #tpu.memory_space<vmem>>, vector<1x1x8x128xf32>
    %383 = vector.shape_cast %382 : vector<1x1x8x128xf32> to vector<8x128xf32>
    %c5_663 = arith.constant 5 : index
    %c3_664 = arith.constant 3 : index
    %c0_665 = arith.constant 0 : index
    %c0_666 = arith.constant 0 : index
    %384 = vector.load %arg9[%c5_663, %c3_664, %c0_665, %c0_666] : memref<8x8x8x128xf32, #tpu.memory_space<vmem>>, vector<1x1x8x128xf32>
    %385 = vector.shape_cast %384 : vector<1x1x8x128xf32> to vector<8x128xf32>
    %c5_667 = arith.constant 5 : index
    %c5_668 = arith.constant 5 : index
    %c0_669 = arith.constant 0 : index
    %c0_670 = arith.constant 0 : index
    %386 = vector.load %arg9[%c5_667, %c5_668, %c0_669, %c0_670] : memref<8x8x8x128xf32, #tpu.memory_space<vmem>>, vector<1x1x8x128xf32>
    %387 = vector.shape_cast %386 : vector<1x1x8x128xf32> to vector<8x128xf32>
    %c5_671 = arith.constant 5 : index
    %c7_672 = arith.constant 7 : index
    %c0_673 = arith.constant 0 : index
    %c0_674 = arith.constant 0 : index
    %388 = vector.load %arg9[%c5_671, %c7_672, %c0_673, %c0_674] : memref<8x8x8x128xf32, #tpu.memory_space<vmem>>, vector<1x1x8x128xf32>
    %389 = vector.shape_cast %388 : vector<1x1x8x128xf32> to vector<8x128xf32>
    %c7_675 = arith.constant 7 : index
    %c3_676 = arith.constant 3 : index
    %c0_677 = arith.constant 0 : index
    %c0_678 = arith.constant 0 : index
    %390 = vector.load %arg9[%c7_675, %c3_676, %c0_677, %c0_678] : memref<8x8x8x128xf32, #tpu.memory_space<vmem>>, vector<1x1x8x128xf32>
    %391 = vector.shape_cast %390 : vector<1x1x8x128xf32> to vector<8x128xf32>
    %c7_679 = arith.constant 7 : index
    %c5_680 = arith.constant 5 : index
    %c0_681 = arith.constant 0 : index
    %c0_682 = arith.constant 0 : index
    %392 = vector.load %arg9[%c7_679, %c5_680, %c0_681, %c0_682] : memref<8x8x8x128xf32, #tpu.memory_space<vmem>>, vector<1x1x8x128xf32>
    %393 = vector.shape_cast %392 : vector<1x1x8x128xf32> to vector<8x128xf32>
    %c7_683 = arith.constant 7 : index
    %c7_684 = arith.constant 7 : index
    %c0_685 = arith.constant 0 : index
    %c0_686 = arith.constant 0 : index
    %394 = vector.load %arg9[%c7_683, %c7_684, %c0_685, %c0_686] : memref<8x8x8x128xf32, #tpu.memory_space<vmem>>, vector<1x1x8x128xf32>
    %395 = vector.shape_cast %394 : vector<1x1x8x128xf32> to vector<8x128xf32>
    %396 = tpu.concatenate %379, %381, %383, %385, %387, %389, %391, %393, %395 in 0 : vector<8x128xf32>, vector<8x128xf32>, vector<8x128xf32>, vector<8x128xf32>, vector<8x128xf32>, vector<8x128xf32>, vector<8x128xf32>, vector<8x128xf32>, vector<8x128xf32> -> vector<72x128xf32>
    %c3_687 = arith.constant 3 : index
    %c3_688 = arith.constant 3 : index
    %c0_689 = arith.constant 0 : index
    %c0_690 = arith.constant 0 : index
    %397 = vector.load %arg4[%c3_687, %c3_688, %c0_689, %c0_690] : memref<4x4x128x128xf32, #tpu.memory_space<vmem>>, vector<1x1x128x128xf32>
    %398 = vector.shape_cast %397 : vector<1x1x128x128xf32> to vector<128x128xf32>
    %cst_691 = arith.constant dense<0.000000e+00> : vector<72x128xf32>
    %399 = tpu.matmul %396, %398, %cst_691 {dimension_numbers = #tpu.dot_dimension_numbers<[1], [0], [0], [1], [0, 0, 1, 1], [], []>} : vector<72x128xf32>, vector<128x128xf32>, vector<72x128xf32> -> vector<72x128xf32>
    %400 = arith.addf %377, %399 : vector<72x128xf32>
    %c0_692 = arith.constant 0 : index
    %c0_693 = arith.constant 0 : index
    %401 = vector.load %arg5[%c0_692, %c0_693] : memref<1x128xf32, #tpu.memory_space<vmem>>, vector<1x128xf32>
    %402 = vector.broadcast %401 : vector<1x128xf32> to vector<72x128xf32>
    %403 = arith.addf %400, %402 : vector<72x128xf32>
    %cst_694 = arith.constant 0.000000e+00 : f32
    %404 = vector.broadcast %cst_694 : f32 to vector<72x128xf32>
    %405 = arith.maximumf %403, %404 : vector<72x128xf32>
    %406 = vector.shape_cast %405 : vector<72x128xf32> to vector<9x8x128xf32>
    %cst_695 = arith.constant 0.000000e+00 : f32
    %407 = vector.broadcast %cst_695 : f32 to vector<8x128xf32>
    %408 = vector.extract_strided_slice %406 {offsets = [0, 0, 0], sizes = [1, 8, 128], strides = [1, 1, 1]} : vector<9x8x128xf32> to vector<1x8x128xf32>
    %409 = vector.shape_cast %408 : vector<1x8x128xf32> to vector<8x128xf32>
    %c0_696 = arith.constant 0 : index
    %c0_697 = arith.constant 0 : index
    %c0_698 = arith.constant 0 : index
    %c0_699 = arith.constant 0 : index
    %410 = vector.load %arg6[%c0_696, %c0_697, %c0_698, %c0_699] : memref<3x3x128x128xf32, #tpu.memory_space<vmem>>, vector<1x1x128x128xf32>
    %411 = vector.shape_cast %410 : vector<1x1x128x128xf32> to vector<128x128xf32>
    %cst_700 = arith.constant dense<0.000000e+00> : vector<8x128xf32>
    %412 = tpu.matmul %409, %411, %cst_700 {dimension_numbers = #tpu.dot_dimension_numbers<[1], [0], [0], [1], [0, 0, 1, 1], [], []>} : vector<8x128xf32>, vector<128x128xf32>, vector<8x128xf32> -> vector<8x128xf32>
    %413 = arith.addf %407, %412 : vector<8x128xf32>
    %414 = vector.extract_strided_slice %406 {offsets = [1, 0, 0], sizes = [1, 8, 128], strides = [1, 1, 1]} : vector<9x8x128xf32> to vector<1x8x128xf32>
    %415 = vector.shape_cast %414 : vector<1x8x128xf32> to vector<8x128xf32>
    %c0_701 = arith.constant 0 : index
    %c1_702 = arith.constant 1 : index
    %c0_703 = arith.constant 0 : index
    %c0_704 = arith.constant 0 : index
    %416 = vector.load %arg6[%c0_701, %c1_702, %c0_703, %c0_704] : memref<3x3x128x128xf32, #tpu.memory_space<vmem>>, vector<1x1x128x128xf32>
    %417 = vector.shape_cast %416 : vector<1x1x128x128xf32> to vector<128x128xf32>
    %cst_705 = arith.constant dense<0.000000e+00> : vector<8x128xf32>
    %418 = tpu.matmul %415, %417, %cst_705 {dimension_numbers = #tpu.dot_dimension_numbers<[1], [0], [0], [1], [0, 0, 1, 1], [], []>} : vector<8x128xf32>, vector<128x128xf32>, vector<8x128xf32> -> vector<8x128xf32>
    %419 = arith.addf %413, %418 : vector<8x128xf32>
    %420 = vector.extract_strided_slice %406 {offsets = [2, 0, 0], sizes = [1, 8, 128], strides = [1, 1, 1]} : vector<9x8x128xf32> to vector<1x8x128xf32>
    %421 = vector.shape_cast %420 : vector<1x8x128xf32> to vector<8x128xf32>
    %c0_706 = arith.constant 0 : index
    %c2_707 = arith.constant 2 : index
    %c0_708 = arith.constant 0 : index
    %c0_709 = arith.constant 0 : index
    %422 = vector.load %arg6[%c0_706, %c2_707, %c0_708, %c0_709] : memref<3x3x128x128xf32, #tpu.memory_space<vmem>>, vector<1x1x128x128xf32>
    %423 = vector.shape_cast %422 : vector<1x1x128x128xf32> to vector<128x128xf32>
    %cst_710 = arith.constant dense<0.000000e+00> : vector<8x128xf32>
    %424 = tpu.matmul %421, %423, %cst_710 {dimension_numbers = #tpu.dot_dimension_numbers<[1], [0], [0], [1], [0, 0, 1, 1], [], []>} : vector<8x128xf32>, vector<128x128xf32>, vector<8x128xf32> -> vector<8x128xf32>
    %425 = arith.addf %419, %424 : vector<8x128xf32>
    %426 = vector.extract_strided_slice %406 {offsets = [3, 0, 0], sizes = [1, 8, 128], strides = [1, 1, 1]} : vector<9x8x128xf32> to vector<1x8x128xf32>
    %427 = vector.shape_cast %426 : vector<1x8x128xf32> to vector<8x128xf32>
    %c1_711 = arith.constant 1 : index
    %c0_712 = arith.constant 0 : index
    %c0_713 = arith.constant 0 : index
    %c0_714 = arith.constant 0 : index
    %428 = vector.load %arg6[%c1_711, %c0_712, %c0_713, %c0_714] : memref<3x3x128x128xf32, #tpu.memory_space<vmem>>, vector<1x1x128x128xf32>
    %429 = vector.shape_cast %428 : vector<1x1x128x128xf32> to vector<128x128xf32>
    %cst_715 = arith.constant dense<0.000000e+00> : vector<8x128xf32>
    %430 = tpu.matmul %427, %429, %cst_715 {dimension_numbers = #tpu.dot_dimension_numbers<[1], [0], [0], [1], [0, 0, 1, 1], [], []>} : vector<8x128xf32>, vector<128x128xf32>, vector<8x128xf32> -> vector<8x128xf32>
    %431 = arith.addf %425, %430 : vector<8x128xf32>
    %432 = vector.extract_strided_slice %406 {offsets = [4, 0, 0], sizes = [1, 8, 128], strides = [1, 1, 1]} : vector<9x8x128xf32> to vector<1x8x128xf32>
    %433 = vector.shape_cast %432 : vector<1x8x128xf32> to vector<8x128xf32>
    %c1_716 = arith.constant 1 : index
    %c1_717 = arith.constant 1 : index
    %c0_718 = arith.constant 0 : index
    %c0_719 = arith.constant 0 : index
    %434 = vector.load %arg6[%c1_716, %c1_717, %c0_718, %c0_719] : memref<3x3x128x128xf32, #tpu.memory_space<vmem>>, vector<1x1x128x128xf32>
    %435 = vector.shape_cast %434 : vector<1x1x128x128xf32> to vector<128x128xf32>
    %cst_720 = arith.constant dense<0.000000e+00> : vector<8x128xf32>
    %436 = tpu.matmul %433, %435, %cst_720 {dimension_numbers = #tpu.dot_dimension_numbers<[1], [0], [0], [1], [0, 0, 1, 1], [], []>} : vector<8x128xf32>, vector<128x128xf32>, vector<8x128xf32> -> vector<8x128xf32>
    %437 = arith.addf %431, %436 : vector<8x128xf32>
    %438 = vector.extract_strided_slice %406 {offsets = [5, 0, 0], sizes = [1, 8, 128], strides = [1, 1, 1]} : vector<9x8x128xf32> to vector<1x8x128xf32>
    %439 = vector.shape_cast %438 : vector<1x8x128xf32> to vector<8x128xf32>
    %c1_721 = arith.constant 1 : index
    %c2_722 = arith.constant 2 : index
    %c0_723 = arith.constant 0 : index
    %c0_724 = arith.constant 0 : index
    %440 = vector.load %arg6[%c1_721, %c2_722, %c0_723, %c0_724] : memref<3x3x128x128xf32, #tpu.memory_space<vmem>>, vector<1x1x128x128xf32>
    %441 = vector.shape_cast %440 : vector<1x1x128x128xf32> to vector<128x128xf32>
    %cst_725 = arith.constant dense<0.000000e+00> : vector<8x128xf32>
    %442 = tpu.matmul %439, %441, %cst_725 {dimension_numbers = #tpu.dot_dimension_numbers<[1], [0], [0], [1], [0, 0, 1, 1], [], []>} : vector<8x128xf32>, vector<128x128xf32>, vector<8x128xf32> -> vector<8x128xf32>
    %443 = arith.addf %437, %442 : vector<8x128xf32>
    %444 = vector.extract_strided_slice %406 {offsets = [6, 0, 0], sizes = [1, 8, 128], strides = [1, 1, 1]} : vector<9x8x128xf32> to vector<1x8x128xf32>
    %445 = vector.shape_cast %444 : vector<1x8x128xf32> to vector<8x128xf32>
    %c2_726 = arith.constant 2 : index
    %c0_727 = arith.constant 0 : index
    %c0_728 = arith.constant 0 : index
    %c0_729 = arith.constant 0 : index
    %446 = vector.load %arg6[%c2_726, %c0_727, %c0_728, %c0_729] : memref<3x3x128x128xf32, #tpu.memory_space<vmem>>, vector<1x1x128x128xf32>
    %447 = vector.shape_cast %446 : vector<1x1x128x128xf32> to vector<128x128xf32>
    %cst_730 = arith.constant dense<0.000000e+00> : vector<8x128xf32>
    %448 = tpu.matmul %445, %447, %cst_730 {dimension_numbers = #tpu.dot_dimension_numbers<[1], [0], [0], [1], [0, 0, 1, 1], [], []>} : vector<8x128xf32>, vector<128x128xf32>, vector<8x128xf32> -> vector<8x128xf32>
    %449 = arith.addf %443, %448 : vector<8x128xf32>
    %450 = vector.extract_strided_slice %406 {offsets = [7, 0, 0], sizes = [1, 8, 128], strides = [1, 1, 1]} : vector<9x8x128xf32> to vector<1x8x128xf32>
    %451 = vector.shape_cast %450 : vector<1x8x128xf32> to vector<8x128xf32>
    %c2_731 = arith.constant 2 : index
    %c1_732 = arith.constant 1 : index
    %c0_733 = arith.constant 0 : index
    %c0_734 = arith.constant 0 : index
    %452 = vector.load %arg6[%c2_731, %c1_732, %c0_733, %c0_734] : memref<3x3x128x128xf32, #tpu.memory_space<vmem>>, vector<1x1x128x128xf32>
    %453 = vector.shape_cast %452 : vector<1x1x128x128xf32> to vector<128x128xf32>
    %cst_735 = arith.constant dense<0.000000e+00> : vector<8x128xf32>
    %454 = tpu.matmul %451, %453, %cst_735 {dimension_numbers = #tpu.dot_dimension_numbers<[1], [0], [0], [1], [0, 0, 1, 1], [], []>} : vector<8x128xf32>, vector<128x128xf32>, vector<8x128xf32> -> vector<8x128xf32>
    %455 = arith.addf %449, %454 : vector<8x128xf32>
    %456 = vector.extract_strided_slice %406 {offsets = [8, 0, 0], sizes = [1, 8, 128], strides = [1, 1, 1]} : vector<9x8x128xf32> to vector<1x8x128xf32>
    %457 = vector.shape_cast %456 : vector<1x8x128xf32> to vector<8x128xf32>
    %c2_736 = arith.constant 2 : index
    %c2_737 = arith.constant 2 : index
    %c0_738 = arith.constant 0 : index
    %c0_739 = arith.constant 0 : index
    %458 = vector.load %arg6[%c2_736, %c2_737, %c0_738, %c0_739] : memref<3x3x128x128xf32, #tpu.memory_space<vmem>>, vector<1x1x128x128xf32>
    %459 = vector.shape_cast %458 : vector<1x1x128x128xf32> to vector<128x128xf32>
    %cst_740 = arith.constant dense<0.000000e+00> : vector<8x128xf32>
    %460 = tpu.matmul %457, %459, %cst_740 {dimension_numbers = #tpu.dot_dimension_numbers<[1], [0], [0], [1], [0, 0, 1, 1], [], []>} : vector<8x128xf32>, vector<128x128xf32>, vector<8x128xf32> -> vector<8x128xf32>
    %461 = arith.addf %455, %460 : vector<8x128xf32>
    %c0_741 = arith.constant 0 : index
    %c0_742 = arith.constant 0 : index
    %462 = vector.load %arg7[%c0_741, %c0_742] : memref<1x128xf32, #tpu.memory_space<vmem>>, vector<1x128xf32>
    %463 = vector.broadcast %462 : vector<1x128xf32> to vector<8x128xf32>
    %464 = arith.addf %461, %463 : vector<8x128xf32>
    %cst_743 = arith.constant 0.000000e+00 : f32
    %465 = vector.broadcast %cst_743 : f32 to vector<8x128xf32>
    %466 = arith.maximumf %464, %465 : vector<8x128xf32>
    %c0_744 = arith.constant 0 : index
    %c0_745 = arith.constant 0 : index
    %467 = vector.load %arg8[%c0_744, %c0_745] : memref<8x128xf32, #tpu.memory_space<vmem>>, vector<8x128xf32>
    tpu.vector_store %arg8[%c0_744, %c0_745], %466 {strides = array<i32>} : memref<8x128xf32, #tpu.memory_space<vmem>>, vector<8x128xf32>,
    return
  }
  func.func @transform_0(%arg0: i32) -> (i32, i32, i32, i32) {
    %c0_i32 = arith.constant 0 : i32
    %c0_i32_0 = arith.constant 0 : i32
    %c0_i32_1 = arith.constant 0 : i32
    %c0_i32_2 = arith.constant 0 : i32
    return %c0_i32, %c0_i32_0, %arg0, %c0_i32_1 : i32, i32, i32, i32
  }
  func.func @transform_1(%arg0: i32) -> (i32, i32, i32, i32) {
    %c0_i32 = arith.constant 0 : i32
    %c0_i32_0 = arith.constant 0 : i32
    %c0_i32_1 = arith.constant 0 : i32
    %c0_i32_2 = arith.constant 0 : i32
    %c0_i32_3 = arith.constant 0 : i32
    return %c0_i32, %c0_i32_0, %c0_i32_1, %c0_i32_2 : i32, i32, i32, i32
  }
  func.func @transform_2(%arg0: i32) -> (i32, i32) {
    %c0_i32 = arith.constant 0 : i32
    %c0_i32_0 = arith.constant 0 : i32
    %c0_i32_1 = arith.constant 0 : i32
    return %c0_i32, %c0_i32_0 : i32, i32
  }
  func.func @transform_3(%arg0: i32) -> (i32, i32, i32, i32) {
    %c0_i32 = arith.constant 0 : i32
    %c0_i32_0 = arith.constant 0 : i32
    %c0_i32_1 = arith.constant 0 : i32
    %c0_i32_2 = arith.constant 0 : i32
    %c0_i32_3 = arith.constant 0 : i32
    return %c0_i32, %c0_i32_0, %c0_i32_1, %c0_i32_2 : i32, i32, i32, i32
  }
  func.func @transform_4(%arg0: i32) -> (i32, i32) {
    %c0_i32 = arith.constant 0 : i32
    %c0_i32_0 = arith.constant 0 : i32
    %c0_i32_1 = arith.constant 0 : i32
    return %c0_i32, %c0_i32_0 : i32, i32
  }
  func.func @transform_5(%arg0: i32) -> (i32, i32, i32, i32) {
    %c0_i32 = arith.constant 0 : i32
    %c0_i32_0 = arith.constant 0 : i32
    %c0_i32_1 = arith.constant 0 : i32
    %c0_i32_2 = arith.constant 0 : i32
    %c0_i32_3 = arith.constant 0 : i32
    return %c0_i32, %c0_i32_0, %c0_i32_1, %c0_i32_2 : i32, i32, i32, i32
  }
  func.func @transform_6(%arg0: i32) -> (i32, i32) {
    %c0_i32 = arith.constant 0 : i32
    %c0_i32_0 = arith.constant 0 : i32
    %c0_i32_1 = arith.constant 0 : i32
    return %c0_i32, %c0_i32_0 : i32, i32
  }
  func.func @transform_7(%arg0: i32) -> (i32, i32) {
    %c0_i32 = arith.constant 0 : i32
    %c0_i32_0 = arith.constant 0 : i32
    return %arg0, %c0_i32 : i32, i32
  }
}

</mosaic_0001>

<llo_original>
// kernel: encoder_forward.1
$region0: #{encoder_forward.1}
  #allocation0 [shape = 'u32[]', space=smem, size = 0x4, offset = 0x4, fixed_abs, tag = 'smem constant byte address 0x4 - core index']
  #allocation1 [shape = 'u32[72,128]{1,0:T(1,128)}', space=vmem, size = 0x9000, scoped, tag = 'internal scratch']
  #allocation2 [shape = 'f32[8,8,8,128]{3,2,1,0:T(8,128)}', space=vmem, size = 0x40000, scoped, tag = 'scratch operand']
  %s0 = inlined_call_operand.vmem [shape: f32[9,9,32,48], index: 0, kind: input, shape index: {}]
  %s1 = inlined_call_operand.vmem [shape: f32[2,2,48,128], index: 1, kind: input, shape index: {}]
  %s2 = inlined_call_operand.vmem [shape: f32[1,128], index: 2, kind: input, shape index: {}]
  %s3 = inlined_call_operand.vmem [shape: f32[4,4,128,128], index: 3, kind: input, shape index: {}]
  %s4 = inlined_call_operand.vmem [shape: f32[1,128], index: 4, kind: input, shape index: {}]
  %s5 = inlined_call_operand.vmem [shape: f32[3,3,128,128], index: 5, kind: input, shape index: {}]
  %s6 = inlined_call_operand.vmem [shape: f32[1,128], index: 6, kind: input, shape index: {}]
  %s7 = inlined_call_operand.hbm [shape: f32[32,128], index: 7, kind: output, shape index: {}]
  %s8 = sld [smem:[#allocation0]]
  $region99: #{encoder_forward.1} parent=0
    _
  %s10 = ssub.s32 1, %s8
  %s11 = scalar_select 0, %s10, %s8
  $region1: #{encoder_forward.1} parent=0
    #allocation3 [shape = 'u8[663552]{0}', space=vmem, size = 0xa2000, scoped, tag = 'input window, operand 0']
    #allocation4 [shape = 'u8[8192]{0}', space=vmem, size = 0x2000, scoped, tag = 'output window, operand 0']
    #allocation5 [shape = 's32[2]{0}', space=sflag, size = 0x8, scoped, tag = 'scoped memory for encoder_forward.1']
    %12 = vsyncpa [#allocation5], 0
    %s13 = scalar_lea.sflag [#allocation5], 1
    %14 = vsyncpa %s13, 0
    loop: start=0, step=1, limit=6
    $region2: #{encoder_forward.1} parent=1 // loop_pre_header
      _
    $region3: #{encoder_forward.1} parent=1 // loop_header
      %s16 = sphi 0, %s20
      %p17 = scmp.ge.s32.totalorder %s16, 6
      %s26 = sphi 0, %s28
      %s29 = sphi 0, %s26
      %s30 = sphi 0, %s29
      %s46 = sphi 0, %s30
      %s50 = sphi 0, %s50
      %s52 = sphi 0, %s50
      %s53 = sphi 0, %s52
      %s67 = sphi 0, %s53
      %s71 = sphi 0, %s71
      %s73 = sphi 0, %s71
      %s74 = sphi 0, %s73
      %s88 = sphi 0, %s74
      %s92 = sphi 0, %s92
      %s94 = sphi 0, %s92
      %s95 = sphi 0, %s94
      %s109 = sphi 0, %s95
      %s113 = sphi 0, %s113
      %s115 = sphi 0, %s113
      %s116 = sphi 0, %s115
      %s130 = sphi 0, %s116
      %s134 = sphi 0, %s134
      %s136 = sphi 0, %s134
      %s137 = sphi 0, %s136
      %s151 = sphi 0, %s137
      %s155 = sphi 0, %s155
      %s157 = sphi 0, %s155
      %s158 = sphi 0, %s157
      %s172 = sphi 0, %s158
      %s178 = sphi 0, %s180
      %s181 = sphi 0, %s178
      %s182 = sphi 0, %s181
      %s198 = sphi 0, %s182
    $region4: #{encoder_forward.1} parent=1 // loop_header_branch
      %19 = sbr.rel (%p17) target = $region8
    $region5: #{encoder_forward.1} parent=1 // loop_body
      %s21 = ssub.s32 %s16, 1
      %s22 = ssub.s32 %s16, 2
      %s23 = sadd.s32 %s16, 1
      %s24 = ssub.s32 %s16, %s23
      %p25 = scmp.eq.s32.totalorder %s24, 0
      %s27 = sadd.s32 %s26, 1
      %s28 = scalar_select %p25, %s26, %s27
      %p31 = pneg %p25
      %p32 = scmp.eq.s32.totalorder %s16, 3
      %p33 = por %p31, %p32
      %p34 = scmp.ne.s32.totalorder %s26, %s29
      %p35 = scmp.eq.s32.totalorder %s16, 0
      %p36 = por %p34, %p35
      %p37 = scmp.ne.s32.totalorder %s26, %s29
      %p38 = scmp.eq.s32.totalorder %s21, 3
      %p39 = por %p37, %p38
      %p40 = scmp.ne.s32.totalorder %s29, %s30
      %p41 = scmp.eq.s32.totalorder %s21, 0
      %p42 = por %p40, %p41
      %p43 = scmp.ne.s32.totalorder %s29, %s30
      %p44 = scmp.eq.s32.totalorder %s22, 3
      %p45 = por %p43, %p44
      %p47 = scmp.ne.s32.totalorder %s30, %s46
      %p48 = scmp.eq.s32.totalorder %s22, 0
      %p49 = por %p47, %p48
      %s51 = sadd.s32 %s50, 1
      %p54 = scmp.eq.s32.totalorder %s16, 3
      %p55 = scmp.ne.s32.totalorder %s50, %s52
      %p56 = scmp.eq.s32.totalorder %s16, 0
      %p57 = por %p55, %p56
      %p58 = scmp.ne.s32.totalorder %s50, %s52
      %p59 = scmp.eq.s32.totalorder %s21, 3
      %p60 = por %p58, %p59
      %p61 = scmp.ne.s32.totalorder %s52, %s53
      %p62 = scmp.eq.s32.totalorder %s21, 0
      %p63 = por %p61, %p62
      %p64 = scmp.ne.s32.totalorder %s52, %s53
      %p65 = scmp.eq.s32.totalorder %s22, 3
      %p66 = por %p64, %p65
      %p68 = scmp.ne.s32.totalorder %s53, %s67
      %p69 = scmp.eq.s32.totalorder %s22, 0
      %p70 = por %p68, %p69
      %s72 = sadd.s32 %s71, 1
      %p75 = scmp.eq.s32.totalorder %s16, 3
      %p76 = scmp.ne.s32.totalorder %s71, %s73
      %p77 = scmp.eq.s32.totalorder %s16, 0
      %p78 = por %p76, %p77
      %p79 = scmp.ne.s32.totalorder %s71, %s73
      %p80 = scmp.eq.s32.totalorder %s21, 3
      %p81 = por %p79, %p80
      %p82 = scmp.ne.s32.totalorder %s73, %s74
      %p83 = scmp.eq.s32.totalorder %s21, 0
      %p84 = por %p82, %p83
      %p85 = scmp.ne.s32.totalorder %s73, %s74
      %p86 = scmp.eq.s32.totalorder %s22, 3
      %p87 = por %p85, %p86
      %p89 = scmp.ne.s32.totalorder %s74, %s88
      %p90 = scmp.eq.s32.totalorder %s22, 0
      %p91 = por %p89, %p90
      %s93 = sadd.s32 %s92, 1
      %p96 = scmp.eq.s32.totalorder %s16, 3
      %p97 = scmp.ne.s32.totalorder %s92, %s94
      %p98 = scmp.eq.s32.totalorder %s16, 0
      %p99 = por %p97, %p98
      %p100 = scmp.ne.s32.totalorder %s92, %s94
      %p101 = scmp.eq.s32.totalorder %s21, 3
      %p102 = por %p100, %p101
      %p103 = scmp.ne.s32.totalorder %s94, %s95
      %p104 = scmp.eq.s32.totalorder %s21, 0
      %p105 = por %p103, %p104
      %p106 = scmp.ne.s32.totalorder %s94, %s95
      %p107 = scmp.eq.s32.totalorder %s22, 3
      %p108 = por %p106, %p107
      %p110 = scmp.ne.s32.totalorder %s95, %s109
      %p111 = scmp.eq.s32.totalorder %s22, 0
      %p112 = por %p110, %p111
      %s114 = sadd.s32 %s113, 1
      %p117 = scmp.eq.s32.totalorder %s16, 3
      %p118 = scmp.ne.s32.totalorder %s113, %s115
      %p119 = scmp.eq.s32.totalorder %s16, 0
      %p120 = por %p118, %p119
      %p121 = scmp.ne.s32.totalorder %s113, %s115
      %p122 = scmp.eq.s32.totalorder %s21, 3
      %p123 = por %p121, %p122
      %p124 = scmp.ne.s32.totalorder %s115, %s116
      %p125 = scmp.eq.s32.totalorder %s21, 0
      %p126 = por %p124, %p125
      %p127 = scmp.ne.s32.totalorder %s115, %s116
      %p128 = scmp.eq.s32.totalorder %s22, 3
      %p129 = por %p127, %p128
      %p131 = scmp.ne.s32.totalorder %s116, %s130
      %p132 = scmp.eq.s32.totalorder %s22, 0
      %p133 = por %p131, %p132
      %s135 = sadd.s32 %s134, 1
      %p138 = scmp.eq.s32.totalorder %s16, 3
      %p139 = scmp.ne.s32.totalorder %s134, %s136
      %p140 = scmp.eq.s32.totalorder %s16, 0
      %p141 = por %p139, %p140
      %p142 = scmp.ne.s32.totalorder %s134, %s136
      %p143 = scmp.eq.s32.totalorder %s21, 3
      %p144 = por %p142, %p143
      %p145 = scmp.ne.s32.totalorder %s136, %s137
      %p146 = scmp.eq.s32.totalorder %s21, 0
      %p147 = por %p145, %p146
      %p148 = scmp.ne.s32.totalorder %s136, %s137
      %p149 = scmp.eq.s32.totalorder %s22, 3
      %p150 = por %p148, %p149
      %p152 = scmp.ne.s32.totalorder %s137, %s151
      %p153 = scmp.eq.s32.totalorder %s22, 0
      %p154 = por %p152, %p153
      %s156 = sadd.s32 %s155, 1
      %p159 = scmp.eq.s32.totalorder %s16, 3
      %p160 = scmp.ne.s32.totalorder %s155, %s157
      %p161 = scmp.eq.s32.totalorder %s16, 0
      %p162 = por %p160, %p161
      %p163 = scmp.ne.s32.totalorder %s155, %s157
      %p164 = scmp.eq.s32.totalorder %s21, 3
      %p165 = por %p163, %p164
      %p166 = scmp.ne.s32.totalorder %s157, %s158
      %p167 = scmp.eq.s32.totalorder %s21, 0
      %p168 = por %p166, %p167
      %p169 = scmp.ne.s32.totalorder %s157, %s158
      %p170 = scmp.eq.s32.totalorder %s22, 3
      %p171 = por %p169, %p170
      %p173 = scmp.ne.s32.totalorder %s158, %s172
      %p174 = scmp.eq.s32.totalorder %s22, 0
      %p175 = por %p173, %p174
      %s176 = ssub.s32 %s16, %s23
      %p177 = scmp.eq.s32.totalorder %s176, 0
      %s179 = sadd.s32 %s178, 1
      %s180 = scalar_select %p177, %s178, %s179
      %p183 = pneg %p177
      %p184 = scmp.eq.s32.totalorder %s16, 3
      %p185 = por %p183, %p184
      %p186 = scmp.ne.s32.totalorder %s178, %s181
      %p187 = scmp.eq.s32.totalorder %s16, 0
      %p188 = por %p186, %p187
      %p189 = scmp.ne.s32.totalorder %s178, %s181
      %p190 = scmp.eq.s32.totalorder %s21, 3
      %p191 = por %p189, %p190
      %p192 = scmp.ne.s32.totalorder %s181, %s182
      %p193 = scmp.eq.s32.totalorder %s21, 0
      %p194 = por %p192, %p193
      %p195 = scmp.ne.s32.totalorder %s181, %s182
      %p196 = scmp.eq.s32.totalorder %s22, 3
      %p197 = por %p195, %p196
      %p199 = scmp.ne.s32.totalorder %s182, %s198
      %p200 = scmp.eq.s32.totalorder %s22, 0
      %p201 = por %p199, %p200
      %p202 = scmp.le.s32.totalorder 1, %s16
      %p203 = scmp.lt.s32.totalorder %s16, 5
      %p204 = pnand %p202, %p203
      %p205 = pneg %p204
      // Predicated region
      $region9: #{encoder_forward.1} parent=5 // pred_check
        _
      $region10: #{encoder_forward.1} parent=5 // pred_check_branch
        %207 = sbr.rel (%p204) target = $region12
      $region11: #{encoder_forward.1} parent=5 // pred_region
        %s208 = ssub.s32 %s16, 1
        // Predicated region
        $region13: #{encoder_forward.1} parent=11 // pred_check
          %p209 = pneg %p63
        $region14: #{encoder_forward.1} parent=11 // pred_check_branch
          %211 = sbr.rel (%p209) target = $region16
        $region15: #{encoder_forward.1} parent=11 // pred_region
          _
        $region16: #{encoder_forward.1} parent=11 // pred_fallthru
          _
        // Predicated region
        $region17: #{encoder_forward.1} parent=11 // pred_check
          %p212 = pneg %p84
        $region18: #{encoder_forward.1} parent=11 // pred_check_branch
          %214 = sbr.rel (%p212) target = $region20
        $region19: #{encoder_forward.1} parent=11 // pred_region
          _
        $region20: #{encoder_forward.1} parent=11 // pred_fallthru
          _
        // Predicated region
        $region21: #{encoder_forward.1} parent=11 // pred_check
          %p215 = pneg %p105
        $region22: #{encoder_forward.1} parent=11 // pred_check_branch
          %217 = sbr.rel (%p215) target = $region24
        $region23: #{encoder_forward.1} parent=11 // pred_region
          _
        $region24: #{encoder_forward.1} parent=11 // pred_fallthru
          _
        // Predicated region
        $region25: #{encoder_forward.1} parent=11 // pred_check
          %p218 = pneg %p126
        $region26: #{encoder_forward.1} parent=11 // pred_check_branch
          %220 = sbr.rel (%p218) target = $region28
        $region27: #{encoder_forward.1} parent=11 // pred_region
          _
        $region28: #{encoder_forward.1} parent=11 // pred_fallthru
          _
        // Predicated region
        $region29: #{encoder_forward.1} parent=11 // pred_check
          %p221 = pneg %p147
        $region30: #{encoder_forward.1} parent=11 // pred_check_branch
          %223 = sbr.rel (%p221) target = $region32
        $region31: #{encoder_forward.1} parent=11 // pred_region
          _
        $region32: #{encoder_forward.1} parent=11 // pred_fallthru
          _
        // Predicated region
        $region33: #{encoder_forward.1} parent=11 // pred_check
          %p224 = pneg %p168
        $region34: #{encoder_forward.1} parent=11 // pred_check_branch
          %226 = sbr.rel (%p224) target = $region36
        $region35: #{encoder_forward.1} parent=11 // pred_region
          _
        $region36: #{encoder_forward.1} parent=11 // pred_fallthru
          _
      $region12: #{encoder_forward.1} parent=5 // pred_fallthru
        _
      %p227 = scmp.lt.s32.totalorder %s16, 4
      // Predicated region
      $region37: #{encoder_forward.1} parent=5 // pred_check
        %p228 = pneg %p227
      $region38: #{encoder_forward.1} parent=5 // pred_check_branch
        %230 = sbr.rel (%p228) target = $region40
      $region39: #{encoder_forward.1} parent=5 // pred_region
        // Predicated region
        $region41: #{encoder_forward.1} parent=39 // pred_check
          %p231 = pneg %p36
        $region42: #{encoder_forward.1} parent=39 // pred_check_branch
          %233 = sbr.rel (%p231) target = $region44
        $region43: #{encoder_forward.1} parent=39 // pred_region
          %s234 = sand.u32 %s26, 1
          %s235 = sand.u32 %s26, 1
          %s236 = smul.addr %s235, 648
          %s237 = scalar_lea.vmem [#allocation3], %s236
          %s238 = smul.addr %s16, 8
          %s239 = scalar_lea.vmem %s0, %s238
          // Predicated region
          $region45: #{encoder_forward.1} parent=43 // pred_check
            _
          $region46: #{encoder_forward.1} parent=43 // pred_check_branch
            %241 = sbr.rel (0) target = $region48
          $region47: #{encoder_forward.1} parent=43 // pred_region
            // Predicated region
            $region49: #{encoder_forward.1} parent=47 // pred_check
              _
            $region50: #{encoder_forward.1} parent=47 // pred_check_branch
              %243 = sbr.rel (0) target = $region52
            $region51: #{encoder_forward.1} parent=47 // pred_region
              // Predicated region
              $region64: #{encoder_forward.1} parent=51 // pred_check
                _
              $region65: #{encoder_forward.1} parent=51 // pred_check_branch
                %419 = sbr.rel (0) target = $region67
              $region66: #{encoder_forward.1} parent=51 // pred_region
                loop: start=0, step=1, limit=1
                $region68: #{encoder_forward.1} parent=66 // loop_pre_header
                  _
                $region69: #{encoder_forward.1} parent=66 // loop_header
                  %s421 = sphi 0, %s425
                  %p422 = scmp.ge.s32.totalorder %s421, 1
                  %s426 = sphi %s239, %s239
                  %s427 = sphi %s237, %s237
                $region70: #{encoder_forward.1} parent=66 // loop_header_branch
                  %424 = sbr.rel (%p422) target = $region74
                $region71: #{encoder_forward.1} parent=66 // loop_body
                  %v428 = vld [vmem:[%s426] sm:$0xff]
                  %429 = vst [vmem:[%s427] sm:$0xff] %v428
                  %v430 = vld [vmem:[%s426 + $0x20] sm:$0xff]
                  %431 = vst [vmem:[%s427 + $0x8] sm:$0xff] %v430
                  %v432 = vld [vmem:[%s426 + $0x40] sm:$0xff]
                  %433 = vst [vmem:[%s427 + $0x10] sm:$0xff] %v432
                  %v434 = vld [vmem:[%s426 + $0x60] sm:$0xff]
                  %435 = vst [vmem:[%s427 + $0x18] sm:$0xff] %v434
                  %v436 = vld [vmem:[%s426 + $0x80] sm:$0xff]
                  %437 = vst [vmem:[%s427 + $0x20] sm:$0xff] %v436
                  %v438 = vld [vmem:[%s426 + $0xa0] sm:$0xff]
                  %439 = vst [vmem:[%s427 + $0x28] sm:$0xff] %v438
                  %v440 = vld [vmem:[%s426 + $0xc0] sm:$0xff]
                  %441 = vst [vmem:[%s427 + $0x30] sm:$0xff] %v440
                  %v442 = vld [vmem:[%s426 + $0xe0] sm:$0xff]
                  %443 = vst [vmem:[%s427 + $0x38] sm:$0xff] %v442
                  %v444 = vld [vmem:[%s426 + $0x100] sm:$0xff]
                  %445 = vst [vmem:[%s427 + $0x40] sm:$0xff] %v444
                  %v446 = vld [vmem:[%s426 + $0x120] sm:$0xff]
                  %447 = vst [vmem:[%s427 + $0x48] sm:$0xff] %v446
                  %v448 = vld [vmem:[%s426 + $0x140] sm:$0xff]
                  %449 = vst [vmem:[%s427 + $0x50] sm:$0xff] %v448
                  %v450 = vld [vmem:[%s426 + $0x160] sm:$0xff]
                  %451 = vst [vmem:[%s427 + $0x58] sm:$0xff] %v450
                  %v452 = vld [vmem:[%s426 + $0x180] sm:$0xff]
                  %453 = vst [vmem:[%s427 + $0x60] sm:$0xff] %v452
                  %v454 = vld [vmem:[%s426 + $0x1a0] sm:$0xff]
                  %455 = vst [vmem:[%s427 + $0x68] sm:$0xff] %v454
                  %v456 = vld [vmem:[%s426 + $0x1c0] sm:$0xff]
                  %457 = vst [vmem:[%s427 + $0x70] sm:$0xff] %v456
                  %v458 = vld [vmem:[%s426 + $0x1e0] sm:$0xff]
                  %459 = vst [vmem:[%s427 + $0x78] sm:$0xff] %v458
                  %v460 = vld [vmem:[%s426 + $0x200] sm:$0xff]
                  %461 = vst [vmem:[%s427 + $0x80] sm:$0xff] %v460
                  %v462 = vld [vmem:[%s426 + $0x220] sm:$0xff]
                  %463 = vst [vmem:[%s427 + $0x88] sm:$0xff] %v462
                  %v464 = vld [vmem:[%s426 + $0x240] sm:$0xff]
                  %465 = vst [vmem:[%s427 + $0x90] sm:$0xff] %v464
                  %v466 = vld [vmem:[%s426 + $0x260] sm:$0xff]
                  %467 = vst [vmem:[%s427 + $0x98] sm:$0xff] %v466
                  %v468 = vld [vmem:[%s426 + $0x280] sm:$0xff]
                  %469 = vst [vmem:[%s427 + $0xa0] sm:$0xff] %v468
                  %v470 = vld [vmem:[%s426 + $0x2a0] sm:$0xff]
                  %471 = vst [vmem:[%s427 + $0xa8] sm:$0xff] %v470
                  %v472 = vld [vmem:[%s426 + $0x2c0] sm:$0xff]
                  %473 = vst [vmem:[%s427 + $0xb0] sm:$0xff] %v472
                  %v474 = vld [vmem:[%s426 + $0x2e0] sm:$0xff]
                  %475 = vst [vmem:[%s427 + $0xb8] sm:$0xff] %v474
                  %v476 = vld [vmem:[%s426 + $0x300] sm:$0xff]
                  %477 = vst [vmem:[%s427 + $0xc0] sm:$0xff] %v476
                  %v478 = vld [vmem:[%s426 + $0x320] sm:$0xff]
                  %479 = vst [vmem:[%s427 + $0xc8] sm:$0xff] %v478
                  %v480 = vld [vmem:[%s426 + $0x340] sm:$0xff]
                  %481 = vst [vmem:[%s427 + $0xd0] sm:$0xff] %v480
                  %v482 = vld [vmem:[%s426 + $0x360] sm:$0xff]
                  %483 = vst [vmem:[%s427 + $0xd8] sm:$0xff] %v482
                  %v484 = vld [vmem:[%s426 + $0x380] sm:$0xff]
                  %485 = vst [vmem:[%s427 + $0xe0] sm:$0xff] %v484
                  %v486 = vld [vmem:[%s426 + $0x3a0] sm:$0xff]
                  %487 = vst [vmem:[%s427 + $0xe8] sm:$0xff] %v486
                  %v488 = vld [vmem:[%s426 + $0x3c0] sm:$0xff]
                  %489 = vst [vmem:[%s427 + $0xf0] sm:$0xff] %v488
                  %v490 = vld [vmem:[%s426 + $0x3e0] sm:$0xff]
                  %491 = vst [vmem:[%s427 + $0xf8] sm:$0xff] %v490
                  %v492 = vld [vmem:[%s426 + $0x400] sm:$0xff]
                  %493 = vst [vmem:[%s427 + $0x100] sm:$0xff] %v492
                  %v494 = vld [vmem:[%s426 + $0x420] sm:$0xff]
                  %495 = vst [vmem:[%s427 + $0x108] sm:$0xff] %v494
                  %v496 = vld [vmem:[%s426 + $0x440] sm:$0xff]
                  %497 = vst [vmem:[%s427 + $0x110] sm:$0xff] %v496
                  %v498 = vld [vmem:[%s426 + $0x460] sm:$0xff]
                  %499 = vst [vmem:[%s427 + $0x118] sm:$0xff] %v498
                  %v500 = vld [vmem:[%s426 + $0x480] sm:$0xff]
                  %501 = vst [vmem:[%s427 + $0x120] sm:$0xff] %v500
                  %v502 = vld [vmem:[%s426 + $0x4a0] sm:$0xff]
                  %503 = vst [vmem:[%s427 + $0x128] sm:$0xff] %v502
                  %v504 = vld [vmem:[%s426 + $0x4c0] sm:$0xff]
                  %505 = vst [vmem:[%s427 + $0x130] sm:$0xff] %v504
                  %v506 = vld [vmem:[%s426 + $0x4e0] sm:$0xff]
                  %507 = vst [vmem:[%s427 + $0x138] sm:$0xff] %v506
                  %v508 = vld [vmem:[%s426 + $0x500] sm:$0xff]
                  %509 = vst [vmem:[%s427 + $0x140] sm:$0xff] %v508
                  %v510 = vld [vmem:[%s426 + $0x520] sm:$0xff]
                  %511 = vst [vmem:[%s427 + $0x148] sm:$0xff] %v510
                  %v512 = vld [vmem:[%s426 + $0x540] sm:$0xff]
                  %513 = vst [vmem:[%s427 + $0x150] sm:$0xff] %v512
                  %v514 = vld [vmem:[%s426 + $0x560] sm:$0xff]
                  %515 = vst [vmem:[%s427 + $0x158] sm:$0xff] %v514
                  %v516 = vld [vmem:[%s426 + $0x580] sm:$0xff]
                  %517 = vst [vmem:[%s427 + $0x160] sm:$0xff] %v516
                  %v518 = vld [vmem:[%s426 + $0x5a0] sm:$0xff]
                  %519 = vst [vmem:[%s427 + $0x168] sm:$0xff] %v518
                  %v520 = vld [vmem:[%s426 + $0x5c0] sm:$0xff]
                  %521 = vst [vmem:[%s427 + $0x170] sm:$0xff] %v520
                  %v522 = vld [vmem:[%s426 + $0x5e0] sm:$0xff]
                  %523 = vst [vmem:[%s427 + $0x178] sm:$0xff] %v522
                  %v524 = vld [vmem:[%s426 + $0x600] sm:$0xff]
                  %525 = vst [vmem:[%s427 + $0x180] sm:$0xff] %v524
                  %v526 = vld [vmem:[%s426 + $0x620] sm:$0xff]
                  %527 = vst [vmem:[%s427 + $0x188] sm:$0xff] %v526
                  %v528 = vld [vmem:[%s426 + $0x640] sm:$0xff]
                  %529 = vst [vmem:[%s427 + $0x190] sm:$0xff] %v528
                  %v530 = vld [vmem:[%s426 + $0x660] sm:$0xff]
                  %531 = vst [vmem:[%s427 + $0x198] sm:$0xff] %v530
                  %v532 = vld [vmem:[%s426 + $0x680] sm:$0xff]
                  %533 = vst [vmem:[%s427 + $0x1a0] sm:$0xff] %v532
                  %v534 = vld [vmem:[%s426 + $0x6a0] sm:$0xff]
                  %535 = vst [vmem:[%s427 + $0x1a8] sm:$0xff] %v534
                  %v536 = vld [vmem:[%s426 + $0x6c0] sm:$0xff]
                  %537 = vst [vmem:[%s427 + $0x1b0] sm:$0xff] %v536
                  %v538 = vld [vmem:[%s426 + $0x6e0] sm:$0xff]
                  %539 = vst [vmem:[%s427 + $0x1b8] sm:$0xff] %v538
                  %v540 = vld [vmem:[%s426 + $0x700] sm:$0xff]
                  %541 = vst [vmem:[%s427 + $0x1c0] sm:$0xff] %v540
                  %v542 = vld [vmem:[%s426 + $0x720] sm:$0xff]
                  %543 = vst [vmem:[%s427 + $0x1c8] sm:$0xff] %v542
                  %v544 = vld [vmem:[%s426 + $0x740] sm:$0xff]
                  %545 = vst [vmem:[%s427 + $0x1d0] sm:$0xff] %v544
                  %v546 = vld [vmem:[%s426 + $0x760] sm:$0xff]
                  %547 = vst [vmem:[%s427 + $0x1d8] sm:$0xff] %v546
                  %v548 = vld [vmem:[%s426 + $0x780] sm:$0xff]
                  %549 = vst [vmem:[%s427 + $0x1e0] sm:$0xff] %v548
                  %v550 = vld [vmem:[%s426 + $0x7a0] sm:$0xff]
                  %551 = vst [vmem:[%s427 + $0x1e8] sm:$0xff] %v550
                  %v552 = vld [vmem:[%s426 + $0x7c0] sm:$0xff]
                  %553 = vst [vmem:[%s427 + $0x1f0] sm:$0xff] %v552
                  %v554 = vld [vmem:[%s426 + $0x7e0] sm:$0xff]
                  %555 = vst [vmem:[%s427 + $0x1f8] sm:$0xff] %v554
                  %v556 = vld [vmem:[%s426 + $0x800] sm:$0xff]
                  %557 = vst [vmem:[%s427 + $0x200] sm:$0xff] %v556
                  %v558 = vld [vmem:[%s426 + $0x820] sm:$0xff]
                  %559 = vst [vmem:[%s427 + $0x208] sm:$0xff] %v558
                  %v560 = vld [vmem:[%s426 + $0x840] sm:$0xff]
                  %561 = vst [vmem:[%s427 + $0x210] sm:$0xff] %v560
                  %v562 = vld [vmem:[%s426 + $0x860] sm:$0xff]
                  %563 = vst [vmem:[%s427 + $0x218] sm:$0xff] %v562
                  %v564 = vld [vmem:[%s426 + $0x880] sm:$0xff]
                  %565 = vst [vmem:[%s427 + $0x220] sm:$0xff] %v564
                  %v566 = vld [vmem:[%s426 + $0x8a0] sm:$0xff]
                  %567 = vst [vmem:[%s427 + $0x228] sm:$0xff] %v566
                  %v568 = vld [vmem:[%s426 + $0x8c0] sm:$0xff]
                  %569 = vst [vmem:[%s427 + $0x230] sm:$0xff] %v568
                  %v570 = vld [vmem:[%s426 + $0x8e0] sm:$0xff]
                  %571 = vst [vmem:[%s427 + $0x238] sm:$0xff] %v570
                  %v572 = vld [vmem:[%s426 + $0x900] sm:$0xff]
                  %573 = vst [vmem:[%s427 + $0x240] sm:$0xff] %v572
                  %v574 = vld [vmem:[%s426 + $0x920] sm:$0xff]
                  %575 = vst [vmem:[%s427 + $0x248] sm:$0xff] %v574
                  %v576 = vld [vmem:[%s426 + $0x940] sm:$0xff]
                  %577 = vst [vmem:[%s427 + $0x250] sm:$0xff] %v576
                  %v578 = vld [vmem:[%s426 + $0x960] sm:$0xff]
                  %579 = vst [vmem:[%s427 + $0x258] sm:$0xff] %v578
                  %v580 = vld [vmem:[%s426 + $0x980] sm:$0xff]
                  %581 = vst [vmem:[%s427 + $0x260] sm:$0xff] %v580
                  %v582 = vld [vmem:[%s426 + $0x9a0] sm:$0xff]
                  %583 = vst [vmem:[%s427 + $0x268] sm:$0xff] %v582
                  %v584 = vld [vmem:[%s426 + $0x9c0] sm:$0xff]
                  %585 = vst [vmem:[%s427 + $0x270] sm:$0xff] %v584
                  %v586 = vld [vmem:[%s426 + $0x9e0] sm:$0xff]
                  %587 = vst [vmem:[%s427 + $0x278] sm:$0xff] %v586
                  %v588 = vld [vmem:[%s426 + $0xa00] sm:$0xff]
                  %589 = vst [vmem:[%s427 + $0x280] sm:$0xff] %v588
                $region72: #{encoder_forward.1} parent=66 // loop_footer
                  %s425 = sadd.s32 1, %s421
                $region73: #{encoder_forward.1} parent=66 // loop_footer_branch
                  %420 = sbr.rel target = $region69
                $region74: #{encoder_forward.1} parent=66 // loop_exit
                  _
              $region67: #{encoder_forward.1} parent=51 // pred_fallthru
                _
              // Predicated region
              $region75: #{encoder_forward.1} parent=51 // pred_check
                _
              $region76: #{encoder_forward.1} parent=51 // pred_check_branch
                %591 = sbr.rel target = $region78
              $region77: #{encoder_forward.1} parent=51 // pred_region
                _
              $region78: #{encoder_forward.1} parent=51 // pred_fallthru
                _
            $region52: #{encoder_forward.1} parent=47 // pred_fallthru
              _
            // Predicated region
            $region53: #{encoder_forward.1} parent=47 // pred_check
              _
            $region54: #{encoder_forward.1} parent=47 // pred_check_branch
              %245 = sbr.rel target = $region56
            $region55: #{encoder_forward.1} parent=47 // pred_region
              %s247 = ssub.s32 256, 1
              loop: start=0, step=1, limit=1
              $region57: #{encoder_forward.1} parent=55 // loop_pre_header
                _
              $region58: #{encoder_forward.1} parent=55 // loop_header
                %s249 = sphi 0, %s253
                %p250 = scmp.ge.s32.totalorder %s249, 1
                %s254 = sphi %s239, %s239
                %s255 = sphi %s237, %s237
              $region59: #{encoder_forward.1} parent=55 // loop_header_branch
                %252 = sbr.rel (%p250) target = $region63
              $region60: #{encoder_forward.1} parent=55 // loop_body
                %v256 = vld [vmem:[%s254] sm:%s247]
                %257 = vst [vmem:[%s255] sm:%s247] %v256
                %v258 = vld [vmem:[%s254 + $0x20] sm:%s247]
                %259 = vst [vmem:[%s255 + $0x8] sm:%s247] %v258
                %v260 = vld [vmem:[%s254 + $0x40] sm:%s247]
                %261 = vst [vmem:[%s255 + $0x10] sm:%s247] %v260
                %v262 = vld [vmem:[%s254 + $0x60] sm:%s247]
                %263 = vst [vmem:[%s255 + $0x18] sm:%s247] %v262
                %v264 = vld [vmem:[%s254 + $0x80] sm:%s247]
                %265 = vst [vmem:[%s255 + $0x20] sm:%s247] %v264
                %v266 = vld [vmem:[%s254 + $0xa0] sm:%s247]
                %267 = vst [vmem:[%s255 + $0x28] sm:%s247] %v266
                %v268 = vld [vmem:[%s254 + $0xc0] sm:%s247]
                %269 = vst [vmem:[%s255 + $0x30] sm:%s247] %v268
                %v270 = vld [vmem:[%s254 + $0xe0] sm:%s247]
                %271 = vst [vmem:[%s255 + $0x38] sm:%s247] %v270
                %v272 = vld [vmem:[%s254 + $0x100] sm:%s247]
                %273 = vst [vmem:[%s255 + $0x40] sm:%s247] %v272
                %v274 = vld [vmem:[%s254 + $0x120] sm:%s247]
                %275 = vst [vmem:[%s255 + $0x48] sm:%s247] %v274
                %v276 = vld [vmem:[%s254 + $0x140] sm:%s247]
                %277 = vst [vmem:[%s255 + $0x50] sm:%s247] %v276
                %v278 = vld [vmem:[%s254 + $0x160] sm:%s247]
                %279 = vst [vmem:[%s255 + $0x58] sm:%s247] %v278
                %v280 = vld [vmem:[%s254 + $0x180] sm:%s247]
                %281 = vst [vmem:[%s255 + $0x60] sm:%s247] %v280
                %v282 = vld [vmem:[%s254 + $0x1a0] sm:%s247]
                %283 = vst [vmem:[%s255 + $0x68] sm:%s247] %v282
                %v284 = vld [vmem:[%s254 + $0x1c0] sm:%s247]
                %285 = vst [vmem:[%s255 + $0x70] sm:%s247] %v284
                %v286 = vld [vmem:[%s254 + $0x1e0] sm:%s247]
                %287 = vst [vmem:[%s255 + $0x78] sm:%s247] %v286
                %v288 = vld [vmem:[%s254 + $0x200] sm:%s247]
                %289 = vst [vmem:[%s255 + $0x80] sm:%s247] %v288
                %v290 = vld [vmem:[%s254 + $0x220] sm:%s247]
                %291 = vst [vmem:[%s255 + $0x88] sm:%s247] %v290
                %v292 = vld [vmem:[%s254 + $0x240] sm:%s247]
                %293 = vst [vmem:[%s255 + $0x90] sm:%s247] %v292
                %v294 = vld [vmem:[%s254 + $0x260] sm:%s247]
                %295 = vst [vmem:[%s255 + $0x98] sm:%s247] %v294
                %v296 = vld [vmem:[%s254 + $0x280] sm:%s247]
                %297 = vst [vmem:[%s255 + $0xa0] sm:%s247] %v296
                %v298 = vld [vmem:[%s254 + $0x2a0] sm:%s247]
                %299 = vst [vmem:[%s255 + $0xa8] sm:%s247] %v298
                %v300 = vld [vmem:[%s254 + $0x2c0] sm:%s247]
                %301 = vst [vmem:[%s255 + $0xb0] sm:%s247] %v300
                %v302 = vld [vmem:[%s254 + $0x2e0] sm:%s247]
                %303 = vst [vmem:[%s255 + $0xb8] sm:%s247] %v302
                %v304 = vld [vmem:[%s254 + $0x300] sm:%s247]
                %305 = vst [vmem:[%s255 + $0xc0] sm:%s247] %v304
                %v306 = vld [vmem:[%s254 + $0x320] sm:%s247]
                %307 = vst [vmem:[%s255 + $0xc8] sm:%s247] %v306
                %v308 = vld [vmem:[%s254 + $0x340] sm:%s247]
                %309 = vst [vmem:[%s255 + $0xd0] sm:%s247] %v308
                %v310 = vld [vmem:[%s254 + $0x360] sm:%s247]
                %311 = vst [vmem:[%s255 + $0xd8] sm:%s247] %v310
                %v312 = vld [vmem:[%s254 + $0x380] sm:%s247]
                %313 = vst [vmem:[%s255 + $0xe0] sm:%s247] %v312
                %v314 = vld [vmem:[%s254 + $0x3a0] sm:%s247]
                %315 = vst [vmem:[%s255 + $0xe8] sm:%s247] %v314
                %v316 = vld [vmem:[%s254 + $0x3c0] sm:%s247]
                %317 = vst [vmem:[%s255 + $0xf0] sm:%s247] %v316
                %v318 = vld [vmem:[%s254 + $0x3e0] sm:%s247]
                %319 = vst [vmem:[%s255 + $0xf8] sm:%s247] %v318
                %v320 = vld [vmem:[%s254 + $0x400] sm:%s247]
                %321 = vst [vmem:[%s255 + $0x100] sm:%s247] %v320
                %v322 = vld [vmem:[%s254 + $0x420] sm:%s247]
                %323 = vst [vmem:[%s255 + $0x108] sm:%s247] %v322
                %v324 = vld [vmem:[%s254 + $0x440] sm:%s247]
                %325 = vst [vmem:[%s255 + $0x110] sm:%s247] %v324
                %v326 = vld [vmem:[%s254 + $0x460] sm:%s247]
                %327 = vst [vmem:[%s255 + $0x118] sm:%s247] %v326
                %v328 = vld [vmem:[%s254 + $0x480] sm:%s247]
                %329 = vst [vmem:[%s255 + $0x120] sm:%s247] %v328
                %v330 = vld [vmem:[%s254 + $0x4a0] sm:%s247]
                %331 = vst [vmem:[%s255 + $0x128] sm:%s247] %v330
                %v332 = vld [vmem:[%s254 + $0x4c0] sm:%s247]
                %333 = vst [vmem:[%s255 + $0x130] sm:%s247] %v332
                %v334 = vld [vmem:[%s254 + $0x4e0] sm:%s247]
                %335 = vst [vmem:[%s255 + $0x138] sm:%s247] %v334
                %v336 = vld [vmem:[%s254 + $0x500] sm:%s247]
                %337 = vst [vmem:[%s255 + $0x140] sm:%s247] %v336
                %v338 = vld [vmem:[%s254 + $0x520] sm:%s247]
                %339 = vst [vmem:[%s255 + $0x148] sm:%s247] %v338
                %v340 = vld [vmem:[%s254 + $0x540] sm:%s247]
                %341 = vst [vmem:[%s255 + $0x150] sm:%s247] %v340
                %v342 = vld [vmem:[%s254 + $0x560] sm:%s247]
                %343 = vst [vmem:[%s255 + $0x158] sm:%s247] %v342
                %v344 = vld [vmem:[%s254 + $0x580] sm:%s247]
                %345 = vst [vmem:[%s255 + $0x160] sm:%s247] %v344
                %v346 = vld [vmem:[%s254 + $0x5a0] sm:%s247]
                %347 = vst [vmem:[%s255 + $0x168] sm:%s247] %v346
                %v348 = vld [vmem:[%s254 + $0x5c0] sm:%s247]
                %349 = vst [vmem:[%s255 + $0x170] sm:%s247] %v348
                %v350 = vld [vmem:[%s254 + $0x5e0] sm:%s247]
                %351 = vst [vmem:[%s255 + $0x178] sm:%s247] %v350
                %v352 = vld [vmem:[%s254 + $0x600] sm:%s247]
                %353 = vst [vmem:[%s255 + $0x180] sm:%s247] %v352
                %v354 = vld [vmem:[%s254 + $0x620] sm:%s247]
                %355 = vst [vmem:[%s255 + $0x188] sm:%s247] %v354
                %v356 = vld [vmem:[%s254 + $0x640] sm:%s247]
                %357 = vst [vmem:[%s255 + $0x190] sm:%s247] %v356
                %v358 = vld [vmem:[%s254 + $0x660] sm:%s247]
                %359 = vst [vmem:[%s255 + $0x198] sm:%s247] %v358
                %v360 = vld [vmem:[%s254 + $0x680] sm:%s247]
                %361 = vst [vmem:[%s255 + $0x1a0] sm:%s247] %v360
                %v362 = vld [vmem:[%s254 + $0x6a0] sm:%s247]
                %363 = vst [vmem:[%s255 + $0x1a8] sm:%s247] %v362
                %v364 = vld [vmem:[%s254 + $0x6c0] sm:%s247]
                %365 = vst [vmem:[%s255 + $0x1b0] sm:%s247] %v364
                %v366 = vld [vmem:[%s254 + $0x6e0] sm:%s247]
                %367 = vst [vmem:[%s255 + $0x1b8] sm:%s247] %v366
                %v368 = vld [vmem:[%s254 + $0x700] sm:%s247]
                %369 = vst [vmem:[%s255 + $0x1c0] sm:%s247] %v368
                %v370 = vld [vmem:[%s254 + $0x720] sm:%s247]
                %371 = vst [vmem:[%s255 + $0x1c8] sm:%s247] %v370
                %v372 = vld [vmem:[%s254 + $0x740] sm:%s247]
                %373 = vst [vmem:[%s255 + $0x1d0] sm:%s247] %v372
                %v374 = vld [vmem:[%s254 + $0x760] sm:%s247]
                %375 = vst [vmem:[%s255 + $0x1d8] sm:%s247] %v374
                %v376 = vld [vmem:[%s254 + $0x780] sm:%s247]
                %377 = vst [vmem:[%s255 + $0x1e0] sm:%s247] %v376
                %v378 = vld [vmem:[%s254 + $0x7a0] sm:%s247]
                %379 = vst [vmem:[%s255 + $0x1e8] sm:%s247] %v378
                %v380 = vld [vmem:[%s254 + $0x7c0] sm:%s247]
                %381 = vst [vmem:[%s255 + $0x1f0] sm:%s247] %v380
                %v382 = vld [vmem:[%s254 + $0x7e0] sm:%s247]
                %383 = vst [vmem:[%s255 + $0x1f8] sm:%s247] %v382
                %v384 = vld [vmem:[%s254 + $0x800] sm:%s247]
                %385 = vst [vmem:[%s255 + $0x200] sm:%s247] %v384
                %v386 = vld [vmem:[%s254 + $0x820] sm:%s247]
                %387 = vst [vmem:[%s255 + $0x208] sm:%s247] %v386
                %v388 = vld [vmem:[%s254 + $0x840] sm:%s247]
                %389 = vst [vmem:[%s255 + $0x210] sm:%s247] %v388
                %v390 = vld [vmem:[%s254 + $0x860] sm:%s247]
                %391 = vst [vmem:[%s255 + $0x218] sm:%s247] %v390
                %v392 = vld [vmem:[%s254 + $0x880] sm:%s247]
                %393 = vst [vmem:[%s255 + $0x220] sm:%s247] %v392
                %v394 = vld [vmem:[%s254 + $0x8a0] sm:%s247]
                %395 = vst [vmem:[%s255 + $0x228] sm:%s247] %v394
                %v396 = vld [vmem:[%s254 + $0x8c0] sm:%s247]
                %397 = vst [vmem:[%s255 + $0x230] sm:%s247] %v396
                %v398 = vld [vmem:[%s254 + $0x8e0] sm:%s247]
                %399 = vst [vmem:[%s255 + $0x238] sm:%s247] %v398
                %v400 = vld [vmem:[%s254 + $0x900] sm:%s247]
                %401 = vst [vmem:[%s255 + $0x240] sm:%s247] %v400
                %v402 = vld [vmem:[%s254 + $0x920] sm:%s247]
                %403 = vst [vmem:[%s255 + $0x248] sm:%s247] %v402
                %v404 = vld [vmem:[%s254 + $0x940] sm:%s247]
                %405 = vst [vmem:[%s255 + $0x250] sm:%s247] %v404
                %v406 = vld [vmem:[%s254 + $0x960] sm:%s247]
                %407 = vst [vmem:[%s255 + $0x258] sm:%s247] %v406
                %v408 = vld [vmem:[%s254 + $0x980] sm:%s247]
                %409 = vst [vmem:[%s255 + $0x260] sm:%s247] %v408
                %v410 = vld [vmem:[%s254 + $0x9a0] sm:%s247]
                %411 = vst [vmem:[%s255 + $0x268] sm:%s247] %v410
                %v412 = vld [vmem:[%s254 + $0x9c0] sm:%s247]
                %413 = vst [vmem:[%s255 + $0x270] sm:%s247] %v412
                %v414 = vld [vmem:[%s254 + $0x9e0] sm:%s247]
                %415 = vst [vmem:[%s255 + $0x278] sm:%s247] %v414
                %v416 = vld [vmem:[%s254 + $0xa00] sm:%s247]
                %417 = vst [vmem:[%s255 + $0x280] sm:%s247] %v416
              $region61: #{encoder_forward.1} parent=55 // loop_footer
                %s253 = sadd.s32 1, %s249
              $region62: #{encoder_forward.1} parent=55 // loop_footer_branch
                %248 = sbr.rel target = $region58
              $region63: #{encoder_forward.1} parent=55 // loop_exit
                _
            $region56: #{encoder_forward.1} parent=47 // pred_fallthru
              _
          $region48: #{encoder_forward.1} parent=43 // pred_fallthru
            _
          %592 = vnop
        $region44: #{encoder_forward.1} parent=39 // pred_fallthru
          _
      $region40: #{encoder_forward.1} parent=5 // pred_fallthru
        _
      %p593 = scmp.le.s32.totalorder 1, %s16
      %p594 = scmp.lt.s32.totalorder %s16, 5
      %p595 = pnand %p593, %p594
      %p596 = pneg %p595
      // Predicated region
      $region79: #{encoder_forward.1} parent=5 // pred_check
        _
      $region80: #{encoder_forward.1} parent=5 // pred_check_branch
        %598 = sbr.rel (%p595) target = $region82
      $region81: #{encoder_forward.1} parent=5 // pred_region
        %s599 = ssub.s32 %s16, 1
        %s600 = sand.u32 %s29, 1
        %s601 = sand.u32 %s29, 1
        %s602 = smul.addr %s601, 648
        %s603 = scalar_lea.vmem [#allocation3], %s602
        // Predicated region
        $region83: #{encoder_forward.1} parent=81 // pred_check
          %p604 = pneg %p42
        $region84: #{encoder_forward.1} parent=81 // pred_check_branch
          %606 = sbr.rel (%p604) target = $region86
        $region85: #{encoder_forward.1} parent=81 // pred_region
          _
        $region86: #{encoder_forward.1} parent=81 // pred_fallthru
          _
        %s607 = sand.u32 %s29, 1
        %s608 = sand.u32 %s29, 1
        %s609 = smul.addr %s608, 648
        %s610 = scalar_lea.vmem [#allocation3], %s609
        %p611 = pneg %p42
        %p612 = pneg %p39
        %p613 = pneg %p63
        %p614 = pneg %p60
        %p615 = pneg %p84
        %p616 = pneg %p81
        %p617 = pneg %p105
        %p618 = pneg %p102
        %p619 = pneg %p126
        %p620 = pneg %p123
        %p621 = pneg %p147
        %p622 = pneg %p144
        %p623 = pneg %p168
        %p624 = pneg %p165
        %p625 = pneg %p194
        %p626 = pneg %p191
        %s627 = sand.u32 %s181, 1
        %s628 = scalar_lea.sflag [#allocation5], %s627
        %s629 = sand.u32 %s181, 1
        %s630 = smul.addr %s629, 8
        %s631 = scalar_lea.vmem [#allocation4], %s630
        %v632 = vld [vmem:[%s603] sm:$0xff]
        %v633 = vld [vmem:[%s603 + $0x8] sm:$0xff]
        %v634 = vld [vmem:[%s603 + $0x10] sm:$0xff]
        %v635 = vld [vmem:[%s603 + $0x18] sm:$0xff]
        %v636 = vld [vmem:[%s603 + $0x20] sm:$0xff]
        %v637 = vld [vmem:[%s603 + $0x28] sm:$0xff]
        %v638 = vld [vmem:[%s603 + $0x30] sm:$0xff]
        %v639 = vld [vmem:[%s603 + $0x38] sm:$0xff]
        %v640 = vld [vmem:[%s603 + $0x48] sm:$0xff]
        %v641 = vld [vmem:[%s603 + $0x50] sm:$0xff]
        %v642 = vld [vmem:[%s603 + $0x58] sm:$0xff]
        %v643 = vld [vmem:[%s603 + $0x60] sm:$0xff]
        %v644 = vld [vmem:[%s603 + $0x68] sm:$0xff]
        %v645 = vld [vmem:[%s603 + $0x70] sm:$0xff]
        %v646 = vld [vmem:[%s603 + $0x78] sm:$0xff]
        %v647 = vld [vmem:[%s603 + $0x80] sm:$0xff]
        %v648 = vld [vmem:[%s603 + $0x90] sm:$0xff]
        %v649 = vld [vmem:[%s603 + $0x98] sm:$0xff]
        %v650 = vld [vmem:[%s603 + $0xa0] sm:$0xff]
        %v651 = vld [vmem:[%s603 + $0xa8] sm:$0xff]
        %v652 = vld [vmem:[%s603 + $0xb0] sm:$0xff]
        %v653 = vld [vmem:[%s603 + $0xb8] sm:$0xff]
        %v654 = vld [vmem:[%s603 + $0xc0] sm:$0xff]
        %v655 = vld [vmem:[%s603 + $0xc8] sm:$0xff]
        %v656 = vld [vmem:[%s603 + $0xd8] sm:$0xff]
        %v657 = vld [vmem:[%s603 + $0xe0] sm:$0xff]
        %v658 = vld [vmem:[%s603 + $0xe8] sm:$0xff]
        %v659 = vld [vmem:[%s603 + $0xf0] sm:$0xff]
        %v660 = vld [vmem:[%s603 + $0xf8] sm:$0xff]
        %v661 = vld [vmem:[%s603 + $0x100] sm:$0xff]
        %v662 = vld [vmem:[%s603 + $0x108] sm:$0xff]
        %v663 = vld [vmem:[%s603 + $0x110] sm:$0xff]
        %v664 = vld [vmem:[%s603 + $0x120] sm:$0xff]
        %v665 = vld [vmem:[%s603 + $0x128] sm:$0xff]
        %v666 = vld [vmem:[%s603 + $0x130] sm:$0xff]
        %v667 = vld [vmem:[%s603 + $0x138] sm:$0xff]
        %v668 = vld [vmem:[%s603 + $0x140] sm:$0xff]
        %v669 = vld [vmem:[%s603 + $0x148] sm:$0xff]
        %v670 = vld [vmem:[%s603 + $0x150] sm:$0xff]
        %v671 = vld [vmem:[%s603 + $0x158] sm:$0xff]
        %v672 = vld [vmem:[%s603 + $0x168] sm:$0xff]
        %v673 = vld [vmem:[%s603 + $0x170] sm:$0xff]
        %v674 = vld [vmem:[%s603 + $0x178] sm:$0xff]
        %v675 = vld [vmem:[%s603 + $0x180] sm:$0xff]
        %v676 = vld [vmem:[%s603 + $0x188] sm:$0xff]
        %v677 = vld [vmem:[%s603 + $0x190] sm:$0xff]
        %v678 = vld [vmem:[%s603 + $0x198] sm:$0xff]
        %v679 = vld [vmem:[%s603 + $0x1a0] sm:$0xff]
        %v680 = vld [vmem:[%s603 + $0x1b0] sm:$0xff]
        %v681 = vld [vmem:[%s603 + $0x1b8] sm:$0xff]
        %v682 = vld [vmem:[%s603 + $0x1c0] sm:$0xff]
        %v683 = vld [vmem:[%s603 + $0x1c8] sm:$0xff]
        %v684 = vld [vmem:[%s603 + $0x1d0] sm:$0xff]
        %v685 = vld [vmem:[%s603 + $0x1d8] sm:$0xff]
        %v686 = vld [vmem:[%s603 + $0x1e0] sm:$0xff]
        %v687 = vld [vmem:[%s603 + $0x1e8] sm:$0xff]
        %v688 = vld [vmem:[%s603 + $0x1f8] sm:$0xff]
        %v689 = vld [vmem:[%s603 + $0x200] sm:$0xff]
        %v690 = vld [vmem:[%s603 + $0x208] sm:$0xff]
        %v691 = vld [vmem:[%s603 + $0x210] sm:$0xff]
        %v692 = vld [vmem:[%s603 + $0x218] sm:$0xff]
        %v693 = vld [vmem:[%s603 + $0x220] sm:$0xff]
        %v694 = vld [vmem:[%s603 + $0x228] sm:$0xff]
        %v695 = vld [vmem:[%s603 + $0x230] sm:$0xff]
        %v696 = vld [vmem:[%s1] sm:$0xff]
        %v697 = vld [vmem:[%s1 + $0x8] sm:$0xff]
        %v698 = vld [vmem:[%s1 + $0x10] sm:$0xff]
        %v699 = vld [vmem:[%s1 + $0x18] sm:$0xff]
        %v700 = vld [vmem:[%s1 + $0x20] sm:$0xff]
        %v701 = vld [vmem:[%s1 + $0x28] sm:$0xff]
        %s702 = scalar_lea.vmem %s603, 8 [#allocation3]
        %v703 = vld [vmem:[%s702] sm:$0xff]
        %v704 = vld [vmem:[%s702 + $0x8] sm:$0xff]
        %v705 = vld [vmem:[%s702 + $0x10] sm:$0xff]
        %v706 = vld [vmem:[%s702 + $0x18] sm:$0xff]
        %v707 = vld [vmem:[%s702 + $0x20] sm:$0xff]
        %v708 = vld [vmem:[%s702 + $0x28] sm:$0xff]
        %v709 = vld [vmem:[%s702 + $0x30] sm:$0xff]
        %v710 = vld [vmem:[%s702 + $0x38] sm:$0xff]
        %v711 = vld [vmem:[%s702 + $0x48] sm:$0xff]
        %v712 = vld [vmem:[%s702 + $0x50] sm:$0xff]
        %v713 = vld [vmem:[%s702 + $0x58] sm:$0xff]
        %v714 = vld [vmem:[%s702 + $0x60] sm:$0xff]
        %v715 = vld [vmem:[%s702 + $0x68] sm:$0xff]
        %v716 = vld [vmem:[%s702 + $0x70] sm:$0xff]
        %v717 = vld [vmem:[%s702 + $0x78] sm:$0xff]
        %v718 = vld [vmem:[%s702 + $0x80] sm:$0xff]
        %v719 = vld [vmem:[%s702 + $0x90] sm:$0xff]
        %v720 = vld [vmem:[%s702 + $0x98] sm:$0xff]
        %v721 = vld [vmem:[%s702 + $0xa0] sm:$0xff]
        %v722 = vld [vmem:[%s702 + $0xa8] sm:$0xff]
        %v723 = vld [vmem:[%s702 + $0xb0] sm:$0xff]
        %v724 = vld [vmem:[%s702 + $0xb8] sm:$0xff]
        %v725 = vld [vmem:[%s702 + $0xc0] sm:$0xff]
        %v726 = vld [vmem:[%s702 + $0xc8] sm:$0xff]
        %v727 = vld [vmem:[%s702 + $0xd8] sm:$0xff]
        %v728 = vld [vmem:[%s702 + $0xe0] sm:$0xff]
        %v729 = vld [vmem:[%s702 + $0xe8] sm:$0xff]
        %v730 = vld [vmem:[%s702 + $0xf0] sm:$0xff]
        %v731 = vld [vmem:[%s702 + $0xf8] sm:$0xff]
        %v732 = vld [vmem:[%s702 + $0x100] sm:$0xff]
        %v733 = vld [vmem:[%s702 + $0x108] sm:$0xff]
        %v734 = vld [vmem:[%s702 + $0x110] sm:$0xff]
        %v735 = vld [vmem:[%s702 + $0x120] sm:$0xff]
        %v736 = vld [vmem:[%s702 + $0x128] sm:$0xff]
        %v737 = vld [vmem:[%s702 + $0x130] sm:$0xff]
        %v738 = vld [vmem:[%s702 + $0x138] sm:$0xff]
        %v739 = vld [vmem:[%s702 + $0x140] sm:$0xff]
        %v740 = vld [vmem:[%s702 + $0x148] sm:$0xff]
        %v741 = vld [vmem:[%s702 + $0x150] sm:$0xff]
        %v742 = vld [vmem:[%s702 + $0x158] sm:$0xff]
        %v743 = vld [vmem:[%s702 + $0x168] sm:$0xff]
        %v744 = vld [vmem:[%s702 + $0x170] sm:$0xff]
        %v745 = vld [vmem:[%s702 + $0x178] sm:$0xff]
        %v746 = vld [vmem:[%s702 + $0x180] sm:$0xff]
        %v747 = vld [vmem:[%s702 + $0x188] sm:$0xff]
        %v748 = vld [vmem:[%s702 + $0x190] sm:$0xff]
        %v749 = vld [vmem:[%s702 + $0x198] sm:$0xff]
        %v750 = vld [vmem:[%s702 + $0x1a0] sm:$0xff]
        %v751 = vld [vmem:[%s702 + $0x1b0] sm:$0xff]
        %v752 = vld [vmem:[%s702 + $0x1b8] sm:$0xff]
        %v753 = vld [vmem:[%s702 + $0x1c0] sm:$0xff]
        %v754 = vld [vmem:[%s702 + $0x1c8] sm:$0xff]
        %v755 = vld [vmem:[%s702 + $0x1d0] sm:$0xff]
        %v756 = vld [vmem:[%s702 + $0x1d8] sm:$0xff]
        %v757 = vld [vmem:[%s702 + $0x1e0] sm:$0xff]
        %v758 = vld [vmem:[%s702 + $0x1e8] sm:$0xff]
        %v759 = vld [vmem:[%s702 + $0x1f8] sm:$0xff]
        %v760 = vld [vmem:[%s702 + $0x200] sm:$0xff]
        %v761 = vld [vmem:[%s702 + $0x208] sm:$0xff]
        %v762 = vld [vmem:[%s702 + $0x210] sm:$0xff]
        %v763 = vld [vmem:[%s702 + $0x218] sm:$0xff]
        %v764 = vld [vmem:[%s702 + $0x220] sm:$0xff]
        %v765 = vld [vmem:[%s702 + $0x228] sm:$0xff]
        %v766 = vld [vmem:[%s702 + $0x230] sm:$0xff]
        %s767 = scalar_lea.vmem %s1, 48
        %v768 = vld [vmem:[%s767] sm:$0xff]
        %v769 = vld [vmem:[%s767 + $0x8] sm:$0xff]
        %v770 = vld [vmem:[%s767 + $0x10] sm:$0xff]
        %v771 = vld [vmem:[%s767 + $0x18] sm:$0xff]
        %v772 = vld [vmem:[%s767 + $0x20] sm:$0xff]
        %v773 = vld [vmem:[%s767 + $0x28] sm:$0xff]
        %vm774 = vcmask 392192
        %v776 = vsel %vm774, %v703, 0
        %v779 = vsel %vm774, %v704, 0
        %v782 = vsel %vm774, %v705, 0
        %v785 = vsel %vm774, %v706, 0
        %v788 = vsel %vm774, %v707, 0
        %v791 = vsel %vm774, %v708, 0
        %v794 = vsel %vm774, %v709, 0
        %v797 = vsel %vm774, %v710, 0
        %v800 = vsel %vm774, %v711, 0
        %v803 = vsel %vm774, %v712, 0
        %v806 = vsel %vm774, %v713, 0
        %v809 = vsel %vm774, %v714, 0
        %v812 = vsel %vm774, %v715, 0
        %v815 = vsel %vm774, %v716, 0
        %v818 = vsel %vm774, %v717, 0
        %v821 = vsel %vm774, %v718, 0
        %v824 = vsel %vm774, %v719, 0
        %v827 = vsel %vm774, %v720, 0
        %v830 = vsel %vm774, %v721, 0
        %v833 = vsel %vm774, %v722, 0
        %v836 = vsel %vm774, %v723, 0
        %v839 = vsel %vm774, %v724, 0
        %v842 = vsel %vm774, %v725, 0
        %v845 = vsel %vm774, %v726, 0
        %v848 = vsel %vm774, %v727, 0
        %v851 = vsel %vm774, %v728, 0
        %v854 = vsel %vm774, %v729, 0
        %v857 = vsel %vm774, %v730, 0
        %v860 = vsel %vm774, %v731, 0
        %v863 = vsel %vm774, %v732, 0
        %v866 = vsel %vm774, %v733, 0
        %v869 = vsel %vm774, %v734, 0
        %v872 = vsel %vm774, %v735, 0
        %v875 = vsel %vm774, %v736, 0
        %v878 = vsel %vm774, %v737, 0
        %v881 = vsel %vm774, %v738, 0
        %v884 = vsel %vm774, %v739, 0
        %v887 = vsel %vm774, %v740, 0
        %v890 = vsel %vm774, %v741, 0
        %v893 = vsel %vm774, %v742, 0
        %v896 = vsel %vm774, %v743, 0
        %v899 = vsel %vm774, %v744, 0
        %v902 = vsel %vm774, %v745, 0
        %v905 = vsel %vm774, %v746, 0
        %v908 = vsel %vm774, %v747, 0
        %v911 = vsel %vm774, %v748, 0
        %v914 = vsel %vm774, %v749, 0
        %v917 = vsel %vm774, %v750, 0
        %v920 = vsel %vm774, %v751, 0
        %v923 = vsel %vm774, %v752, 0
        %v926 = vsel %vm774, %v753, 0
        %v929 = vsel %vm774, %v754, 0
        %v932 = vsel %vm774, %v755, 0
        %v935 = vsel %vm774, %v756, 0
        %v938 = vsel %vm774, %v757, 0
        %v941 = vsel %vm774, %v758, 0
        %v944 = vsel %vm774, %v759, 0
        %v947 = vsel %vm774, %v760, 0
        %v950 = vsel %vm774, %v761, 0
        %v953 = vsel %vm774, %v762, 0
        %v956 = vsel %vm774, %v763, 0
        %v959 = vsel %vm774, %v764, 0
        %v962 = vsel %vm774, %v765, 0
        %v965 = vsel %vm774, %v766, 0
        %967 = vmatpush.msra.mxu0 0.0
        %968 = vmatpush.msra.mxu0 0.0
        %969 = vmatpush.msra.mxu0 0.0
        %970 = vmatpush.msra.mxu0 0.0
        %971 = vmatpush.msra.mxu0 0.0
        %972 = vmatpush.msra.mxu0 0.0
        %973 = vmatpush.msra.mxu0 0.0
        %974 = vmatpush.msra.mxu0 0.0
        %975 = vmatpush.msra.mxu0 0.0
        %976 = vmatpush.msra.mxu0 0.0
        %977 = vmatpush.msra.mxu0 %v773
        %978 = vmatpush.msra.mxu0 %v772
        %979 = vmatpush.msra.mxu0 %v771
        %980 = vmatpush.msra.mxu0 %v770
        %981 = vmatpush.msra.mxu0 %v769
        %982 = vmatpush.msra.mxu0 %v768
        %983 = vmatmul.f32.gmra.mxu0 %v776
        %v984 = vpop.f32.mrf.mxu0
        %v985 = vadd.f32 0.0, %v984
        %986 = vmatmul.f32.gmra.mxu0 %v779
        %v987 = vpop.f32.mrf.mxu0
        %v988 = vadd.f32 0.0, %v987
        %989 = vmatmul.f32.gmra.mxu0 %v782
        %v990 = vpop.f32.mrf.mxu0
        %v991 = vadd.f32 0.0, %v990
        %992 = vmatmul.f32.gmra.mxu0 %v785
        %v993 = vpop.f32.mrf.mxu0
        %v994 = vadd.f32 0.0, %v993
        %995 = vmatmul.f32.gmra.mxu0 %v788
        %v996 = vpop.f32.mrf.mxu0
        %v997 = vadd.f32 0.0, %v996
        %998 = vmatmul.f32.gmra.mxu0 %v791
        %v999 = vpop.f32.mrf.mxu0
        %v1000 = vadd.f32 0.0, %v999
        %1001 = vmatmul.f32.gmra.mxu0 %v794
        %v1002 = vpop.f32.mrf.mxu0
        %v1003 = vadd.f32 0.0, %v1002
        %1004 = vmatmul.f32.gmra.mxu0 %v797
        %v1005 = vpop.f32.mrf.mxu0
        %v1006 = vadd.f32 0.0, %v1005
        %1007 = vmatmul.f32.gmra.mxu0 %v800
        %v1008 = vpop.f32.mrf.mxu0
        %v1009 = vadd.f32 0.0, %v1008
        %1010 = vmatmul.f32.gmra.mxu0 %v803
        %v1011 = vpop.f32.mrf.mxu0
        %v1012 = vadd.f32 0.0, %v1011
        %1013 = vmatmul.f32.gmra.mxu0 %v806
        %v1014 = vpop.f32.mrf.mxu0
        %v1015 = vadd.f32 0.0, %v1014
        %1016 = vmatmul.f32.gmra.mxu0 %v809
        %v1017 = vpop.f32.mrf.mxu0
        %v1018 = vadd.f32 0.0, %v1017
        %1019 = vmatmul.f32.gmra.mxu0 %v812
        %v1020 = vpop.f32.mrf.mxu0
        %v1021 = vadd.f32 0.0, %v1020
        %1022 = vmatmul.f32.gmra.mxu0 %v815
        %v1023 = vpop.f32.mrf.mxu0
        %v1024 = vadd.f32 0.0, %v1023
        %1025 = vmatmul.f32.gmra.mxu0 %v818
        %v1026 = vpop.f32.mrf.mxu0
        %v1027 = vadd.f32 0.0, %v1026
        %1028 = vmatmul.f32.gmra.mxu0 %v821
        %v1029 = vpop.f32.mrf.mxu0
        %v1030 = vadd.f32 0.0, %v1029
        %1031 = vmatmul.f32.gmra.mxu0 %v824
        %v1032 = vpop.f32.mrf.mxu0
        %v1033 = vadd.f32 0.0, %v1032
        %1034 = vmatmul.f32.gmra.mxu0 %v827
        %v1035 = vpop.f32.mrf.mxu0
        %v1036 = vadd.f32 0.0, %v1035
        %1037 = vmatmul.f32.gmra.mxu0 %v830
        %v1038 = vpop.f32.mrf.mxu0
        %v1039 = vadd.f32 0.0, %v1038
        %1040 = vmatmul.f32.gmra.mxu0 %v833
        %v1041 = vpop.f32.mrf.mxu0
        %v1042 = vadd.f32 0.0, %v1041
        %1043 = vmatmul.f32.gmra.mxu0 %v836
        %v1044 = vpop.f32.mrf.mxu0
        %v1045 = vadd.f32 0.0, %v1044
        %1046 = vmatmul.f32.gmra.mxu0 %v839
        %v1047 = vpop.f32.mrf.mxu0
        %v1048 = vadd.f32 0.0, %v1047
        %1049 = vmatmul.f32.gmra.mxu0 %v842
        %v1050 = vpop.f32.mrf.mxu0
        %v1051 = vadd.f32 0.0, %v1050
        %1052 = vmatmul.f32.gmra.mxu0 %v845
        %v1053 = vpop.f32.mrf.mxu0
        %v1054 = vadd.f32 0.0, %v1053
        %1055 = vmatmul.f32.gmra.mxu0 %v848
        %v1056 = vpop.f32.mrf.mxu0
        %v1057 = vadd.f32 0.0, %v1056
        %1058 = vmatmul.f32.gmra.mxu0 %v851
        %v1059 = vpop.f32.mrf.mxu0
        %v1060 = vadd.f32 0.0, %v1059
        %1061 = vmatmul.f32.gmra.mxu0 %v854
        %v1062 = vpop.f32.mrf.mxu0
        %v1063 = vadd.f32 0.0, %v1062
        %1064 = vmatmul.f32.gmra.mxu0 %v857
        %v1065 = vpop.f32.mrf.mxu0
        %v1066 = vadd.f32 0.0, %v1065
        %1067 = vmatmul.f32.gmra.mxu0 %v860
        %v1068 = vpop.f32.mrf.mxu0
        %v1069 = vadd.f32 0.0, %v1068
        %1070 = vmatmul.f32.gmra.mxu0 %v863
        %v1071 = vpop.f32.mrf.mxu0
        %v1072 = vadd.f32 0.0, %v1071
        %1073 = vmatmul.f32.gmra.mxu0 %v866
        %v1074 = vpop.f32.mrf.mxu0
        %v1075 = vadd.f32 0.0, %v1074
        %1076 = vmatmul.f32.gmra.mxu0 %v869
        %v1077 = vpop.f32.mrf.mxu0
        %v1078 = vadd.f32 0.0, %v1077
        %1079 = vmatmul.f32.gmra.mxu0 %v872
        %v1080 = vpop.f32.mrf.mxu0
        %v1081 = vadd.f32 0.0, %v1080
        %1082 = vmatmul.f32.gmra.mxu0 %v875
        %v1083 = vpop.f32.mrf.mxu0
        %v1084 = vadd.f32 0.0, %v1083
        %1085 = vmatmul.f32.gmra.mxu0 %v878
        %v1086 = vpop.f32.mrf.mxu0
        %v1087 = vadd.f32 0.0, %v1086
        %1088 = vmatmul.f32.gmra.mxu0 %v881
        %v1089 = vpop.f32.mrf.mxu0
        %v1090 = vadd.f32 0.0, %v1089
        %1091 = vmatmul.f32.gmra.mxu0 %v884
        %v1092 = vpop.f32.mrf.mxu0
        %v1093 = vadd.f32 0.0, %v1092
        %1094 = vmatmul.f32.gmra.mxu0 %v887
        %v1095 = vpop.f32.mrf.mxu0
        %v1096 = vadd.f32 0.0, %v1095
        %1097 = vmatmul.f32.gmra.mxu0 %v890
        %v1098 = vpop.f32.mrf.mxu0
        %v1099 = vadd.f32 0.0, %v1098
        %1100 = vmatmul.f32.gmra.mxu0 %v893
        %v1101 = vpop.f32.mrf.mxu0
        %v1102 = vadd.f32 0.0, %v1101
        %1103 = vmatmul.f32.gmra.mxu0 %v896
        %v1104 = vpop.f32.mrf.mxu0
        %v1105 = vadd.f32 0.0, %v1104
        %1106 = vmatmul.f32.gmra.mxu0 %v899
        %v1107 = vpop.f32.mrf.mxu0
        %v1108 = vadd.f32 0.0, %v1107
        %1109 = vmatmul.f32.gmra.mxu0 %v902
        %v1110 = vpop.f32.mrf.mxu0
        %v1111 = vadd.f32 0.0, %v1110
        %1112 = vmatmul.f32.gmra.mxu0 %v905
        %v1113 = vpop.f32.mrf.mxu0
        %v1114 = vadd.f32 0.0, %v1113
        %1115 = vmatmul.f32.gmra.mxu0 %v908
        %v1116 = vpop.f32.mrf.mxu0
        %v1117 = vadd.f32 0.0, %v1116
        %1118 = vmatmul.f32.gmra.mxu0 %v911
        %v1119 = vpop.f32.mrf.mxu0
        %v1120 = vadd.f32 0.0, %v1119
        %1121 = vmatmul.f32.gmra.mxu0 %v914
        %v1122 = vpop.f32.mrf.mxu0
        %v1123 = vadd.f32 0.0, %v1122
        %1124 = vmatmul.f32.gmra.mxu0 %v917
        %v1125 = vpop.f32.mrf.mxu0
        %v1126 = vadd.f32 0.0, %v1125
        %1127 = vmatmul.f32.gmra.mxu0 %v920
        %v1128 = vpop.f32.mrf.mxu0
        %v1129 = vadd.f32 0.0, %v1128
        %1130 = vmatmul.f32.gmra.mxu0 %v923
        %v1131 = vpop.f32.mrf.mxu0
        %v1132 = vadd.f32 0.0, %v1131
        %1133 = vmatmul.f32.gmra.mxu0 %v926
        %v1134 = vpop.f32.mrf.mxu0
        %v1135 = vadd.f32 0.0, %v1134
        %1136 = vmatmul.f32.gmra.mxu0 %v929
        %v1137 = vpop.f32.mrf.mxu0
        %v1138 = vadd.f32 0.0, %v1137
        %1139 = vmatmul.f32.gmra.mxu0 %v932
        %v1140 = vpop.f32.mrf.mxu0
        %v1141 = vadd.f32 0.0, %v1140
        %1142 = vmatmul.f32.gmra.mxu0 %v935
        %v1143 = vpop.f32.mrf.mxu0
        %v1144 = vadd.f32 0.0, %v1143
        %1145 = vmatmul.f32.gmra.mxu0 %v938
        %v1146 = vpop.f32.mrf.mxu0
        %v1147 = vadd.f32 0.0, %v1146
        %1148 = vmatmul.f32.gmra.mxu0 %v941
        %v1149 = vpop.f32.mrf.mxu0
        %v1150 = vadd.f32 0.0, %v1149
        %1151 = vmatmul.f32.gmra.mxu0 %v944
        %v1152 = vpop.f32.mrf.mxu0
        %v1153 = vadd.f32 0.0, %v1152
        %1154 = vmatmul.f32.gmra.mxu0 %v947
        %v1155 = vpop.f32.mrf.mxu0
        %v1156 = vadd.f32 0.0, %v1155
        %1157 = vmatmul.f32.gmra.mxu0 %v950
        %v1158 = vpop.f32.mrf.mxu0
        %v1159 = vadd.f32 0.0, %v1158
        %1160 = vmatmul.f32.gmra.mxu0 %v953
        %v1161 = vpop.f32.mrf.mxu0
        %v1162 = vadd.f32 0.0, %v1161
        %1163 = vmatmul.f32.gmra.mxu0 %v956
        %v1164 = vpop.f32.mrf.mxu0
        %v1165 = vadd.f32 0.0, %v1164
        %1166 = vmatmul.f32.gmra.mxu0 %v959
        %v1167 = vpop.f32.mrf.mxu0
        %v1168 = vadd.f32 0.0, %v1167
        %1169 = vmatmul.f32.gmra.mxu0 %v962
        %v1170 = vpop.f32.mrf.mxu0
        %v1171 = vadd.f32 0.0, %v1170
        %1172 = vmatmul.f32.gmra.mxu0 %v965
        %v1173 = vpop.f32.mrf.mxu0
        %v1174 = vadd.f32 0.0, %v1173
        %1175 = vdwg.mxu0
        %v1177 = vsel %vm774, %v632, 0
        %v1180 = vsel %vm774, %v633, 0
        %v1183 = vsel %vm774, %v634, 0
        %v1186 = vsel %vm774, %v635, 0
        %v1189 = vsel %vm774, %v636, 0
        %v1192 = vsel %vm774, %v637, 0
        %v1195 = vsel %vm774, %v638, 0
        %v1198 = vsel %vm774, %v639, 0
        %v1201 = vsel %vm774, %v640, 0
        %v1204 = vsel %vm774, %v641, 0
        %v1207 = vsel %vm774, %v642, 0
        %v1210 = vsel %vm774, %v643, 0
        %v1213 = vsel %vm774, %v644, 0
        %v1216 = vsel %vm774, %v645, 0
        %v1219 = vsel %vm774, %v646, 0
        %v1222 = vsel %vm774, %v647, 0
        %v1225 = vsel %vm774, %v648, 0
        %v1228 = vsel %vm774, %v649, 0
        %v1231 = vsel %vm774, %v650, 0
        %v1234 = vsel %vm774, %v651, 0
        %v1237 = vsel %vm774, %v652, 0
        %v1240 = vsel %vm774, %v653, 0
        %v1243 = vsel %vm774, %v654, 0
        %v1246 = vsel %vm774, %v655, 0
        %v1249 = vsel %vm774, %v656, 0
        %v1252 = vsel %vm774, %v657, 0
        %v1255 = vsel %vm774, %v658, 0
        %v1258 = vsel %vm774, %v659, 0
        %v1261 = vsel %vm774, %v660, 0
        %v1264 = vsel %vm774, %v661, 0
        %v1267 = vsel %vm774, %v662, 0
        %v1270 = vsel %vm774, %v663, 0
        %v1273 = vsel %vm774, %v664, 0
        %v1276 = vsel %vm774, %v665, 0
        %v1279 = vsel %vm774, %v666, 0
        %v1282 = vsel %vm774, %v667, 0
        %v1285 = vsel %vm774, %v668, 0
        %v1288 = vsel %vm774, %v669, 0
        %v1291 = vsel %vm774, %v670, 0
        %v1294 = vsel %vm774, %v671, 0
        %v1297 = vsel %vm774, %v672, 0
        %v1300 = vsel %vm774, %v673, 0
        %v1303 = vsel %vm774, %v674, 0
        %v1306 = vsel %vm774, %v675, 0
        %v1309 = vsel %vm774, %v676, 0
        %v1312 = vsel %vm774, %v677, 0
        %v1315 = vsel %vm774, %v678, 0
        %v1318 = vsel %vm774, %v679, 0
        %v1321 = vsel %vm774, %v680, 0
        %v1324 = vsel %vm774, %v681, 0
        %v1327 = vsel %vm774, %v682, 0
        %v1330 = vsel %vm774, %v683, 0
        %v1333 = vsel %vm774, %v684, 0
        %v1336 = vsel %vm774, %v685, 0
        %v1339 = vsel %vm774, %v686, 0
        %v1342 = vsel %vm774, %v687, 0
        %v1345 = vsel %vm774, %v688, 0
        %v1348 = vsel %vm774, %v689, 0
        %v1351 = vsel %vm774, %v690, 0
        %v1354 = vsel %vm774, %v691, 0
        %v1357 = vsel %vm774, %v692, 0
        %v1360 = vsel %vm774, %v693, 0
        %v1363 = vsel %vm774, %v694, 0
        %v1366 = vsel %vm774, %v695, 0
        %1368 = vmatpush.msra.mxu0 0.0
        %1369 = vmatpush.msra.mxu0 0.0
        %1370 = vmatpush.msra.mxu0 0.0
        %1371 = vmatpush.msra.mxu0 0.0
        %1372 = vmatpush.msra.mxu0 0.0
        %1373 = vmatpush.msra.mxu0 0.0
        %1374 = vmatpush.msra.mxu0 0.0
        %1375 = vmatpush.msra.mxu0 0.0
        %1376 = vmatpush.msra.mxu0 0.0
        %1377 = vmatpush.msra.mxu0 0.0
        %1378 = vmatpush.msra.mxu0 %v701
        %1379 = vmatpush.msra.mxu0 %v700
        %1380 = vmatpush.msra.mxu0 %v699
        %1381 = vmatpush.msra.mxu0 %v698
        %1382 = vmatpush.msra.mxu0 %v697
        %1383 = vmatpush.msra.mxu0 %v696
        %1384 = vmatmul.f32.gmra.mxu0 %v1177
        %v1385 = vpop.f32.mrf.mxu0
        %v1386 = vadd.f32 %v985, %v1385
        %1387 = vmatmul.f32.gmra.mxu0 %v1180
        %v1388 = vpop.f32.mrf.mxu0
        %v1389 = vadd.f32 %v988, %v1388
        %1390 = vmatmul.f32.gmra.mxu0 %v1183
        %v1391 = vpop.f32.mrf.mxu0
        %v1392 = vadd.f32 %v991, %v1391
        %1393 = vmatmul.f32.gmra.mxu0 %v1186
        %v1394 = vpop.f32.mrf.mxu0
        %v1395 = vadd.f32 %v994, %v1394
        %1396 = vmatmul.f32.gmra.mxu0 %v1189
        %v1397 = vpop.f32.mrf.mxu0
        %v1398 = vadd.f32 %v997, %v1397
        %1399 = vmatmul.f32.gmra.mxu0 %v1192
        %v1400 = vpop.f32.mrf.mxu0
        %v1401 = vadd.f32 %v1000, %v1400
        %1402 = vmatmul.f32.gmra.mxu0 %v1195
        %v1403 = vpop.f32.mrf.mxu0
        %v1404 = vadd.f32 %v1003, %v1403
        %1405 = vmatmul.f32.gmra.mxu0 %v1198
        %v1406 = vpop.f32.mrf.mxu0
        %v1407 = vadd.f32 %v1006, %v1406
        %1408 = vmatmul.f32.gmra.mxu0 %v1201
        %v1409 = vpop.f32.mrf.mxu0
        %v1410 = vadd.f32 %v1009, %v1409
        %1411 = vmatmul.f32.gmra.mxu0 %v1204
        %v1412 = vpop.f32.mrf.mxu0
        %v1413 = vadd.f32 %v1012, %v1412
        %1414 = vmatmul.f32.gmra.mxu0 %v1207
        %v1415 = vpop.f32.mrf.mxu0
        %v1416 = vadd.f32 %v1015, %v1415
        %1417 = vmatmul.f32.gmra.mxu0 %v1210
        %v1418 = vpop.f32.mrf.mxu0
        %v1419 = vadd.f32 %v1018, %v1418
        %1420 = vmatmul.f32.gmra.mxu0 %v1213
        %v1421 = vpop.f32.mrf.mxu0
        %v1422 = vadd.f32 %v1021, %v1421
        %1423 = vmatmul.f32.gmra.mxu0 %v1216
        %v1424 = vpop.f32.mrf.mxu0
        %v1425 = vadd.f32 %v1024, %v1424
        %1426 = vmatmul.f32.gmra.mxu0 %v1219
        %v1427 = vpop.f32.mrf.mxu0
        %v1428 = vadd.f32 %v1027, %v1427
        %1429 = vmatmul.f32.gmra.mxu0 %v1222
        %v1430 = vpop.f32.mrf.mxu0
        %v1431 = vadd.f32 %v1030, %v1430
        %1432 = vmatmul.f32.gmra.mxu0 %v1225
        %v1433 = vpop.f32.mrf.mxu0
        %v1434 = vadd.f32 %v1033, %v1433
        %1435 = vmatmul.f32.gmra.mxu0 %v1228
        %v1436 = vpop.f32.mrf.mxu0
        %v1437 = vadd.f32 %v1036, %v1436
        %1438 = vmatmul.f32.gmra.mxu0 %v1231
        %v1439 = vpop.f32.mrf.mxu0
        %v1440 = vadd.f32 %v1039, %v1439
        %1441 = vmatmul.f32.gmra.mxu0 %v1234
        %v1442 = vpop.f32.mrf.mxu0
        %v1443 = vadd.f32 %v1042, %v1442
        %1444 = vmatmul.f32.gmra.mxu0 %v1237
        %v1445 = vpop.f32.mrf.mxu0
        %v1446 = vadd.f32 %v1045, %v1445
        %1447 = vmatmul.f32.gmra.mxu0 %v1240
        %v1448 = vpop.f32.mrf.mxu0
        %v1449 = vadd.f32 %v1048, %v1448
        %1450 = vmatmul.f32.gmra.mxu0 %v1243
        %v1451 = vpop.f32.mrf.mxu0
        %v1452 = vadd.f32 %v1051, %v1451
        %1453 = vmatmul.f32.gmra.mxu0 %v1246
        %v1454 = vpop.f32.mrf.mxu0
        %v1455 = vadd.f32 %v1054, %v1454
        %1456 = vmatmul.f32.gmra.mxu0 %v1249
        %v1457 = vpop.f32.mrf.mxu0
        %v1458 = vadd.f32 %v1057, %v1457
        %1459 = vmatmul.f32.gmra.mxu0 %v1252
        %v1460 = vpop.f32.mrf.mxu0
        %v1461 = vadd.f32 %v1060, %v1460
        %1462 = vmatmul.f32.gmra.mxu0 %v1255
        %v1463 = vpop.f32.mrf.mxu0
        %v1464 = vadd.f32 %v1063, %v1463
        %1465 = vmatmul.f32.gmra.mxu0 %v1258
        %v1466 = vpop.f32.mrf.mxu0
        %v1467 = vadd.f32 %v1066, %v1466
        %1468 = vmatmul.f32.gmra.mxu0 %v1261
        %v1469 = vpop.f32.mrf.mxu0
        %v1470 = vadd.f32 %v1069, %v1469
        %1471 = vmatmul.f32.gmra.mxu0 %v1264
        %v1472 = vpop.f32.mrf.mxu0
        %v1473 = vadd.f32 %v1072, %v1472
        %1474 = vmatmul.f32.gmra.mxu0 %v1267
        %v1475 = vpop.f32.mrf.mxu0
        %v1476 = vadd.f32 %v1075, %v1475
        %1477 = vmatmul.f32.gmra.mxu0 %v1270
        %v1478 = vpop.f32.mrf.mxu0
        %v1479 = vadd.f32 %v1078, %v1478
        %1480 = vmatmul.f32.gmra.mxu0 %v1273
        %v1481 = vpop.f32.mrf.mxu0
        %v1482 = vadd.f32 %v1081, %v1481
        %1483 = vmatmul.f32.gmra.mxu0 %v1276
        %v1484 = vpop.f32.mrf.mxu0
        %v1485 = vadd.f32 %v1084, %v1484
        %1486 = vmatmul.f32.gmra.mxu0 %v1279
        %v1487 = vpop.f32.mrf.mxu0
        %v1488 = vadd.f32 %v1087, %v1487
        %1489 = vmatmul.f32.gmra.mxu0 %v1282
        %v1490 = vpop.f32.mrf.mxu0
        %v1491 = vadd.f32 %v1090, %v1490
        %1492 = vmatmul.f32.gmra.mxu0 %v1285
        %v1493 = vpop.f32.mrf.mxu0
        %v1494 = vadd.f32 %v1093, %v1493
        %1495 = vmatmul.f32.gmra.mxu0 %v1288
        %v1496 = vpop.f32.mrf.mxu0
        %v1497 = vadd.f32 %v1096, %v1496
        %1498 = vmatmul.f32.gmra.mxu0 %v1291
        %v1499 = vpop.f32.mrf.mxu0
        %v1500 = vadd.f32 %v1099, %v1499
        %1501 = vmatmul.f32.gmra.mxu0 %v1294
        %v1502 = vpop.f32.mrf.mxu0
        %v1503 = vadd.f32 %v1102, %v1502
        %1504 = vmatmul.f32.gmra.mxu0 %v1297
        %v1505 = vpop.f32.mrf.mxu0
        %v1506 = vadd.f32 %v1105, %v1505
        %1507 = vmatmul.f32.gmra.mxu0 %v1300
        %v1508 = vpop.f32.mrf.mxu0
        %v1509 = vadd.f32 %v1108, %v1508
        %1510 = vmatmul.f32.gmra.mxu0 %v1303
        %v1511 = vpop.f32.mrf.mxu0
        %v1512 = vadd.f32 %v1111, %v1511
        %1513 = vmatmul.f32.gmra.mxu0 %v1306
        %v1514 = vpop.f32.mrf.mxu0
        %v1515 = vadd.f32 %v1114, %v1514
        %1516 = vmatmul.f32.gmra.mxu0 %v1309
        %v1517 = vpop.f32.mrf.mxu0
        %v1518 = vadd.f32 %v1117, %v1517
        %1519 = vmatmul.f32.gmra.mxu0 %v1312
        %v1520 = vpop.f32.mrf.mxu0
        %v1521 = vadd.f32 %v1120, %v1520
        %1522 = vmatmul.f32.gmra.mxu0 %v1315
        %v1523 = vpop.f32.mrf.mxu0
        %v1524 = vadd.f32 %v1123, %v1523
        %1525 = vmatmul.f32.gmra.mxu0 %v1318
        %v1526 = vpop.f32.mrf.mxu0
        %v1527 = vadd.f32 %v1126, %v1526
        %1528 = vmatmul.f32.gmra.mxu0 %v1321
        %v1529 = vpop.f32.mrf.mxu0
        %v1530 = vadd.f32 %v1129, %v1529
        %1531 = vmatmul.f32.gmra.mxu0 %v1324
        %v1532 = vpop.f32.mrf.mxu0
        %v1533 = vadd.f32 %v1132, %v1532
        %1534 = vmatmul.f32.gmra.mxu0 %v1327
        %v1535 = vpop.f32.mrf.mxu0
        %v1536 = vadd.f32 %v1135, %v1535
        %1537 = vmatmul.f32.gmra.mxu0 %v1330
        %v1538 = vpop.f32.mrf.mxu0
        %v1539 = vadd.f32 %v1138, %v1538
        %1540 = vmatmul.f32.gmra.mxu0 %v1333
        %v1541 = vpop.f32.mrf.mxu0
        %v1542 = vadd.f32 %v1141, %v1541
        %1543 = vmatmul.f32.gmra.mxu0 %v1336
        %v1544 = vpop.f32.mrf.mxu0
        %v1545 = vadd.f32 %v1144, %v1544
        %1546 = vmatmul.f32.gmra.mxu0 %v1339
        %v1547 = vpop.f32.mrf.mxu0
        %v1548 = vadd.f32 %v1147, %v1547
        %1549 = vmatmul.f32.gmra.mxu0 %v1342
        %v1550 = vpop.f32.mrf.mxu0
        %v1551 = vadd.f32 %v1150, %v1550
        %1552 = vmatmul.f32.gmra.mxu0 %v1345
        %v1553 = vpop.f32.mrf.mxu0
        %v1554 = vadd.f32 %v1153, %v1553
        %1555 = vmatmul.f32.gmra.mxu0 %v1348
        %v1556 = vpop.f32.mrf.mxu0
        %v1557 = vadd.f32 %v1156, %v1556
        %1558 = vmatmul.f32.gmra.mxu0 %v1351
        %v1559 = vpop.f32.mrf.mxu0
        %v1560 = vadd.f32 %v1159, %v1559
        %1561 = vmatmul.f32.gmra.mxu0 %v1354
        %v1562 = vpop.f32.mrf.mxu0
        %v1563 = vadd.f32 %v1162, %v1562
        %1564 = vmatmul.f32.gmra.mxu0 %v1357
        %v1565 = vpop.f32.mrf.mxu0
        %v1566 = vadd.f32 %v1165, %v1565
        %1567 = vmatmul.f32.gmra.mxu0 %v1360
        %v1568 = vpop.f32.mrf.mxu0
        %v1569 = vadd.f32 %v1168, %v1568
        %1570 = vmatmul.f32.gmra.mxu0 %v1363
        %v1571 = vpop.f32.mrf.mxu0
        %v1572 = vadd.f32 %v1171, %v1571
        %1573 = vmatmul.f32.gmra.mxu0 %v1366
        %v1574 = vpop.f32.mrf.mxu0
        %v1575 = vadd.f32 %v1174, %v1574
        %1576 = vdwg.mxu0
        %s1577 = scalar_lea.vmem %s603, 72 [#allocation3]
        %v1578 = vld [vmem:[%s1577] sm:$0xff]
        %v1579 = vld [vmem:[%s1577 + $0x8] sm:$0xff]
        %v1580 = vld [vmem:[%s1577 + $0x10] sm:$0xff]
        %v1581 = vld [vmem:[%s1577 + $0x18] sm:$0xff]
        %v1582 = vld [vmem:[%s1577 + $0x20] sm:$0xff]
        %v1583 = vld [vmem:[%s1577 + $0x28] sm:$0xff]
        %v1584 = vld [vmem:[%s1577 + $0x30] sm:$0xff]
        %v1585 = vld [vmem:[%s1577 + $0x38] sm:$0xff]
        %v1586 = vld [vmem:[%s1577 + $0x48] sm:$0xff]
        %v1587 = vld [vmem:[%s1577 + $0x50] sm:$0xff]
        %v1588 = vld [vmem:[%s1577 + $0x58] sm:$0xff]
        %v1589 = vld [vmem:[%s1577 + $0x60] sm:$0xff]
        %v1590 = vld [vmem:[%s1577 + $0x68] sm:$0xff]
        %v1591 = vld [vmem:[%s1577 + $0x70] sm:$0xff]
        %v1592 = vld [vmem:[%s1577 + $0x78] sm:$0xff]
        %v1593 = vld [vmem:[%s1577 + $0x80] sm:$0xff]
        %v1594 = vld [vmem:[%s1577 + $0x90] sm:$0xff]
        %v1595 = vld [vmem:[%s1577 + $0x98] sm:$0xff]
        %v1596 = vld [vmem:[%s1577 + $0xa0] sm:$0xff]
        %v1597 = vld [vmem:[%s1577 + $0xa8] sm:$0xff]
        %v1598 = vld [vmem:[%s1577 + $0xb0] sm:$0xff]
        %v1599 = vld [vmem:[%s1577 + $0xb8] sm:$0xff]
        %v1600 = vld [vmem:[%s1577 + $0xc0] sm:$0xff]
        %v1601 = vld [vmem:[%s1577 + $0xc8] sm:$0xff]
        %v1602 = vld [vmem:[%s1577 + $0xd8] sm:$0xff]
        %v1603 = vld [vmem:[%s1577 + $0xe0] sm:$0xff]
        %v1604 = vld [vmem:[%s1577 + $0xe8] sm:$0xff]
        %v1605 = vld [vmem:[%s1577 + $0xf0] sm:$0xff]
        %v1606 = vld [vmem:[%s1577 + $0xf8] sm:$0xff]
        %v1607 = vld [vmem:[%s1577 + $0x100] sm:$0xff]
        %v1608 = vld [vmem:[%s1577 + $0x108] sm:$0xff]
        %v1609 = vld [vmem:[%s1577 + $0x110] sm:$0xff]
        %v1610 = vld [vmem:[%s1577 + $0x120] sm:$0xff]
        %v1611 = vld [vmem:[%s1577 + $0x128] sm:$0xff]
        %v1612 = vld [vmem:[%s1577 + $0x130] sm:$0xff]
        %v1613 = vld [vmem:[%s1577 + $0x138] sm:$0xff]
        %v1614 = vld [vmem:[%s1577 + $0x140] sm:$0xff]
        %v1615 = vld [vmem:[%s1577 + $0x148] sm:$0xff]
        %v1616 = vld [vmem:[%s1577 + $0x150] sm:$0xff]
        %v1617 = vld [vmem:[%s1577 + $0x158] sm:$0xff]
        %v1618 = vld [vmem:[%s1577 + $0x168] sm:$0xff]
        %v1619 = vld [vmem:[%s1577 + $0x170] sm:$0xff]
        %v1620 = vld [vmem:[%s1577 + $0x178] sm:$0xff]
        %v1621 = vld [vmem:[%s1577 + $0x180] sm:$0xff]
        %v1622 = vld [vmem:[%s1577 + $0x188] sm:$0xff]
        %v1623 = vld [vmem:[%s1577 + $0x190] sm:$0xff]
        %v1624 = vld [vmem:[%s1577 + $0x198] sm:$0xff]
        %v1625 = vld [vmem:[%s1577 + $0x1a0] sm:$0xff]
        %v1626 = vld [vmem:[%s1577 + $0x1b0] sm:$0xff]
        %v1627 = vld [vmem:[%s1577 + $0x1b8] sm:$0xff]
        %v1628 = vld [vmem:[%s1577 + $0x1c0] sm:$0xff]
        %v1629 = vld [vmem:[%s1577 + $0x1c8] sm:$0xff]
        %v1630 = vld [vmem:[%s1577 + $0x1d0] sm:$0xff]
        %v1631 = vld [vmem:[%s1577 + $0x1d8] sm:$0xff]
        %v1632 = vld [vmem:[%s1577 + $0x1e0] sm:$0xff]
        %v1633 = vld [vmem:[%s1577 + $0x1e8] sm:$0xff]
        %v1634 = vld [vmem:[%s1577 + $0x1f8] sm:$0xff]
        %v1635 = vld [vmem:[%s1577 + $0x200] sm:$0xff]
        %v1636 = vld [vmem:[%s1577 + $0x208] sm:$0xff]
        %v1637 = vld [vmem:[%s1577 + $0x210] sm:$0xff]
        %v1638 = vld [vmem:[%s1577 + $0x218] sm:$0xff]
        %v1639 = vld [vmem:[%s1577 + $0x220] sm:$0xff]
        %v1640 = vld [vmem:[%s1577 + $0x228] sm:$0xff]
        %v1641 = vld [vmem:[%s1577 + $0x230] sm:$0xff]
        %s1642 = scalar_lea.vmem %s1, 96
        %v1643 = vld [vmem:[%s1642] sm:$0xff]
        %v1644 = vld [vmem:[%s1642 + $0x8] sm:$0xff]
        %v1645 = vld [vmem:[%s1642 + $0x10] sm:$0xff]
        %v1646 = vld [vmem:[%s1642 + $0x18] sm:$0xff]
        %v1647 = vld [vmem:[%s1642 + $0x20] sm:$0xff]
        %v1648 = vld [vmem:[%s1642 + $0x28] sm:$0xff]
        %v1650 = vsel %vm774, %v1578, 0
        %v1653 = vsel %vm774, %v1579, 0
        %v1656 = vsel %vm774, %v1580, 0
        %v1659 = vsel %vm774, %v1581, 0
        %v1662 = vsel %vm774, %v1582, 0
        %v1665 = vsel %vm774, %v1583, 0
        %v1668 = vsel %vm774, %v1584, 0
        %v1671 = vsel %vm774, %v1585, 0
        %v1674 = vsel %vm774, %v1586, 0
        %v1677 = vsel %vm774, %v1587, 0
        %v1680 = vsel %vm774, %v1588, 0
        %v1683 = vsel %vm774, %v1589, 0
        %v1686 = vsel %vm774, %v1590, 0
        %v1689 = vsel %vm774, %v1591, 0
        %v1692 = vsel %vm774, %v1592, 0
        %v1695 = vsel %vm774, %v1593, 0
        %v1698 = vsel %vm774, %v1594, 0
        %v1701 = vsel %vm774, %v1595, 0
        %v1704 = vsel %vm774, %v1596, 0
        %v1707 = vsel %vm774, %v1597, 0
        %v1710 = vsel %vm774, %v1598, 0
        %v1713 = vsel %vm774, %v1599, 0
        %v1716 = vsel %vm774, %v1600, 0
        %v1719 = vsel %vm774, %v1601, 0
        %v1722 = vsel %vm774, %v1602, 0
        %v1725 = vsel %vm774, %v1603, 0
        %v1728 = vsel %vm774, %v1604, 0
        %v1731 = vsel %vm774, %v1605, 0
        %v1734 = vsel %vm774, %v1606, 0
        %v1737 = vsel %vm774, %v1607, 0
        %v1740 = vsel %vm774, %v1608, 0
        %v1743 = vsel %vm774, %v1609, 0
        %v1746 = vsel %vm774, %v1610, 0
        %v1749 = vsel %vm774, %v1611, 0
        %v1752 = vsel %vm774, %v1612, 0
        %v1755 = vsel %vm774, %v1613, 0
        %v1758 = vsel %vm774, %v1614, 0
        %v1761 = vsel %vm774, %v1615, 0
        %v1764 = vsel %vm774, %v1616, 0
        %v1767 = vsel %vm774, %v1617, 0
        %v1770 = vsel %vm774, %v1618, 0
        %v1773 = vsel %vm774, %v1619, 0
        %v1776 = vsel %vm774, %v1620, 0
        %v1779 = vsel %vm774, %v1621, 0
        %v1782 = vsel %vm774, %v1622, 0
        %v1785 = vsel %vm774, %v1623, 0
        %v1788 = vsel %vm774, %v1624, 0
        %v1791 = vsel %vm774, %v1625, 0
        %v1794 = vsel %vm774, %v1626, 0
        %v1797 = vsel %vm774, %v1627, 0
        %v1800 = vsel %vm774, %v1628, 0
        %v1803 = vsel %vm774, %v1629, 0
        %v1806 = vsel %vm774, %v1630, 0
        %v1809 = vsel %vm774, %v1631, 0
        %v1812 = vsel %vm774, %v1632, 0
        %v1815 = vsel %vm774, %v1633, 0
        %v1818 = vsel %vm774, %v1634, 0
        %v1821 = vsel %vm774, %v1635, 0
        %v1824 = vsel %vm774, %v1636, 0
        %v1827 = vsel %vm774, %v1637, 0
        %v1830 = vsel %vm774, %v1638, 0
        %v1833 = vsel %vm774, %v1639, 0
        %v1836 = vsel %vm774, %v1640, 0
        %v1839 = vsel %vm774, %v1641, 0
        %1841 = vmatpush.msra.mxu0 0.0
        %1842 = vmatpush.msra.mxu0 0.0
        %1843 = vmatpush.msra.mxu0 0.0
        %1844 = vmatpush.msra.mxu0 0.0
        %1845 = vmatpush.msra.mxu0 0.0
        %1846 = vmatpush.msra.mxu0 0.0
        %1847 = vmatpush.msra.mxu0 0.0
        %1848 = vmatpush.msra.mxu0 0.0
        %1849 = vmatpush.msra.mxu0 0.0
        %1850 = vmatpush.msra.mxu0 0.0
        %1851 = vmatpush.msra.mxu0 %v1648
        %1852 = vmatpush.msra.mxu0 %v1647
        %1853 = vmatpush.msra.mxu0 %v1646
        %1854 = vmatpush.msra.mxu0 %v1645
        %1855 = vmatpush.msra.mxu0 %v1644
        %1856 = vmatpush.msra.mxu0 %v1643
        %1857 = vmatmul.f32.gmra.mxu0 %v1650
        %v1858 = vpop.f32.mrf.mxu0
        %v1859 = vadd.f32 0.0, %v1858
        %1860 = vmatmul.f32.gmra.mxu0 %v1653
        %v1861 = vpop.f32.mrf.mxu0
        %v1862 = vadd.f32 0.0, %v1861
        %1863 = vmatmul.f32.gmra.mxu0 %v1656
        %v1864 = vpop.f32.mrf.mxu0
        %v1865 = vadd.f32 0.0, %v1864
        %1866 = vmatmul.f32.gmra.mxu0 %v1659
        %v1867 = vpop.f32.mrf.mxu0
        %v1868 = vadd.f32 0.0, %v1867
        %1869 = vmatmul.f32.gmra.mxu0 %v1662
        %v1870 = vpop.f32.mrf.mxu0
        %v1871 = vadd.f32 0.0, %v1870
        %1872 = vmatmul.f32.gmra.mxu0 %v1665
        %v1873 = vpop.f32.mrf.mxu0
        %v1874 = vadd.f32 0.0, %v1873
        %1875 = vmatmul.f32.gmra.mxu0 %v1668
        %v1876 = vpop.f32.mrf.mxu0
        %v1877 = vadd.f32 0.0, %v1876
        %1878 = vmatmul.f32.gmra.mxu0 %v1671
        %v1879 = vpop.f32.mrf.mxu0
        %v1880 = vadd.f32 0.0, %v1879
        %1881 = vmatmul.f32.gmra.mxu0 %v1674
        %v1882 = vpop.f32.mrf.mxu0
        %v1883 = vadd.f32 0.0, %v1882
        %1884 = vmatmul.f32.gmra.mxu0 %v1677
        %v1885 = vpop.f32.mrf.mxu0
        %v1886 = vadd.f32 0.0, %v1885
        %1887 = vmatmul.f32.gmra.mxu0 %v1680
        %v1888 = vpop.f32.mrf.mxu0
        %v1889 = vadd.f32 0.0, %v1888
        %1890 = vmatmul.f32.gmra.mxu0 %v1683
        %v1891 = vpop.f32.mrf.mxu0
        %v1892 = vadd.f32 0.0, %v1891
        %1893 = vmatmul.f32.gmra.mxu0 %v1686
        %v1894 = vpop.f32.mrf.mxu0
        %v1895 = vadd.f32 0.0, %v1894
        %1896 = vmatmul.f32.gmra.mxu0 %v1689
        %v1897 = vpop.f32.mrf.mxu0
        %v1898 = vadd.f32 0.0, %v1897
        %1899 = vmatmul.f32.gmra.mxu0 %v1692
        %v1900 = vpop.f32.mrf.mxu0
        %v1901 = vadd.f32 0.0, %v1900
        %1902 = vmatmul.f32.gmra.mxu0 %v1695
        %v1903 = vpop.f32.mrf.mxu0
        %v1904 = vadd.f32 0.0, %v1903
        %1905 = vmatmul.f32.gmra.mxu0 %v1698
        %v1906 = vpop.f32.mrf.mxu0
        %v1907 = vadd.f32 0.0, %v1906
        %1908 = vmatmul.f32.gmra.mxu0 %v1701
        %v1909 = vpop.f32.mrf.mxu0
        %v1910 = vadd.f32 0.0, %v1909
        %1911 = vmatmul.f32.gmra.mxu0 %v1704
        %v1912 = vpop.f32.mrf.mxu0
        %v1913 = vadd.f32 0.0, %v1912
        %1914 = vmatmul.f32.gmra.mxu0 %v1707
        %v1915 = vpop.f32.mrf.mxu0
        %v1916 = vadd.f32 0.0, %v1915
        %1917 = vmatmul.f32.gmra.mxu0 %v1710
        %v1918 = vpop.f32.mrf.mxu0
        %v1919 = vadd.f32 0.0, %v1918
        %1920 = vmatmul.f32.gmra.mxu0 %v1713
        %v1921 = vpop.f32.mrf.mxu0
        %v1922 = vadd.f32 0.0, %v1921
        %1923 = vmatmul.f32.gmra.mxu0 %v1716
        %v1924 = vpop.f32.mrf.mxu0
        %v1925 = vadd.f32 0.0, %v1924
        %1926 = vmatmul.f32.gmra.mxu0 %v1719
        %v1927 = vpop.f32.mrf.mxu0
        %v1928 = vadd.f32 0.0, %v1927
        %1929 = vmatmul.f32.gmra.mxu0 %v1722
        %v1930 = vpop.f32.mrf.mxu0
        %v1931 = vadd.f32 0.0, %v1930
        %1932 = vmatmul.f32.gmra.mxu0 %v1725
        %v1933 = vpop.f32.mrf.mxu0
        %v1934 = vadd.f32 0.0, %v1933
        %1935 = vmatmul.f32.gmra.mxu0 %v1728
        %v1936 = vpop.f32.mrf.mxu0
        %v1937 = vadd.f32 0.0, %v1936
        %1938 = vmatmul.f32.gmra.mxu0 %v1731
        %v1939 = vpop.f32.mrf.mxu0
        %v1940 = vadd.f32 0.0, %v1939
        %1941 = vmatmul.f32.gmra.mxu0 %v1734
        %v1942 = vpop.f32.mrf.mxu0
        %v1943 = vadd.f32 0.0, %v1942
        %1944 = vmatmul.f32.gmra.mxu0 %v1737
        %v1945 = vpop.f32.mrf.mxu0
        %v1946 = vadd.f32 0.0, %v1945
        %1947 = vmatmul.f32.gmra.mxu0 %v1740
        %v1948 = vpop.f32.mrf.mxu0
        %v1949 = vadd.f32 0.0, %v1948
        %1950 = vmatmul.f32.gmra.mxu0 %v1743
        %v1951 = vpop.f32.mrf.mxu0
        %v1952 = vadd.f32 0.0, %v1951
        %1953 = vmatmul.f32.gmra.mxu0 %v1746
        %v1954 = vpop.f32.mrf.mxu0
        %v1955 = vadd.f32 0.0, %v1954
        %1956 = vmatmul.f32.gmra.mxu0 %v1749
        %v1957 = vpop.f32.mrf.mxu0
        %v1958 = vadd.f32 0.0, %v1957
        %1959 = vmatmul.f32.gmra.mxu0 %v1752
        %v1960 = vpop.f32.mrf.mxu0
        %v1961 = vadd.f32 0.0, %v1960
        %1962 = vmatmul.f32.gmra.mxu0 %v1755
        %v1963 = vpop.f32.mrf.mxu0
        %v1964 = vadd.f32 0.0, %v1963
        %1965 = vmatmul.f32.gmra.mxu0 %v1758
        %v1966 = vpop.f32.mrf.mxu0
        %v1967 = vadd.f32 0.0, %v1966
        %1968 = vmatmul.f32.gmra.mxu0 %v1761
        %v1969 = vpop.f32.mrf.mxu0
        %v1970 = vadd.f32 0.0, %v1969
        %1971 = vmatmul.f32.gmra.mxu0 %v1764
        %v1972 = vpop.f32.mrf.mxu0
        %v1973 = vadd.f32 0.0, %v1972
        %1974 = vmatmul.f32.gmra.mxu0 %v1767
        %v1975 = vpop.f32.mrf.mxu0
        %v1976 = vadd.f32 0.0, %v1975
        %1977 = vmatmul.f32.gmra.mxu0 %v1770
        %v1978 = vpop.f32.mrf.mxu0
        %v1979 = vadd.f32 0.0, %v1978
        %1980 = vmatmul.f32.gmra.mxu0 %v1773
        %v1981 = vpop.f32.mrf.mxu0
        %v1982 = vadd.f32 0.0, %v1981
        %1983 = vmatmul.f32.gmra.mxu0 %v1776
        %v1984 = vpop.f32.mrf.mxu0
        %v1985 = vadd.f32 0.0, %v1984
        %1986 = vmatmul.f32.gmra.mxu0 %v1779
        %v1987 = vpop.f32.mrf.mxu0
        %v1988 = vadd.f32 0.0, %v1987
        %1989 = vmatmul.f32.gmra.mxu0 %v1782
        %v1990 = vpop.f32.mrf.mxu0
        %v1991 = vadd.f32 0.0, %v1990
        %1992 = vmatmul.f32.gmra.mxu0 %v1785
        %v1993 = vpop.f32.mrf.mxu0
        %v1994 = vadd.f32 0.0, %v1993
        %1995 = vmatmul.f32.gmra.mxu0 %v1788
        %v1996 = vpop.f32.mrf.mxu0
        %v1997 = vadd.f32 0.0, %v1996
        %1998 = vmatmul.f32.gmra.mxu0 %v1791
        %v1999 = vpop.f32.mrf.mxu0
        %v2000 = vadd.f32 0.0, %v1999
        %2001 = vmatmul.f32.gmra.mxu0 %v1794
        %v2002 = vpop.f32.mrf.mxu0
        %v2003 = vadd.f32 0.0, %v2002
        %2004 = vmatmul.f32.gmra.mxu0 %v1797
        %v2005 = vpop.f32.mrf.mxu0
        %v2006 = vadd.f32 0.0, %v2005
        %2007 = vmatmul.f32.gmra.mxu0 %v1800
        %v2008 = vpop.f32.mrf.mxu0
        %v2009 = vadd.f32 0.0, %v2008
        %2010 = vmatmul.f32.gmra.mxu0 %v1803
        %v2011 = vpop.f32.mrf.mxu0
        %v2012 = vadd.f32 0.0, %v2011
        %2013 = vmatmul.f32.gmra.mxu0 %v1806
        %v2014 = vpop.f32.mrf.mxu0
        %v2015 = vadd.f32 0.0, %v2014
        %2016 = vmatmul.f32.gmra.mxu0 %v1809
        %v2017 = vpop.f32.mrf.mxu0
        %v2018 = vadd.f32 0.0, %v2017
        %2019 = vmatmul.f32.gmra.mxu0 %v1812
        %v2020 = vpop.f32.mrf.mxu0
        %v2021 = vadd.f32 0.0, %v2020
        %2022 = vmatmul.f32.gmra.mxu0 %v1815
        %v2023 = vpop.f32.mrf.mxu0
        %v2024 = vadd.f32 0.0, %v2023
        %2025 = vmatmul.f32.gmra.mxu0 %v1818
        %v2026 = vpop.f32.mrf.mxu0
        %v2027 = vadd.f32 0.0, %v2026
        %2028 = vmatmul.f32.gmra.mxu0 %v1821
        %v2029 = vpop.f32.mrf.mxu0
        %v2030 = vadd.f32 0.0, %v2029
        %2031 = vmatmul.f32.gmra.mxu0 %v1824
        %v2032 = vpop.f32.mrf.mxu0
        %v2033 = vadd.f32 0.0, %v2032
        %2034 = vmatmul.f32.gmra.mxu0 %v1827
        %v2035 = vpop.f32.mrf.mxu0
        %v2036 = vadd.f32 0.0, %v2035
        %2037 = vmatmul.f32.gmra.mxu0 %v1830
        %v2038 = vpop.f32.mrf.mxu0
        %v2039 = vadd.f32 0.0, %v2038
        %2040 = vmatmul.f32.gmra.mxu0 %v1833
        %v2041 = vpop.f32.mrf.mxu0
        %v2042 = vadd.f32 0.0, %v2041
        %2043 = vmatmul.f32.gmra.mxu0 %v1836
        %v2044 = vpop.f32.mrf.mxu0
        %v2045 = vadd.f32 0.0, %v2044
        %2046 = vmatmul.f32.gmra.mxu0 %v1839
        %v2047 = vpop.f32.mrf.mxu0
        %v2048 = vadd.f32 0.0, %v2047
        %2049 = vdwg.mxu0
        %v2050 = vadd.f32 %v1386, %v1859
        %v2051 = vadd.f32 %v1389, %v1862
        %v2052 = vadd.f32 %v1392, %v1865
        %v2053 = vadd.f32 %v1395, %v1868
        %v2054 = vadd.f32 %v1398, %v1871
        %v2055 = vadd.f32 %v1401, %v1874
        %v2056 = vadd.f32 %v1404, %v1877
        %v2057 = vadd.f32 %v1407, %v1880
        %v2058 = vadd.f32 %v1410, %v1883
        %v2059 = vadd.f32 %v1413, %v1886
        %v2060 = vadd.f32 %v1416, %v1889
        %v2061 = vadd.f32 %v1419, %v1892
        %v2062 = vadd.f32 %v1422, %v1895
        %v2063 = vadd.f32 %v1425, %v1898
        %v2064 = vadd.f32 %v1428, %v1901
        %v2065 = vadd.f32 %v1431, %v1904
        %v2066 = vadd.f32 %v1434, %v1907
        %v2067 = vadd.f32 %v1437, %v1910
        %v2068 = vadd.f32 %v1440, %v1913
        %v2069 = vadd.f32 %v1443, %v1916
        %v2070 = vadd.f32 %v1446, %v1919
        %v2071 = vadd.f32 %v1449, %v1922
        %v2072 = vadd.f32 %v1452, %v1925
        %v2073 = vadd.f32 %v1455, %v1928
        %v2074 = vadd.f32 %v1458, %v1931
        %v2075 = vadd.f32 %v1461, %v1934
        %v2076 = vadd.f32 %v1464, %v1937
        %v2077 = vadd.f32 %v1467, %v1940
        %v2078 = vadd.f32 %v1470, %v1943
        %v2079 = vadd.f32 %v1473, %v1946
        %v2080 = vadd.f32 %v1476, %v1949
        %v2081 = vadd.f32 %v1479, %v1952
        %v2082 = vadd.f32 %v1482, %v1955
        %v2083 = vadd.f32 %v1485, %v1958
        %v2084 = vadd.f32 %v1488, %v1961
        %v2085 = vadd.f32 %v1491, %v1964
        %v2086 = vadd.f32 %v1494, %v1967
        %v2087 = vadd.f32 %v1497, %v1970
        %v2088 = vadd.f32 %v1500, %v1973
        %v2089 = vadd.f32 %v1503, %v1976
        %v2090 = vadd.f32 %v1506, %v1979
        %v2091 = vadd.f32 %v1509, %v1982
        %v2092 = vadd.f32 %v1512, %v1985
        %v2093 = vadd.f32 %v1515, %v1988
        %v2094 = vadd.f32 %v1518, %v1991
        %v2095 = vadd.f32 %v1521, %v1994
        %v2096 = vadd.f32 %v1524, %v1997
        %v2097 = vadd.f32 %v1527, %v2000
        %v2098 = vadd.f32 %v1530, %v2003
        %v2099 = vadd.f32 %v1533, %v2006
        %v2100 = vadd.f32 %v1536, %v2009
        %v2101 = vadd.f32 %v1539, %v2012
        %v2102 = vadd.f32 %v1542, %v2015
        %v2103 = vadd.f32 %v1545, %v2018
        %v2104 = vadd.f32 %v1548, %v2021
        %v2105 = vadd.f32 %v1551, %v2024
        %v2106 = vadd.f32 %v1554, %v2027
        %v2107 = vadd.f32 %v1557, %v2030
        %v2108 = vadd.f32 %v1560, %v2033
        %v2109 = vadd.f32 %v1563, %v2036
        %v2110 = vadd.f32 %v1566, %v2039
        %v2111 = vadd.f32 %v1569, %v2042
        %v2112 = vadd.f32 %v1572, %v2045
        %v2113 = vadd.f32 %v1575, %v2048
        %s2114 = scalar_lea.vmem %s603, 80 [#allocation3]
        %v2115 = vld [vmem:[%s2114] sm:$0xff]
        %v2116 = vld [vmem:[%s2114 + $0x8] sm:$0xff]
        %v2117 = vld [vmem:[%s2114 + $0x10] sm:$0xff]
        %v2118 = vld [vmem:[%s2114 + $0x18] sm:$0xff]
        %v2119 = vld [vmem:[%s2114 + $0x20] sm:$0xff]
        %v2120 = vld [vmem:[%s2114 + $0x28] sm:$0xff]
        %v2121 = vld [vmem:[%s2114 + $0x30] sm:$0xff]
        %v2122 = vld [vmem:[%s2114 + $0x38] sm:$0xff]
        %v2123 = vld [vmem:[%s2114 + $0x48] sm:$0xff]
        %v2124 = vld [vmem:[%s2114 + $0x50] sm:$0xff]
        %v2125 = vld [vmem:[%s2114 + $0x58] sm:$0xff]
        %v2126 = vld [vmem:[%s2114 + $0x60] sm:$0xff]
        %v2127 = vld [vmem:[%s2114 + $0x68] sm:$0xff]
        %v2128 = vld [vmem:[%s2114 + $0x70] sm:$0xff]
        %v2129 = vld [vmem:[%s2114 + $0x78] sm:$0xff]
        %v2130 = vld [vmem:[%s2114 + $0x80] sm:$0xff]
        %v2131 = vld [vmem:[%s2114 + $0x90] sm:$0xff]
        %v2132 = vld [vmem:[%s2114 + $0x98] sm:$0xff]
        %v2133 = vld [vmem:[%s2114 + $0xa0] sm:$0xff]
        %v2134 = vld [vmem:[%s2114 + $0xa8] sm:$0xff]
        %v2135 = vld [vmem:[%s2114 + $0xb0] sm:$0xff]
        %v2136 = vld [vmem:[%s2114 + $0xb8] sm:$0xff]
        %v2137 = vld [vmem:[%s2114 + $0xc0] sm:$0xff]
        %v2138 = vld [vmem:[%s2114 + $0xc8] sm:$0xff]
        %v2139 = vld [vmem:[%s2114 + $0xd8] sm:$0xff]
        %v2140 = vld [vmem:[%s2114 + $0xe0] sm:$0xff]
        %v2141 = vld [vmem:[%s2114 + $0xe8] sm:$0xff]
        %v2142 = vld [vmem:[%s2114 + $0xf0] sm:$0xff]
        %v2143 = vld [vmem:[%s2114 + $0xf8] sm:$0xff]
        %v2144 = vld [vmem:[%s2114 + $0x100] sm:$0xff]
        %v2145 = vld [vmem:[%s2114 + $0x108] sm:$0xff]
        %v2146 = vld [vmem:[%s2114 + $0x110] sm:$0xff]
        %v2147 = vld [vmem:[%s2114 + $0x120] sm:$0xff]
        %v2148 = vld [vmem:[%s2114 + $0x128] sm:$0xff]
        %v2149 = vld [vmem:[%s2114 + $0x130] sm:$0xff]
        %v2150 = vld [vmem:[%s2114 + $0x138] sm:$0xff]
        %v2151 = vld [vmem:[%s2114 + $0x140] sm:$0xff]
        %v2152 = vld [vmem:[%s2114 + $0x148] sm:$0xff]
        %v2153 = vld [vmem:[%s2114 + $0x150] sm:$0xff]
        %v2154 = vld [vmem:[%s2114 + $0x158] sm:$0xff]
        %v2155 = vld [vmem:[%s2114 + $0x168] sm:$0xff]
        %v2156 = vld [vmem:[%s2114 + $0x170] sm:$0xff]
        %v2157 = vld [vmem:[%s2114 + $0x178] sm:$0xff]
        %v2158 = vld [vmem:[%s2114 + $0x180] sm:$0xff]
        %v2159 = vld [vmem:[%s2114 + $0x188] sm:$0xff]
        %v2160 = vld [vmem:[%s2114 + $0x190] sm:$0xff]
        %v2161 = vld [vmem:[%s2114 + $0x198] sm:$0xff]
        %v2162 = vld [vmem:[%s2114 + $0x1a0] sm:$0xff]
        %v2163 = vld [vmem:[%s2114 + $0x1b0] sm:$0xff]
        %v2164 = vld [vmem:[%s2114 + $0x1b8] sm:$0xff]
        %v2165 = vld [vmem:[%s2114 + $0x1c0] sm:$0xff]
        %v2166 = vld [vmem:[%s2114 + $0x1c8] sm:$0xff]
        %v2167 = vld [vmem:[%s2114 + $0x1d0] sm:$0xff]
        %v2168 = vld [vmem:[%s2114 + $0x1d8] sm:$0xff]
        %v2169 = vld [vmem:[%s2114 + $0x1e0] sm:$0xff]
        %v2170 = vld [vmem:[%s2114 + $0x1e8] sm:$0xff]
        %v2171 = vld [vmem:[%s2114 + $0x1f8] sm:$0xff]
        %v2172 = vld [vmem:[%s2114 + $0x200] sm:$0xff]
        %v2173 = vld [vmem:[%s2114 + $0x208] sm:$0xff]
        %v2174 = vld [vmem:[%s2114 + $0x210] sm:$0xff]
        %v2175 = vld [vmem:[%s2114 + $0x218] sm:$0xff]
        %v2176 = vld [vmem:[%s2114 + $0x220] sm:$0xff]
        %v2177 = vld [vmem:[%s2114 + $0x228] sm:$0xff]
        %v2178 = vld [vmem:[%s2114 + $0x230] sm:$0xff]
        %s2179 = scalar_lea.vmem %s1, 144
        %v2180 = vld [vmem:[%s2179] sm:$0xff]
        %v2181 = vld [vmem:[%s2179 + $0x8] sm:$0xff]
        %v2182 = vld [vmem:[%s2179 + $0x10] sm:$0xff]
        %v2183 = vld [vmem:[%s2179 + $0x18] sm:$0xff]
        %v2184 = vld [vmem:[%s2179 + $0x20] sm:$0xff]
        %v2185 = vld [vmem:[%s2179 + $0x28] sm:$0xff]
        %v2187 = vsel %vm774, %v2115, 0
        %v2190 = vsel %vm774, %v2116, 0
        %v2193 = vsel %vm774, %v2117, 0
        %v2196 = vsel %vm774, %v2118, 0
        %v2199 = vsel %vm774, %v2119, 0
        %v2202 = vsel %vm774, %v2120, 0
        %v2205 = vsel %vm774, %v2121, 0
        %v2208 = vsel %vm774, %v2122, 0
        %v2211 = vsel %vm774, %v2123, 0
        %v2214 = vsel %vm774, %v2124, 0
        %v2217 = vsel %vm774, %v2125, 0
        %v2220 = vsel %vm774, %v2126, 0
        %v2223 = vsel %vm774, %v2127, 0
        %v2226 = vsel %vm774, %v2128, 0
        %v2229 = vsel %vm774, %v2129, 0
        %v2232 = vsel %vm774, %v2130, 0
        %v2235 = vsel %vm774, %v2131, 0
        %v2238 = vsel %vm774, %v2132, 0
        %v2241 = vsel %vm774, %v2133, 0
        %v2244 = vsel %vm774, %v2134, 0
        %v2247 = vsel %vm774, %v2135, 0
        %v2250 = vsel %vm774, %v2136, 0
        %v2253 = vsel %vm774, %v2137, 0
        %v2256 = vsel %vm774, %v2138, 0
        %v2259 = vsel %vm774, %v2139, 0
        %v2262 = vsel %vm774, %v2140, 0
        %v2265 = vsel %vm774, %v2141, 0
        %v2268 = vsel %vm774, %v2142, 0
        %v2271 = vsel %vm774, %v2143, 0
        %v2274 = vsel %vm774, %v2144, 0
        %v2277 = vsel %vm774, %v2145, 0
        %v2280 = vsel %vm774, %v2146, 0
        %v2283 = vsel %vm774, %v2147, 0
        %v2286 = vsel %vm774, %v2148, 0
        %v2289 = vsel %vm774, %v2149, 0
        %v2292 = vsel %vm774, %v2150, 0
        %v2295 = vsel %vm774, %v2151, 0
        %v2298 = vsel %vm774, %v2152, 0
        %v2301 = vsel %vm774, %v2153, 0
        %v2304 = vsel %vm774, %v2154, 0
        %v2307 = vsel %vm774, %v2155, 0
        %v2310 = vsel %vm774, %v2156, 0
        %v2313 = vsel %vm774, %v2157, 0
        %v2316 = vsel %vm774, %v2158, 0
        %v2319 = vsel %vm774, %v2159, 0
        %v2322 = vsel %vm774, %v2160, 0
        %v2325 = vsel %vm774, %v2161, 0
        %v2328 = vsel %vm774, %v2162, 0
        %v2331 = vsel %vm774, %v2163, 0
        %v2334 = vsel %vm774, %v2164, 0
        %v2337 = vsel %vm774, %v2165, 0
        %v2340 = vsel %vm774, %v2166, 0
        %v2343 = vsel %vm774, %v2167, 0
        %v2346 = vsel %vm774, %v2168, 0
        %v2349 = vsel %vm774, %v2169, 0
        %v2352 = vsel %vm774, %v2170, 0
        %v2355 = vsel %vm774, %v2171, 0
        %v2358 = vsel %vm774, %v2172, 0
        %v2361 = vsel %vm774, %v2173, 0
        %v2364 = vsel %vm774, %v2174, 0
        %v2367 = vsel %vm774, %v2175, 0
        %v2370 = vsel %vm774, %v2176, 0
        %v2373 = vsel %vm774, %v2177, 0
        %v2376 = vsel %vm774, %v2178, 0
        %2378 = vmatpush.msra.mxu0 0.0
        %2379 = vmatpush.msra.mxu0 0.0
        %2380 = vmatpush.msra.mxu0 0.0
        %2381 = vmatpush.msra.mxu0 0.0
        %2382 = vmatpush.msra.mxu0 0.0
        %2383 = vmatpush.msra.mxu0 0.0
        %2384 = vmatpush.msra.mxu0 0.0
        %2385 = vmatpush.msra.mxu0 0.0
        %2386 = vmatpush.msra.mxu0 0.0
        %2387 = vmatpush.msra.mxu0 0.0
        %2388 = vmatpush.msra.mxu0 %v2185
        %2389 = vmatpush.msra.mxu0 %v2184
        %2390 = vmatpush.msra.mxu0 %v2183
        %2391 = vmatpush.msra.mxu0 %v2182
        %2392 = vmatpush.msra.mxu0 %v2181
        %2393 = vmatpush.msra.mxu0 %v2180
        %2394 = vmatmul.f32.gmra.mxu0 %v2187
        %v2395 = vpop.f32.mrf.mxu0
        %v2396 = vadd.f32 0.0, %v2395
        %2397 = vmatmul.f32.gmra.mxu0 %v2190
        %v2398 = vpop.f32.mrf.mxu0
        %v2399 = vadd.f32 0.0, %v2398
        %2400 = vmatmul.f32.gmra.mxu0 %v2193
        %v2401 = vpop.f32.mrf.mxu0
        %v2402 = vadd.f32 0.0, %v2401
        %2403 = vmatmul.f32.gmra.mxu0 %v2196
        %v2404 = vpop.f32.mrf.mxu0
        %v2405 = vadd.f32 0.0, %v2404
        %2406 = vmatmul.f32.gmra.mxu0 %v2199
        %v2407 = vpop.f32.mrf.mxu0
        %v2408 = vadd.f32 0.0, %v2407
        %2409 = vmatmul.f32.gmra.mxu0 %v2202
        %v2410 = vpop.f32.mrf.mxu0
        %v2411 = vadd.f32 0.0, %v2410
        %2412 = vmatmul.f32.gmra.mxu0 %v2205
        %v2413 = vpop.f32.mrf.mxu0
        %v2414 = vadd.f32 0.0, %v2413
        %2415 = vmatmul.f32.gmra.mxu0 %v2208
        %v2416 = vpop.f32.mrf.mxu0
        %v2417 = vadd.f32 0.0, %v2416
        %2418 = vmatmul.f32.gmra.mxu0 %v2211
        %v2419 = vpop.f32.mrf.mxu0
        %v2420 = vadd.f32 0.0, %v2419
        %2421 = vmatmul.f32.gmra.mxu0 %v2214
        %v2422 = vpop.f32.mrf.mxu0
        %v2423 = vadd.f32 0.0, %v2422
        %2424 = vmatmul.f32.gmra.mxu0 %v2217
        %v2425 = vpop.f32.mrf.mxu0
        %v2426 = vadd.f32 0.0, %v2425
        %2427 = vmatmul.f32.gmra.mxu0 %v2220
        %v2428 = vpop.f32.mrf.mxu0
        %v2429 = vadd.f32 0.0, %v2428
        %2430 = vmatmul.f32.gmra.mxu0 %v2223
        %v2431 = vpop.f32.mrf.mxu0
        %v2432 = vadd.f32 0.0, %v2431
        %2433 = vmatmul.f32.gmra.mxu0 %v2226
        %v2434 = vpop.f32.mrf.mxu0
        %v2435 = vadd.f32 0.0, %v2434
        %2436 = vmatmul.f32.gmra.mxu0 %v2229
        %v2437 = vpop.f32.mrf.mxu0
        %v2438 = vadd.f32 0.0, %v2437
        %2439 = vmatmul.f32.gmra.mxu0 %v2232
        %v2440 = vpop.f32.mrf.mxu0
        %v2441 = vadd.f32 0.0, %v2440
        %2442 = vmatmul.f32.gmra.mxu0 %v2235
        %v2443 = vpop.f32.mrf.mxu0
        %v2444 = vadd.f32 0.0, %v2443
        %2445 = vmatmul.f32.gmra.mxu0 %v2238
        %v2446 = vpop.f32.mrf.mxu0
        %v2447 = vadd.f32 0.0, %v2446
        %2448 = vmatmul.f32.gmra.mxu0 %v2241
        %v2449 = vpop.f32.mrf.mxu0
        %v2450 = vadd.f32 0.0, %v2449
        %2451 = vmatmul.f32.gmra.mxu0 %v2244
        %v2452 = vpop.f32.mrf.mxu0
        %v2453 = vadd.f32 0.0, %v2452
        %2454 = vmatmul.f32.gmra.mxu0 %v2247
        %v2455 = vpop.f32.mrf.mxu0
        %v2456 = vadd.f32 0.0, %v2455
        %2457 = vmatmul.f32.gmra.mxu0 %v2250
        %v2458 = vpop.f32.mrf.mxu0
        %v2459 = vadd.f32 0.0, %v2458
        %2460 = vmatmul.f32.gmra.mxu0 %v2253
        %v2461 = vpop.f32.mrf.mxu0
        %v2462 = vadd.f32 0.0, %v2461
        %2463 = vmatmul.f32.gmra.mxu0 %v2256
        %v2464 = vpop.f32.mrf.mxu0
        %v2465 = vadd.f32 0.0, %v2464
        %2466 = vmatmul.f32.gmra.mxu0 %v2259
        %v2467 = vpop.f32.mrf.mxu0
        %v2468 = vadd.f32 0.0, %v2467
        %2469 = vmatmul.f32.gmra.mxu0 %v2262
        %v2470 = vpop.f32.mrf.mxu0
        %v2471 = vadd.f32 0.0, %v2470
        %2472 = vmatmul.f32.gmra.mxu0 %v2265
        %v2473 = vpop.f32.mrf.mxu0
        %v2474 = vadd.f32 0.0, %v2473
        %2475 = vmatmul.f32.gmra.mxu0 %v2268
        %v2476 = vpop.f32.mrf.mxu0
        %v2477 = vadd.f32 0.0, %v2476
        %2478 = vmatmul.f32.gmra.mxu0 %v2271
        %v2479 = vpop.f32.mrf.mxu0
        %v2480 = vadd.f32 0.0, %v2479
        %2481 = vmatmul.f32.gmra.mxu0 %v2274
        %v2482 = vpop.f32.mrf.mxu0
        %v2483 = vadd.f32 0.0, %v2482
        %2484 = vmatmul.f32.gmra.mxu0 %v2277
        %v2485 = vpop.f32.mrf.mxu0
        %v2486 = vadd.f32 0.0, %v2485
        %2487 = vmatmul.f32.gmra.mxu0 %v2280
        %v2488 = vpop.f32.mrf.mxu0
        %v2489 = vadd.f32 0.0, %v2488
        %2490 = vmatmul.f32.gmra.mxu0 %v2283
        %v2491 = vpop.f32.mrf.mxu0
        %v2492 = vadd.f32 0.0, %v2491
        %2493 = vmatmul.f32.gmra.mxu0 %v2286
        %v2494 = vpop.f32.mrf.mxu0
        %v2495 = vadd.f32 0.0, %v2494
        %2496 = vmatmul.f32.gmra.mxu0 %v2289
        %v2497 = vpop.f32.mrf.mxu0
        %v2498 = vadd.f32 0.0, %v2497
        %2499 = vmatmul.f32.gmra.mxu0 %v2292
        %v2500 = vpop.f32.mrf.mxu0
        %v2501 = vadd.f32 0.0, %v2500
        %2502 = vmatmul.f32.gmra.mxu0 %v2295
        %v2503 = vpop.f32.mrf.mxu0
        %v2504 = vadd.f32 0.0, %v2503
        %2505 = vmatmul.f32.gmra.mxu0 %v2298
        %v2506 = vpop.f32.mrf.mxu0
        %v2507 = vadd.f32 0.0, %v2506
        %2508 = vmatmul.f32.gmra.mxu0 %v2301
        %v2509 = vpop.f32.mrf.mxu0
        %v2510 = vadd.f32 0.0, %v2509
        %2511 = vmatmul.f32.gmra.mxu0 %v2304
        %v2512 = vpop.f32.mrf.mxu0
        %v2513 = vadd.f32 0.0, %v2512
        %2514 = vmatmul.f32.gmra.mxu0 %v2307
        %v2515 = vpop.f32.mrf.mxu0
        %v2516 = vadd.f32 0.0, %v2515
        %2517 = vmatmul.f32.gmra.mxu0 %v2310
        %v2518 = vpop.f32.mrf.mxu0
        %v2519 = vadd.f32 0.0, %v2518
        %2520 = vmatmul.f32.gmra.mxu0 %v2313
        %v2521 = vpop.f32.mrf.mxu0
        %v2522 = vadd.f32 0.0, %v2521
        %2523 = vmatmul.f32.gmra.mxu0 %v2316
        %v2524 = vpop.f32.mrf.mxu0
        %v2525 = vadd.f32 0.0, %v2524
        %2526 = vmatmul.f32.gmra.mxu0 %v2319
        %v2527 = vpop.f32.mrf.mxu0
        %v2528 = vadd.f32 0.0, %v2527
        %2529 = vmatmul.f32.gmra.mxu0 %v2322
        %v2530 = vpop.f32.mrf.mxu0
        %v2531 = vadd.f32 0.0, %v2530
        %2532 = vmatmul.f32.gmra.mxu0 %v2325
        %v2533 = vpop.f32.mrf.mxu0
        %v2534 = vadd.f32 0.0, %v2533
        %2535 = vmatmul.f32.gmra.mxu0 %v2328
        %v2536 = vpop.f32.mrf.mxu0
        %v2537 = vadd.f32 0.0, %v2536
        %2538 = vmatmul.f32.gmra.mxu0 %v2331
        %v2539 = vpop.f32.mrf.mxu0
        %v2540 = vadd.f32 0.0, %v2539
        %2541 = vmatmul.f32.gmra.mxu0 %v2334
        %v2542 = vpop.f32.mrf.mxu0
        %v2543 = vadd.f32 0.0, %v2542
        %2544 = vmatmul.f32.gmra.mxu0 %v2337
        %v2545 = vpop.f32.mrf.mxu0
        %v2546 = vadd.f32 0.0, %v2545
        %2547 = vmatmul.f32.gmra.mxu0 %v2340
        %v2548 = vpop.f32.mrf.mxu0
        %v2549 = vadd.f32 0.0, %v2548
        %2550 = vmatmul.f32.gmra.mxu0 %v2343
        %v2551 = vpop.f32.mrf.mxu0
        %v2552 = vadd.f32 0.0, %v2551
        %2553 = vmatmul.f32.gmra.mxu0 %v2346
        %v2554 = vpop.f32.mrf.mxu0
        %v2555 = vadd.f32 0.0, %v2554
        %2556 = vmatmul.f32.gmra.mxu0 %v2349
        %v2557 = vpop.f32.mrf.mxu0
        %v2558 = vadd.f32 0.0, %v2557
        %2559 = vmatmul.f32.gmra.mxu0 %v2352
        %v2560 = vpop.f32.mrf.mxu0
        %v2561 = vadd.f32 0.0, %v2560
        %2562 = vmatmul.f32.gmra.mxu0 %v2355
        %v2563 = vpop.f32.mrf.mxu0
        %v2564 = vadd.f32 0.0, %v2563
        %2565 = vmatmul.f32.gmra.mxu0 %v2358
        %v2566 = vpop.f32.mrf.mxu0
        %v2567 = vadd.f32 0.0, %v2566
        %2568 = vmatmul.f32.gmra.mxu0 %v2361
        %v2569 = vpop.f32.mrf.mxu0
        %v2570 = vadd.f32 0.0, %v2569
        %2571 = vmatmul.f32.gmra.mxu0 %v2364
        %v2572 = vpop.f32.mrf.mxu0
        %v2573 = vadd.f32 0.0, %v2572
        %2574 = vmatmul.f32.gmra.mxu0 %v2367
        %v2575 = vpop.f32.mrf.mxu0
        %v2576 = vadd.f32 0.0, %v2575
        %2577 = vmatmul.f32.gmra.mxu0 %v2370
        %v2578 = vpop.f32.mrf.mxu0
        %v2579 = vadd.f32 0.0, %v2578
        %2580 = vmatmul.f32.gmra.mxu0 %v2373
        %v2581 = vpop.f32.mrf.mxu0
        %v2582 = vadd.f32 0.0, %v2581
        %2583 = vmatmul.f32.gmra.mxu0 %v2376
        %v2584 = vpop.f32.mrf.mxu0
        %v2585 = vadd.f32 0.0, %v2584
        %2586 = vdwg.mxu0
        %v2587 = vadd.f32 %v2050, %v2396
        %v2588 = vadd.f32 %v2051, %v2399
        %v2589 = vadd.f32 %v2052, %v2402
        %v2590 = vadd.f32 %v2053, %v2405
        %v2591 = vadd.f32 %v2054, %v2408
        %v2592 = vadd.f32 %v2055, %v2411
        %v2593 = vadd.f32 %v2056, %v2414
        %v2594 = vadd.f32 %v2057, %v2417
        %v2595 = vadd.f32 %v2058, %v2420
        %v2596 = vadd.f32 %v2059, %v2423
        %v2597 = vadd.f32 %v2060, %v2426
        %v2598 = vadd.f32 %v2061, %v2429
        %v2599 = vadd.f32 %v2062, %v2432
        %v2600 = vadd.f32 %v2063, %v2435
        %v2601 = vadd.f32 %v2064, %v2438
        %v2602 = vadd.f32 %v2065, %v2441
        %v2603 = vadd.f32 %v2066, %v2444
        %v2604 = vadd.f32 %v2067, %v2447
        %v2605 = vadd.f32 %v2068, %v2450
        %v2606 = vadd.f32 %v2069, %v2453
        %v2607 = vadd.f32 %v2070, %v2456
        %v2608 = vadd.f32 %v2071, %v2459
        %v2609 = vadd.f32 %v2072, %v2462
        %v2610 = vadd.f32 %v2073, %v2465
        %v2611 = vadd.f32 %v2074, %v2468
        %v2612 = vadd.f32 %v2075, %v2471
        %v2613 = vadd.f32 %v2076, %v2474
        %v2614 = vadd.f32 %v2077, %v2477
        %v2615 = vadd.f32 %v2078, %v2480
        %v2616 = vadd.f32 %v2079, %v2483
        %v2617 = vadd.f32 %v2080, %v2486
        %v2618 = vadd.f32 %v2081, %v2489
        %v2619 = vadd.f32 %v2082, %v2492
        %v2620 = vadd.f32 %v2083, %v2495
        %v2621 = vadd.f32 %v2084, %v2498
        %v2622 = vadd.f32 %v2085, %v2501
        %v2623 = vadd.f32 %v2086, %v2504
        %v2624 = vadd.f32 %v2087, %v2507
        %v2625 = vadd.f32 %v2088, %v2510
        %v2626 = vadd.f32 %v2089, %v2513
        %v2627 = vadd.f32 %v2090, %v2516
        %v2628 = vadd.f32 %v2091, %v2519
        %v2629 = vadd.f32 %v2092, %v2522
        %v2630 = vadd.f32 %v2093, %v2525
        %v2631 = vadd.f32 %v2094, %v2528
        %v2632 = vadd.f32 %v2095, %v2531
        %v2633 = vadd.f32 %v2096, %v2534
        %v2634 = vadd.f32 %v2097, %v2537
        %v2635 = vadd.f32 %v2098, %v2540
        %v2636 = vadd.f32 %v2099, %v2543
        %v2637 = vadd.f32 %v2100, %v2546
        %v2638 = vadd.f32 %v2101, %v2549
        %v2639 = vadd.f32 %v2102, %v2552
        %v2640 = vadd.f32 %v2103, %v2555
        %v2641 = vadd.f32 %v2104, %v2558
        %v2642 = vadd.f32 %v2105, %v2561
        %v2643 = vadd.f32 %v2106, %v2564
        %v2644 = vadd.f32 %v2107, %v2567
        %v2645 = vadd.f32 %v2108, %v2570
        %v2646 = vadd.f32 %v2109, %v2573
        %v2647 = vadd.f32 %v2110, %v2576
        %v2648 = vadd.f32 %v2111, %v2579
        %v2649 = vadd.f32 %v2112, %v2582
        %v2650 = vadd.f32 %v2113, %v2585
        %v2651 = vld [vmem:[%s2] sm:$0x1]
        %v2653 = vperm.slane %v2651, 0
        %v2655 = vadd.f32 %v2587, %v2653
        %v2656 = vadd.f32 %v2588, %v2653
        %v2657 = vadd.f32 %v2589, %v2653
        %v2658 = vadd.f32 %v2590, %v2653
        %v2659 = vadd.f32 %v2591, %v2653
        %v2660 = vadd.f32 %v2592, %v2653
        %v2661 = vadd.f32 %v2593, %v2653
        %v2662 = vadd.f32 %v2594, %v2653
        %v2663 = vadd.f32 %v2595, %v2653
        %v2664 = vadd.f32 %v2596, %v2653
        %v2665 = vadd.f32 %v2597, %v2653
        %v2666 = vadd.f32 %v2598, %v2653
        %v2667 = vadd.f32 %v2599, %v2653
        %v2668 = vadd.f32 %v2600, %v2653
        %v2669 = vadd.f32 %v2601, %v2653
        %v2670 = vadd.f32 %v2602, %v2653
        %v2671 = vadd.f32 %v2603, %v2653
        %v2672 = vadd.f32 %v2604, %v2653
        %v2673 = vadd.f32 %v2605, %v2653
        %v2674 = vadd.f32 %v2606, %v2653
        %v2675 = vadd.f32 %v2607, %v2653
        %v2676 = vadd.f32 %v2608, %v2653
        %v2677 = vadd.f32 %v2609, %v2653
        %v2678 = vadd.f32 %v2610, %v2653
        %v2679 = vadd.f32 %v2611, %v2653
        %v2680 = vadd.f32 %v2612, %v2653
        %v2681 = vadd.f32 %v2613, %v2653
        %v2682 = vadd.f32 %v2614, %v2653
        %v2683 = vadd.f32 %v2615, %v2653
        %v2684 = vadd.f32 %v2616, %v2653
        %v2685 = vadd.f32 %v2617, %v2653
        %v2686 = vadd.f32 %v2618, %v2653
        %v2687 = vadd.f32 %v2619, %v2653
        %v2688 = vadd.f32 %v2620, %v2653
        %v2689 = vadd.f32 %v2621, %v2653
        %v2690 = vadd.f32 %v2622, %v2653
        %v2691 = vadd.f32 %v2623, %v2653
        %v2692 = vadd.f32 %v2624, %v2653
        %v2693 = vadd.f32 %v2625, %v2653
        %v2694 = vadd.f32 %v2626, %v2653
        %v2695 = vadd.f32 %v2627, %v2653
        %v2696 = vadd.f32 %v2628, %v2653
        %v2697 = vadd.f32 %v2629, %v2653
        %v2698 = vadd.f32 %v2630, %v2653
        %v2699 = vadd.f32 %v2631, %v2653
        %v2700 = vadd.f32 %v2632, %v2653
        %v2701 = vadd.f32 %v2633, %v2653
        %v2702 = vadd.f32 %v2634, %v2653
        %v2703 = vadd.f32 %v2635, %v2653
        %v2704 = vadd.f32 %v2636, %v2653
        %v2705 = vadd.f32 %v2637, %v2653
        %v2706 = vadd.f32 %v2638, %v2653
        %v2707 = vadd.f32 %v2639, %v2653
        %v2708 = vadd.f32 %v2640, %v2653
        %v2709 = vadd.f32 %v2641, %v2653
        %v2710 = vadd.f32 %v2642, %v2653
        %v2711 = vadd.f32 %v2643, %v2653
        %v2712 = vadd.f32 %v2644, %v2653
        %v2713 = vadd.f32 %v2645, %v2653
        %v2714 = vadd.f32 %v2646, %v2653
        %v2715 = vadd.f32 %v2647, %v2653
        %v2716 = vadd.f32 %v2648, %v2653
        %v2717 = vadd.f32 %v2649, %v2653
        %v2718 = vadd.f32 %v2650, %v2653
        %v2719 = vmax.f32 %v2655, 0.0
        %v2720 = vmax.f32 %v2656, 0.0
        %v2721 = vmax.f32 %v2657, 0.0
        %v2722 = vmax.f32 %v2658, 0.0
        %v2723 = vmax.f32 %v2659, 0.0
        %v2724 = vmax.f32 %v2660, 0.0
        %v2725 = vmax.f32 %v2661, 0.0
        %v2726 = vmax.f32 %v2662, 0.0
        %v2727 = vmax.f32 %v2663, 0.0
        %v2728 = vmax.f32 %v2664, 0.0
        %v2729 = vmax.f32 %v2665, 0.0
        %v2730 = vmax.f32 %v2666, 0.0
        %v2731 = vmax.f32 %v2667, 0.0
        %v2732 = vmax.f32 %v2668, 0.0
        %v2733 = vmax.f32 %v2669, 0.0
        %v2734 = vmax.f32 %v2670, 0.0
        %v2735 = vmax.f32 %v2671, 0.0
        %v2736 = vmax.f32 %v2672, 0.0
        %v2737 = vmax.f32 %v2673, 0.0
        %v2738 = vmax.f32 %v2674, 0.0
        %v2739 = vmax.f32 %v2675, 0.0
        %v2740 = vmax.f32 %v2676, 0.0
        %v2741 = vmax.f32 %v2677, 0.0
        %v2742 = vmax.f32 %v2678, 0.0
        %v2743 = vmax.f32 %v2679, 0.0
        %v2744 = vmax.f32 %v2680, 0.0
        %v2745 = vmax.f32 %v2681, 0.0
        %v2746 = vmax.f32 %v2682, 0.0
        %v2747 = vmax.f32 %v2683, 0.0
        %v2748 = vmax.f32 %v2684, 0.0
        %v2749 = vmax.f32 %v2685, 0.0
        %v2750 = vmax.f32 %v2686, 0.0
        %v2751 = vmax.f32 %v2687, 0.0
        %v2752 = vmax.f32 %v2688, 0.0
        %v2753 = vmax.f32 %v2689, 0.0
        %v2754 = vmax.f32 %v2690, 0.0
        %v2755 = vmax.f32 %v2691, 0.0
        %v2756 = vmax.f32 %v2692, 0.0
        %v2757 = vmax.f32 %v2693, 0.0
        %v2758 = vmax.f32 %v2694, 0.0
        %v2759 = vmax.f32 %v2695, 0.0
        %v2760 = vmax.f32 %v2696, 0.0
        %v2761 = vmax.f32 %v2697, 0.0
        %v2762 = vmax.f32 %v2698, 0.0
        %v2763 = vmax.f32 %v2699, 0.0
        %v2764 = vmax.f32 %v2700, 0.0
        %v2765 = vmax.f32 %v2701, 0.0
        %v2766 = vmax.f32 %v2702, 0.0
        %v2767 = vmax.f32 %v2703, 0.0
        %v2768 = vmax.f32 %v2704, 0.0
        %v2769 = vmax.f32 %v2705, 0.0
        %v2770 = vmax.f32 %v2706, 0.0
        %v2771 = vmax.f32 %v2707, 0.0
        %v2772 = vmax.f32 %v2708, 0.0
        %v2773 = vmax.f32 %v2709, 0.0
        %v2774 = vmax.f32 %v2710, 0.0
        %v2775 = vmax.f32 %v2711, 0.0
        %v2776 = vmax.f32 %v2712, 0.0
        %v2777 = vmax.f32 %v2713, 0.0
        %v2778 = vmax.f32 %v2714, 0.0
        %v2779 = vmax.f32 %v2715, 0.0
        %v2780 = vmax.f32 %v2716, 0.0
        %v2781 = vmax.f32 %v2717, 0.0
        %v2782 = vmax.f32 %v2718, 0.0
        %2783 = vst [vmem:[#allocation2] sm:$0xff] %v2719
        %2784 = vst [vmem:[#allocation2 + $0x8] sm:$0xff] %v2720
        %2785 = vst [vmem:[#allocation2 + $0x10] sm:$0xff] %v2721
        %2786 = vst [vmem:[#allocation2 + $0x18] sm:$0xff] %v2722
        %2787 = vst [vmem:[#allocation2 + $0x20] sm:$0xff] %v2723
        %2788 = vst [vmem:[#allocation2 + $0x28] sm:$0xff] %v2724
        %2789 = vst [vmem:[#allocation2 + $0x30] sm:$0xff] %v2725
        %2790 = vst [vmem:[#allocation2 + $0x38] sm:$0xff] %v2726
        %2791 = vst [vmem:[#allocation2 + $0x40] sm:$0xff] %v2727
        %2792 = vst [vmem:[#allocation2 + $0x48] sm:$0xff] %v2728
        %2793 = vst [vmem:[#allocation2 + $0x50] sm:$0xff] %v2729
        %2794 = vst [vmem:[#allocation2 + $0x58] sm:$0xff] %v2730
        %2795 = vst [vmem:[#allocation2 + $0x60] sm:$0xff] %v2731
        %2796 = vst [vmem:[#allocation2 + $0x68] sm:$0xff] %v2732
        %2797 = vst [vmem:[#allocation2 + $0x70] sm:$0xff] %v2733
        %2798 = vst [vmem:[#allocation2 + $0x78] sm:$0xff] %v2734
        %2799 = vst [vmem:[#allocation2 + $0x80] sm:$0xff] %v2735
        %2800 = vst [vmem:[#allocation2 + $0x88] sm:$0xff] %v2736
        %2801 = vst [vmem:[#allocation2 + $0x90] sm:$0xff] %v2737
        %2802 = vst [vmem:[#allocation2 + $0x98] sm:$0xff] %v2738
        %2803 = vst [vmem:[#allocation2 + $0xa0] sm:$0xff] %v2739
        %2804 = vst [vmem:[#allocation2 + $0xa8] sm:$0xff] %v2740
        %2805 = vst [vmem:[#allocation2 + $0xb0] sm:$0xff] %v2741
        %2806 = vst [vmem:[#allocation2 + $0xb8] sm:$0xff] %v2742
        %2807 = vst [vmem:[#allocation2 + $0xc0] sm:$0xff] %v2743
        %2808 = vst [vmem:[#allocation2 + $0xc8] sm:$0xff] %v2744
        %2809 = vst [vmem:[#allocation2 + $0xd0] sm:$0xff] %v2745
        %2810 = vst [vmem:[#allocation2 + $0xd8] sm:$0xff] %v2746
        %2811 = vst [vmem:[#allocation2 + $0xe0] sm:$0xff] %v2747
        %2812 = vst [vmem:[#allocation2 + $0xe8] sm:$0xff] %v2748
        %2813 = vst [vmem:[#allocation2 + $0xf0] sm:$0xff] %v2749
        %2814 = vst [vmem:[#allocation2 + $0xf8] sm:$0xff] %v2750
        %2815 = vst [vmem:[#allocation2 + $0x100] sm:$0xff] %v2751
        %2816 = vst [vmem:[#allocation2 + $0x108] sm:$0xff] %v2752
        %2817 = vst [vmem:[#allocation2 + $0x110] sm:$0xff] %v2753
        %2818 = vst [vmem:[#allocation2 + $0x118] sm:$0xff] %v2754
        %2819 = vst [vmem:[#allocation2 + $0x120] sm:$0xff] %v2755
        %2820 = vst [vmem:[#allocation2 + $0x128] sm:$0xff] %v2756
        %2821 = vst [vmem:[#allocation2 + $0x130] sm:$0xff] %v2757
        %2822 = vst [vmem:[#allocation2 + $0x138] sm:$0xff] %v2758
        %2823 = vst [vmem:[#allocation2 + $0x140] sm:$0xff] %v2759
        %2824 = vst [vmem:[#allocation2 + $0x148] sm:$0xff] %v2760
        %2825 = vst [vmem:[#allocation2 + $0x150] sm:$0xff] %v2761
        %2826 = vst [vmem:[#allocation2 + $0x158] sm:$0xff] %v2762
        %2827 = vst [vmem:[#allocation2 + $0x160] sm:$0xff] %v2763
        %2828 = vst [vmem:[#allocation2 + $0x168] sm:$0xff] %v2764
        %2829 = vst [vmem:[#allocation2 + $0x170] sm:$0xff] %v2765
        %2830 = vst [vmem:[#allocation2 + $0x178] sm:$0xff] %v2766
        %2831 = vst [vmem:[#allocation2 + $0x180] sm:$0xff] %v2767
        %2832 = vst [vmem:[#allocation2 + $0x188] sm:$0xff] %v2768
        %2833 = vst [vmem:[#allocation2 + $0x190] sm:$0xff] %v2769
        %2834 = vst [vmem:[#allocation2 + $0x198] sm:$0xff] %v2770
        %2835 = vst [vmem:[#allocation2 + $0x1a0] sm:$0xff] %v2771
        %2836 = vst [vmem:[#allocation2 + $0x1a8] sm:$0xff] %v2772
        %2837 = vst [vmem:[#allocation2 + $0x1b0] sm:$0xff] %v2773
        %2838 = vst [vmem:[#allocation2 + $0x1b8] sm:$0xff] %v2774
        %2839 = vst [vmem:[#allocation2 + $0x1c0] sm:$0xff] %v2775
        %2840 = vst [vmem:[#allocation2 + $0x1c8] sm:$0xff] %v2776
        %2841 = vst [vmem:[#allocation2 + $0x1d0] sm:$0xff] %v2777
        %2842 = vst [vmem:[#allocation2 + $0x1d8] sm:$0xff] %v2778
        %2843 = vst [vmem:[#allocation2 + $0x1e0] sm:$0xff] %v2779
        %2844 = vst [vmem:[#allocation2 + $0x1e8] sm:$0xff] %v2780
        %2845 = vst [vmem:[#allocation2 + $0x1f0] sm:$0xff] %v2781
        %2846 = vst [vmem:[#allocation2 + $0x1f8] sm:$0xff] %v2782
        %v2847 = vld [vmem:[#allocation2] sm:$0xff]
        %s2848 = scalar_lea.vmem [#allocation2], 16
        %v2849 = vld [vmem:[%s2848] sm:$0xff]
        %s2850 = scalar_lea.vmem [#allocation2], 32
        %v2851 = vld [vmem:[%s2850] sm:$0xff]
        %s2852 = scalar_lea.vmem [#allocation2], 128
        %v2853 = vld [vmem:[%s2852] sm:$0xff]
        %s2854 = scalar_lea.vmem [#allocation2], 144
        %v2855 = vld [vmem:[%s2854] sm:$0xff]
        %s2856 = scalar_lea.vmem [#allocation2], 160
        %v2857 = vld [vmem:[%s2856] sm:$0xff]
        %s2858 = scalar_lea.vmem [#allocation2], 256
        %v2859 = vld [vmem:[%s2858] sm:$0xff]
        %s2860 = scalar_lea.vmem [#allocation2], 272
        %v2861 = vld [vmem:[%s2860] sm:$0xff]
        %s2862 = scalar_lea.vmem [#allocation2], 288
        %v2863 = vld [vmem:[%s2862] sm:$0xff]
        %v2864 = vld [vmem:[%s3] sm:$0xff]
        %v2865 = vld [vmem:[%s3 + $0x8] sm:$0xff]
        %v2866 = vld [vmem:[%s3 + $0x10] sm:$0xff]
        %v2867 = vld [vmem:[%s3 + $0x18] sm:$0xff]
        %v2868 = vld [vmem:[%s3 + $0x20] sm:$0xff]
        %v2869 = vld [vmem:[%s3 + $0x28] sm:$0xff]
        %v2870 = vld [vmem:[%s3 + $0x30] sm:$0xff]
        %v2871 = vld [vmem:[%s3 + $0x38] sm:$0xff]
        %v2872 = vld [vmem:[%s3 + $0x40] sm:$0xff]
        %v2873 = vld [vmem:[%s3 + $0x48] sm:$0xff]
        %v2874 = vld [vmem:[%s3 + $0x50] sm:$0xff]
        %v2875 = vld [vmem:[%s3 + $0x58] sm:$0xff]
        %v2876 = vld [vmem:[%s3 + $0x60] sm:$0xff]
        %v2877 = vld [vmem:[%s3 + $0x68] sm:$0xff]
        %v2878 = vld [vmem:[%s3 + $0x70] sm:$0xff]
        %v2879 = vld [vmem:[%s3 + $0x78] sm:$0xff]
        %s2880 = scalar_lea.vmem [#allocation2], 8
        %v2881 = vld [vmem:[%s2880] sm:$0xff]
        %s2882 = scalar_lea.vmem [#allocation2], 24
        %v2883 = vld [vmem:[%s2882] sm:$0xff]
        %s2884 = scalar_lea.vmem [#allocation2], 40
        %v2885 = vld [vmem:[%s2884] sm:$0xff]
        %s2886 = scalar_lea.vmem [#allocation2], 136
        %v2887 = vld [vmem:[%s2886] sm:$0xff]
        %s2888 = scalar_lea.vmem [#allocation2], 152
        %v2889 = vld [vmem:[%s2888] sm:$0xff]
        %s2890 = scalar_lea.vmem [#allocation2], 168
        %v2891 = vld [vmem:[%s2890] sm:$0xff]
        %s2892 = scalar_lea.vmem [#allocation2], 264
        %v2893 = vld [vmem:[%s2892] sm:$0xff]
        %s2894 = scalar_lea.vmem [#allocation2], 280
        %v2895 = vld [vmem:[%s2894] sm:$0xff]
        %s2896 = scalar_lea.vmem [#allocation2], 296
        %v2897 = vld [vmem:[%s2896] sm:$0xff]
        %s2898 = scalar_lea.vmem %s3, 128
        %v2899 = vld [vmem:[%s2898] sm:$0xff]
        %v2900 = vld [vmem:[%s2898 + $0x8] sm:$0xff]
        %v2901 = vld [vmem:[%s2898 + $0x10] sm:$0xff]
        %v2902 = vld [vmem:[%s2898 + $0x18] sm:$0xff]
        %v2903 = vld [vmem:[%s2898 + $0x20] sm:$0xff]
        %v2904 = vld [vmem:[%s2898 + $0x28] sm:$0xff]
        %v2905 = vld [vmem:[%s2898 + $0x30] sm:$0xff]
        %v2906 = vld [vmem:[%s2898 + $0x38] sm:$0xff]
        %v2907 = vld [vmem:[%s2898 + $0x40] sm:$0xff]
        %v2908 = vld [vmem:[%s2898 + $0x48] sm:$0xff]
        %v2909 = vld [vmem:[%s2898 + $0x50] sm:$0xff]
        %v2910 = vld [vmem:[%s2898 + $0x58] sm:$0xff]
        %v2911 = vld [vmem:[%s2898 + $0x60] sm:$0xff]
        %v2912 = vld [vmem:[%s2898 + $0x68] sm:$0xff]
        %v2913 = vld [vmem:[%s2898 + $0x70] sm:$0xff]
        %v2914 = vld [vmem:[%s2898 + $0x78] sm:$0xff]
        %2915 = vmatpush.msra.mxu0 %v2914
        %2916 = vmatpush.msra.mxu0 %v2913
        %2917 = vmatpush.msra.mxu0 %v2912
        %2918 = vmatpush.msra.mxu0 %v2911
        %2919 = vmatpush.msra.mxu0 %v2910
        %2920 = vmatpush.msra.mxu0 %v2909
        %2921 = vmatpush.msra.mxu0 %v2908
        %2922 = vmatpush.msra.mxu0 %v2907
        %2923 = vmatpush.msra.mxu0 %v2906
        %2924 = vmatpush.msra.mxu0 %v2905
        %2925 = vmatpush.msra.mxu0 %v2904
        %2926 = vmatpush.msra.mxu0 %v2903
        %2927 = vmatpush.msra.mxu0 %v2902
        %2928 = vmatpush.msra.mxu0 %v2901
        %2929 = vmatpush.msra.mxu0 %v2900
        %2930 = vmatpush.msra.mxu0 %v2899
        %2931 = vmatmul.f32.gmra.mxu0 %v2881
        %v2932 = vpop.f32.mrf.mxu0
        %v2933 = vadd.f32 0.0, %v2932
        %2934 = vmatmul.f32.gmra.mxu0 %v2883
        %v2935 = vpop.f32.mrf.mxu0
        %v2936 = vadd.f32 0.0, %v2935
        %2937 = vmatmul.f32.gmra.mxu0 %v2885
        %v2938 = vpop.f32.mrf.mxu0
        %v2939 = vadd.f32 0.0, %v2938
        %2940 = vmatmul.f32.gmra.mxu0 %v2887
        %v2941 = vpop.f32.mrf.mxu0
        %v2942 = vadd.f32 0.0, %v2941
        %2943 = vmatmul.f32.gmra.mxu0 %v2889
        %v2944 = vpop.f32.mrf.mxu0
        %v2945 = vadd.f32 0.0, %v2944
        %2946 = vmatmul.f32.gmra.mxu0 %v2891
        %v2947 = vpop.f32.mrf.mxu0
        %v2948 = vadd.f32 0.0, %v2947
        %2949 = vmatmul.f32.gmra.mxu0 %v2893
        %v2950 = vpop.f32.mrf.mxu0
        %v2951 = vadd.f32 0.0, %v2950
        %2952 = vmatmul.f32.gmra.mxu0 %v2895
        %v2953 = vpop.f32.mrf.mxu0
        %v2954 = vadd.f32 0.0, %v2953
        %2955 = vmatmul.f32.gmra.mxu0 %v2897
        %v2956 = vpop.f32.mrf.mxu0
        %v2957 = vadd.f32 0.0, %v2956
        %2958 = vdwg.mxu0
        %2959 = vmatpush.msra.mxu0 %v2879
        %2960 = vmatpush.msra.mxu0 %v2878
        %2961 = vmatpush.msra.mxu0 %v2877
        %2962 = vmatpush.msra.mxu0 %v2876
        %2963 = vmatpush.msra.mxu0 %v2875
        %2964 = vmatpush.msra.mxu0 %v2874
        %2965 = vmatpush.msra.mxu0 %v2873
        %2966 = vmatpush.msra.mxu0 %v2872
        %2967 = vmatpush.msra.mxu0 %v2871
        %2968 = vmatpush.msra.mxu0 %v2870
        %2969 = vmatpush.msra.mxu0 %v2869
        %2970 = vmatpush.msra.mxu0 %v2868
        %2971 = vmatpush.msra.mxu0 %v2867
        %2972 = vmatpush.msra.mxu0 %v2866
        %2973 = vmatpush.msra.mxu0 %v2865
        %2974 = vmatpush.msra.mxu0 %v2864
        %2975 = vmatmul.f32.gmra.mxu0 %v2847
        %v2976 = vpop.f32.mrf.mxu0
        %v2977 = vadd.f32 %v2933, %v2976
        %2978 = vmatmul.f32.gmra.mxu0 %v2849
        %v2979 = vpop.f32.mrf.mxu0
        %v2980 = vadd.f32 %v2936, %v2979
        %2981 = vmatmul.f32.gmra.mxu0 %v2851
        %v2982 = vpop.f32.mrf.mxu0
        %v2983 = vadd.f32 %v2939, %v2982
        %2984 = vmatmul.f32.gmra.mxu0 %v2853
        %v2985 = vpop.f32.mrf.mxu0
        %v2986 = vadd.f32 %v2942, %v2985
        %2987 = vmatmul.f32.gmra.mxu0 %v2855
        %v2988 = vpop.f32.mrf.mxu0
        %v2989 = vadd.f32 %v2945, %v2988
        %2990 = vmatmul.f32.gmra.mxu0 %v2857
        %v2991 = vpop.f32.mrf.mxu0
        %v2992 = vadd.f32 %v2948, %v2991
        %2993 = vmatmul.f32.gmra.mxu0 %v2859
        %v2994 = vpop.f32.mrf.mxu0
        %v2995 = vadd.f32 %v2951, %v2994
        %2996 = vmatmul.f32.gmra.mxu0 %v2861
        %v2997 = vpop.f32.mrf.mxu0
        %v2998 = vadd.f32 %v2954, %v2997
        %2999 = vmatmul.f32.gmra.mxu0 %v2863
        %v3000 = vpop.f32.mrf.mxu0
        %v3001 = vadd.f32 %v2957, %v3000
        %3002 = vdwg.mxu0
        %s3003 = scalar_lea.vmem [#allocation2], 48
        %v3004 = vld [vmem:[%s3003] sm:$0xff]
        %s3005 = scalar_lea.vmem [#allocation2], 176
        %v3006 = vld [vmem:[%s3005] sm:$0xff]
        %s3007 = scalar_lea.vmem [#allocation2], 304
        %v3008 = vld [vmem:[%s3007] sm:$0xff]
        %s3009 = scalar_lea.vmem %s3, 256
        %v3010 = vld [vmem:[%s3009] sm:$0xff]
        %v3011 = vld [vmem:[%s3009 + $0x8] sm:$0xff]
        %v3012 = vld [vmem:[%s3009 + $0x10] sm:$0xff]
        %v3013 = vld [vmem:[%s3009 + $0x18] sm:$0xff]
        %v3014 = vld [vmem:[%s3009 + $0x20] sm:$0xff]
        %v3015 = vld [vmem:[%s3009 + $0x28] sm:$0xff]
        %v3016 = vld [vmem:[%s3009 + $0x30] sm:$0xff]
        %v3017 = vld [vmem:[%s3009 + $0x38] sm:$0xff]
        %v3018 = vld [vmem:[%s3009 + $0x40] sm:$0xff]
        %v3019 = vld [vmem:[%s3009 + $0x48] sm:$0xff]
        %v3020 = vld [vmem:[%s3009 + $0x50] sm:$0xff]
        %v3021 = vld [vmem:[%s3009 + $0x58] sm:$0xff]
        %v3022 = vld [vmem:[%s3009 + $0x60] sm:$0xff]
        %v3023 = vld [vmem:[%s3009 + $0x68] sm:$0xff]
        %v3024 = vld [vmem:[%s3009 + $0x70] sm:$0xff]
        %v3025 = vld [vmem:[%s3009 + $0x78] sm:$0xff]
        %3026 = vmatpush.msra.mxu0 %v3025
        %3027 = vmatpush.msra.mxu0 %v3024
        %3028 = vmatpush.msra.mxu0 %v3023
        %3029 = vmatpush.msra.mxu0 %v3022
        %3030 = vmatpush.msra.mxu0 %v3021
        %3031 = vmatpush.msra.mxu0 %v3020
        %3032 = vmatpush.msra.mxu0 %v3019
        %3033 = vmatpush.msra.mxu0 %v3018
        %3034 = vmatpush.msra.mxu0 %v3017
        %3035 = vmatpush.msra.mxu0 %v3016
        %3036 = vmatpush.msra.mxu0 %v3015
        %3037 = vmatpush.msra.mxu0 %v3014
        %3038 = vmatpush.msra.mxu0 %v3013
        %3039 = vmatpush.msra.mxu0 %v3012
        %3040 = vmatpush.msra.mxu0 %v3011
        %3041 = vmatpush.msra.mxu0 %v3010
        %3042 = vmatmul.f32.gmra.mxu0 %v2849
        %v3043 = vpop.f32.mrf.mxu0
        %v3044 = vadd.f32 0.0, %v3043
        %3045 = vmatmul.f32.gmra.mxu0 %v2851
        %v3046 = vpop.f32.mrf.mxu0
        %v3047 = vadd.f32 0.0, %v3046
        %3048 = vmatmul.f32.gmra.mxu0 %v3004
        %v3049 = vpop.f32.mrf.mxu0
        %v3050 = vadd.f32 0.0, %v3049
        %3051 = vmatmul.f32.gmra.mxu0 %v2855
        %v3052 = vpop.f32.mrf.mxu0
        %v3053 = vadd.f32 0.0, %v3052
        %3054 = vmatmul.f32.gmra.mxu0 %v2857
        %v3055 = vpop.f32.mrf.mxu0
        %v3056 = vadd.f32 0.0, %v3055
        %3057 = vmatmul.f32.gmra.mxu0 %v3006
        %v3058 = vpop.f32.mrf.mxu0
        %v3059 = vadd.f32 0.0, %v3058
        %3060 = vmatmul.f32.gmra.mxu0 %v2861
        %v3061 = vpop.f32.mrf.mxu0
        %v3062 = vadd.f32 0.0, %v3061
        %3063 = vmatmul.f32.gmra.mxu0 %v2863
        %v3064 = vpop.f32.mrf.mxu0
        %v3065 = vadd.f32 0.0, %v3064
        %3066 = vmatmul.f32.gmra.mxu0 %v3008
        %v3067 = vpop.f32.mrf.mxu0
        %v3068 = vadd.f32 0.0, %v3067
        %3069 = vdwg.mxu0
        %v3070 = vadd.f32 %v2977, %v3044
        %v3071 = vadd.f32 %v2980, %v3047
        %v3072 = vadd.f32 %v2983, %v3050
        %v3073 = vadd.f32 %v2986, %v3053
        %v3074 = vadd.f32 %v2989, %v3056
        %v3075 = vadd.f32 %v2992, %v3059
        %v3076 = vadd.f32 %v2995, %v3062
        %v3077 = vadd.f32 %v2998, %v3065
        %v3078 = vadd.f32 %v3001, %v3068
        %s3079 = scalar_lea.vmem [#allocation2], 56
        %v3080 = vld [vmem:[%s3079] sm:$0xff]
        %s3081 = scalar_lea.vmem [#allocation2], 184
        %v3082 = vld [vmem:[%s3081] sm:$0xff]
        %s3083 = scalar_lea.vmem [#allocation2], 312
        %v3084 = vld [vmem:[%s3083] sm:$0xff]
        %s3085 = scalar_lea.vmem %s3, 384
        %v3086 = vld [vmem:[%s3085] sm:$0xff]
        %v3087 = vld [vmem:[%s3085 + $0x8] sm:$0xff]
        %v3088 = vld [vmem:[%s3085 + $0x10] sm:$0xff]
        %v3089 = vld [vmem:[%s3085 + $0x18] sm:$0xff]
        %v3090 = vld [vmem:[%s3085 + $0x20] sm:$0xff]
        %v3091 = vld [vmem:[%s3085 + $0x28] sm:$0xff]
        %v3092 = vld [vmem:[%s3085 + $0x30] sm:$0xff]
        %v3093 = vld [vmem:[%s3085 + $0x38] sm:$0xff]
        %v3094 = vld [vmem:[%s3085 + $0x40] sm:$0xff]
        %v3095 = vld [vmem:[%s3085 + $0x48] sm:$0xff]
        %v3096 = vld [vmem:[%s3085 + $0x50] sm:$0xff]
        %v3097 = vld [vmem:[%s3085 + $0x58] sm:$0xff]
        %v3098 = vld [vmem:[%s3085 + $0x60] sm:$0xff]
        %v3099 = vld [vmem:[%s3085 + $0x68] sm:$0xff]
        %v3100 = vld [vmem:[%s3085 + $0x70] sm:$0xff]
        %v3101 = vld [vmem:[%s3085 + $0x78] sm:$0xff]
        %3102 = vmatpush.msra.mxu0 %v3101
        %3103 = vmatpush.msra.mxu0 %v3100
        %3104 = vmatpush.msra.mxu0 %v3099
        %3105 = vmatpush.msra.mxu0 %v3098
        %3106 = vmatpush.msra.mxu0 %v3097
        %3107 = vmatpush.msra.mxu0 %v3096
        %3108 = vmatpush.msra.mxu0 %v3095
        %3109 = vmatpush.msra.mxu0 %v3094
        %3110 = vmatpush.msra.mxu0 %v3093
        %3111 = vmatpush.msra.mxu0 %v3092
        %3112 = vmatpush.msra.mxu0 %v3091
        %3113 = vmatpush.msra.mxu0 %v3090
        %3114 = vmatpush.msra.mxu0 %v3089
        %3115 = vmatpush.msra.mxu0 %v3088
        %3116 = vmatpush.msra.mxu0 %v3087
        %3117 = vmatpush.msra.mxu0 %v3086
        %3118 = vmatmul.f32.gmra.mxu0 %v2883
        %v3119 = vpop.f32.mrf.mxu0
        %v3120 = vadd.f32 0.0, %v3119
        %3121 = vmatmul.f32.gmra.mxu0 %v2885
        %v3122 = vpop.f32.mrf.mxu0
        %v3123 = vadd.f32 0.0, %v3122
        %3124 = vmatmul.f32.gmra.mxu0 %v3080
        %v3125 = vpop.f32.mrf.mxu0
        %v3126 = vadd.f32 0.0, %v3125
        %3127 = vmatmul.f32.gmra.mxu0 %v2889
        %v3128 = vpop.f32.mrf.mxu0
        %v3129 = vadd.f32 0.0, %v3128
        %3130 = vmatmul.f32.gmra.mxu0 %v2891
        %v3131 = vpop.f32.mrf.mxu0
        %v3132 = vadd.f32 0.0, %v3131
        %3133 = vmatmul.f32.gmra.mxu0 %v3082
        %v3134 = vpop.f32.mrf.mxu0
        %v3135 = vadd.f32 0.0, %v3134
        %3136 = vmatmul.f32.gmra.mxu0 %v2895
        %v3137 = vpop.f32.mrf.mxu0
        %v3138 = vadd.f32 0.0, %v3137
        %3139 = vmatmul.f32.gmra.mxu0 %v2897
        %v3140 = vpop.f32.mrf.mxu0
        %v3141 = vadd.f32 0.0, %v3140
        %3142 = vmatmul.f32.gmra.mxu0 %v3084
        %v3143 = vpop.f32.mrf.mxu0
        %v3144 = vadd.f32 0.0, %v3143
        %3145 = vdwg.mxu0
        %v3146 = vadd.f32 %v3070, %v3120
        %v3147 = vadd.f32 %v3071, %v3123
        %v3148 = vadd.f32 %v3072, %v3126
        %v3149 = vadd.f32 %v3073, %v3129
        %v3150 = vadd.f32 %v3074, %v3132
        %v3151 = vadd.f32 %v3075, %v3135
        %v3152 = vadd.f32 %v3076, %v3138
        %v3153 = vadd.f32 %v3077, %v3141
        %v3154 = vadd.f32 %v3078, %v3144
        %s3155 = scalar_lea.vmem [#allocation2], 64
        %v3156 = vld [vmem:[%s3155] sm:$0xff]
        %s3157 = scalar_lea.vmem [#allocation2], 80
        %v3158 = vld [vmem:[%s3157] sm:$0xff]
        %s3159 = scalar_lea.vmem [#allocation2], 96
        %v3160 = vld [vmem:[%s3159] sm:$0xff]
        %s3161 = scalar_lea.vmem [#allocation2], 192
        %v3162 = vld [vmem:[%s3161] sm:$0xff]
        %s3163 = scalar_lea.vmem [#allocation2], 208
        %v3164 = vld [vmem:[%s3163] sm:$0xff]
        %s3165 = scalar_lea.vmem [#allocation2], 224
        %v3166 = vld [vmem:[%s3165] sm:$0xff]
        %s3167 = scalar_lea.vmem [#allocation2], 320
        %v3168 = vld [vmem:[%s3167] sm:$0xff]
        %s3169 = scalar_lea.vmem [#allocation2], 336
        %v3170 = vld [vmem:[%s3169] sm:$0xff]
        %s3171 = scalar_lea.vmem [#allocation2], 352
        %v3172 = vld [vmem:[%s3171] sm:$0xff]
        %s3173 = scalar_lea.vmem %s3, 512
        %v3174 = vld [vmem:[%s3173] sm:$0xff]
        %v3175 = vld [vmem:[%s3173 + $0x8] sm:$0xff]
        %v3176 = vld [vmem:[%s3173 + $0x10] sm:$0xff]
        %v3177 = vld [vmem:[%s3173 + $0x18] sm:$0xff]
        %v3178 = vld [vmem:[%s3173 + $0x20] sm:$0xff]
        %v3179 = vld [vmem:[%s3173 + $0x28] sm:$0xff]
        %v3180 = vld [vmem:[%s3173 + $0x30] sm:$0xff]
        %v3181 = vld [vmem:[%s3173 + $0x38] sm:$0xff]
        %v3182 = vld [vmem:[%s3173 + $0x40] sm:$0xff]
        %v3183 = vld [vmem:[%s3173 + $0x48] sm:$0xff]
        %v3184 = vld [vmem:[%s3173 + $0x50] sm:$0xff]
        %v3185 = vld [vmem:[%s3173 + $0x58] sm:$0xff]
        %v3186 = vld [vmem:[%s3173 + $0x60] sm:$0xff]
        %v3187 = vld [vmem:[%s3173 + $0x68] sm:$0xff]
        %v3188 = vld [vmem:[%s3173 + $0x70] sm:$0xff]
        %v3189 = vld [vmem:[%s3173 + $0x78] sm:$0xff]
        %3190 = vmatpush.msra.mxu0 %v3189
        %3191 = vmatpush.msra.mxu0 %v3188
        %3192 = vmatpush.msra.mxu0 %v3187
        %3193 = vmatpush.msra.mxu0 %v3186
        %3194 = vmatpush.msra.mxu0 %v3185
        %3195 = vmatpush.msra.mxu0 %v3184
        %3196 = vmatpush.msra.mxu0 %v3183
        %3197 = vmatpush.msra.mxu0 %v3182
        %3198 = vmatpush.msra.mxu0 %v3181
        %3199 = vmatpush.msra.mxu0 %v3180
        %3200 = vmatpush.msra.mxu0 %v3179
        %3201 = vmatpush.msra.mxu0 %v3178
        %3202 = vmatpush.msra.mxu0 %v3177
        %3203 = vmatpush.msra.mxu0 %v3176
        %3204 = vmatpush.msra.mxu0 %v3175
        %3205 = vmatpush.msra.mxu0 %v3174
        %3206 = vmatmul.f32.gmra.mxu0 %v3156
        %v3207 = vpop.f32.mrf.mxu0
        %v3208 = vadd.f32 0.0, %v3207
        %3209 = vmatmul.f32.gmra.mxu0 %v3158
        %v3210 = vpop.f32.mrf.mxu0
        %v3211 = vadd.f32 0.0, %v3210
        %3212 = vmatmul.f32.gmra.mxu0 %v3160
        %v3213 = vpop.f32.mrf.mxu0
        %v3214 = vadd.f32 0.0, %v3213
        %3215 = vmatmul.f32.gmra.mxu0 %v3162
        %v3216 = vpop.f32.mrf.mxu0
        %v3217 = vadd.f32 0.0, %v3216
        %3218 = vmatmul.f32.gmra.mxu0 %v3164
        %v3219 = vpop.f32.mrf.mxu0
        %v3220 = vadd.f32 0.0, %v3219
        %3221 = vmatmul.f32.gmra.mxu0 %v3166
        %v3222 = vpop.f32.mrf.mxu0
        %v3223 = vadd.f32 0.0, %v3222
        %3224 = vmatmul.f32.gmra.mxu0 %v3168
        %v3225 = vpop.f32.mrf.mxu0
        %v3226 = vadd.f32 0.0, %v3225
        %3227 = vmatmul.f32.gmra.mxu0 %v3170
        %v3228 = vpop.f32.mrf.mxu0
        %v3229 = vadd.f32 0.0, %v3228
        %3230 = vmatmul.f32.gmra.mxu0 %v3172
        %v3231 = vpop.f32.mrf.mxu0
        %v3232 = vadd.f32 0.0, %v3231
        %3233 = vdwg.mxu0
        %v3234 = vadd.f32 %v3146, %v3208
        %v3235 = vadd.f32 %v3147, %v3211
        %v3236 = vadd.f32 %v3148, %v3214
        %v3237 = vadd.f32 %v3149, %v3217
        %v3238 = vadd.f32 %v3150, %v3220
        %v3239 = vadd.f32 %v3151, %v3223
        %v3240 = vadd.f32 %v3152, %v3226
        %v3241 = vadd.f32 %v3153, %v3229
        %v3242 = vadd.f32 %v3154, %v3232
        %s3243 = scalar_lea.vmem [#allocation2], 72
        %v3244 = vld [vmem:[%s3243] sm:$0xff]
        %s3245 = scalar_lea.vmem [#allocation2], 88
        %v3246 = vld [vmem:[%s3245] sm:$0xff]
        %s3247 = scalar_lea.vmem [#allocation2], 104
        %v3248 = vld [vmem:[%s3247] sm:$0xff]
        %s3249 = scalar_lea.vmem [#allocation2], 200
        %v3250 = vld [vmem:[%s3249] sm:$0xff]
        %s3251 = scalar_lea.vmem [#allocation2], 216
        %v3252 = vld [vmem:[%s3251] sm:$0xff]
        %s3253 = scalar_lea.vmem [#allocation2], 232
        %v3254 = vld [vmem:[%s3253] sm:$0xff]
        %s3255 = scalar_lea.vmem [#allocation2], 328
        %v3256 = vld [vmem:[%s3255] sm:$0xff]
        %s3257 = scalar_lea.vmem [#allocation2], 344
        %v3258 = vld [vmem:[%s3257] sm:$0xff]
        %s3259 = scalar_lea.vmem [#allocation2], 360
        %v3260 = vld [vmem:[%s3259] sm:$0xff]
        %s3261 = scalar_lea.vmem %s3, 640
        %v3262 = vld [vmem:[%s3261] sm:$0xff]
        %v3263 = vld [vmem:[%s3261 + $0x8] sm:$0xff]
        %v3264 = vld [vmem:[%s3261 + $0x10] sm:$0xff]
        %v3265 = vld [vmem:[%s3261 + $0x18] sm:$0xff]
        %v3266 = vld [vmem:[%s3261 + $0x20] sm:$0xff]
        %v3267 = vld [vmem:[%s3261 + $0x28] sm:$0xff]
        %v3268 = vld [vmem:[%s3261 + $0x30] sm:$0xff]
        %v3269 = vld [vmem:[%s3261 + $0x38] sm:$0xff]
        %v3270 = vld [vmem:[%s3261 + $0x40] sm:$0xff]
        %v3271 = vld [vmem:[%s3261 + $0x48] sm:$0xff]
        %v3272 = vld [vmem:[%s3261 + $0x50] sm:$0xff]
        %v3273 = vld [vmem:[%s3261 + $0x58] sm:$0xff]
        %v3274 = vld [vmem:[%s3261 + $0x60] sm:$0xff]
        %v3275 = vld [vmem:[%s3261 + $0x68] sm:$0xff]
        %v3276 = vld [vmem:[%s3261 + $0x70] sm:$0xff]
        %v3277 = vld [vmem:[%s3261 + $0x78] sm:$0xff]
        %3278 = vmatpush.msra.mxu0 %v3277
        %3279 = vmatpush.msra.mxu0 %v3276
        %3280 = vmatpush.msra.mxu0 %v3275
        %3281 = vmatpush.msra.mxu0 %v3274
        %3282 = vmatpush.msra.mxu0 %v3273
        %3283 = vmatpush.msra.mxu0 %v3272
        %3284 = vmatpush.msra.mxu0 %v3271
        %3285 = vmatpush.msra.mxu0 %v3270
        %3286 = vmatpush.msra.mxu0 %v3269
        %3287 = vmatpush.msra.mxu0 %v3268
        %3288 = vmatpush.msra.mxu0 %v3267
        %3289 = vmatpush.msra.mxu0 %v3266
        %3290 = vmatpush.msra.mxu0 %v3265
        %3291 = vmatpush.msra.mxu0 %v3264
        %3292 = vmatpush.msra.mxu0 %v3263
        %3293 = vmatpush.msra.mxu0 %v3262
        %3294 = vmatmul.f32.gmra.mxu0 %v3244
        %v3295 = vpop.f32.mrf.mxu0
        %v3296 = vadd.f32 0.0, %v3295
        %3297 = vmatmul.f32.gmra.mxu0 %v3246
        %v3298 = vpop.f32.mrf.mxu0
        %v3299 = vadd.f32 0.0, %v3298
        %3300 = vmatmul.f32.gmra.mxu0 %v3248
        %v3301 = vpop.f32.mrf.mxu0
        %v3302 = vadd.f32 0.0, %v3301
        %3303 = vmatmul.f32.gmra.mxu0 %v3250
        %v3304 = vpop.f32.mrf.mxu0
        %v3305 = vadd.f32 0.0, %v3304
        %3306 = vmatmul.f32.gmra.mxu0 %v3252
        %v3307 = vpop.f32.mrf.mxu0
        %v3308 = vadd.f32 0.0, %v3307
        %3309 = vmatmul.f32.gmra.mxu0 %v3254
        %v3310 = vpop.f32.mrf.mxu0
        %v3311 = vadd.f32 0.0, %v3310
        %3312 = vmatmul.f32.gmra.mxu0 %v3256
        %v3313 = vpop.f32.mrf.mxu0
        %v3314 = vadd.f32 0.0, %v3313
        %3315 = vmatmul.f32.gmra.mxu0 %v3258
        %v3316 = vpop.f32.mrf.mxu0
        %v3317 = vadd.f32 0.0, %v3316
        %3318 = vmatmul.f32.gmra.mxu0 %v3260
        %v3319 = vpop.f32.mrf.mxu0
        %v3320 = vadd.f32 0.0, %v3319
        %3321 = vdwg.mxu0
        %v3322 = vadd.f32 %v3234, %v3296
        %v3323 = vadd.f32 %v3235, %v3299
        %v3324 = vadd.f32 %v3236, %v3302
        %v3325 = vadd.f32 %v3237, %v3305
        %v3326 = vadd.f32 %v3238, %v3308
        %v3327 = vadd.f32 %v3239, %v3311
        %v3328 = vadd.f32 %v3240, %v3314
        %v3329 = vadd.f32 %v3241, %v3317
        %v3330 = vadd.f32 %v3242, %v3320
        %s3331 = scalar_lea.vmem [#allocation2], 112
        %v3332 = vld [vmem:[%s3331] sm:$0xff]
        %s3333 = scalar_lea.vmem [#allocation2], 240
        %v3334 = vld [vmem:[%s3333] sm:$0xff]
        %s3335 = scalar_lea.vmem [#allocation2], 368
        %v3336 = vld [vmem:[%s3335] sm:$0xff]
        %s3337 = scalar_lea.vmem %s3, 768
        %v3338 = vld [vmem:[%s3337] sm:$0xff]
        %v3339 = vld [vmem:[%s3337 + $0x8] sm:$0xff]
        %v3340 = vld [vmem:[%s3337 + $0x10] sm:$0xff]
        %v3341 = vld [vmem:[%s3337 + $0x18] sm:$0xff]
        %v3342 = vld [vmem:[%s3337 + $0x20] sm:$0xff]
        %v3343 = vld [vmem:[%s3337 + $0x28] sm:$0xff]
        %v3344 = vld [vmem:[%s3337 + $0x30] sm:$0xff]
        %v3345 = vld [vmem:[%s3337 + $0x38] sm:$0xff]
        %v3346 = vld [vmem:[%s3337 + $0x40] sm:$0xff]
        %v3347 = vld [vmem:[%s3337 + $0x48] sm:$0xff]
        %v3348 = vld [vmem:[%s3337 + $0x50] sm:$0xff]
        %v3349 = vld [vmem:[%s3337 + $0x58] sm:$0xff]
        %v3350 = vld [vmem:[%s3337 + $0x60] sm:$0xff]
        %v3351 = vld [vmem:[%s3337 + $0x68] sm:$0xff]
        %v3352 = vld [vmem:[%s3337 + $0x70] sm:$0xff]
        %v3353 = vld [vmem:[%s3337 + $0x78] sm:$0xff]
        %3354 = vmatpush.msra.mxu0 %v3353
        %3355 = vmatpush.msra.mxu0 %v3352
        %3356 = vmatpush.msra.mxu0 %v3351
        %3357 = vmatpush.msra.mxu0 %v3350
        %3358 = vmatpush.msra.mxu0 %v3349
        %3359 = vmatpush.msra.mxu0 %v3348
        %3360 = vmatpush.msra.mxu0 %v3347
        %3361 = vmatpush.msra.mxu0 %v3346
        %3362 = vmatpush.msra.mxu0 %v3345
        %3363 = vmatpush.msra.mxu0 %v3344
        %3364 = vmatpush.msra.mxu0 %v3343
        %3365 = vmatpush.msra.mxu0 %v3342
        %3366 = vmatpush.msra.mxu0 %v3341
        %3367 = vmatpush.msra.mxu0 %v3340
        %3368 = vmatpush.msra.mxu0 %v3339
        %3369 = vmatpush.msra.mxu0 %v3338
        %3370 = vmatmul.f32.gmra.mxu0 %v3158
        %v3371 = vpop.f32.mrf.mxu0
        %v3372 = vadd.f32 0.0, %v3371
        %3373 = vmatmul.f32.gmra.mxu0 %v3160
        %v3374 = vpop.f32.mrf.mxu0
        %v3375 = vadd.f32 0.0, %v3374
        %3376 = vmatmul.f32.gmra.mxu0 %v3332
        %v3377 = vpop.f32.mrf.mxu0
        %v3378 = vadd.f32 0.0, %v3377
        %3379 = vmatmul.f32.gmra.mxu0 %v3164
        %v3380 = vpop.f32.mrf.mxu0
        %v3381 = vadd.f32 0.0, %v3380
        %3382 = vmatmul.f32.gmra.mxu0 %v3166
        %v3383 = vpop.f32.mrf.mxu0
        %v3384 = vadd.f32 0.0, %v3383
        %3385 = vmatmul.f32.gmra.mxu0 %v3334
        %v3386 = vpop.f32.mrf.mxu0
        %v3387 = vadd.f32 0.0, %v3386
        %3388 = vmatmul.f32.gmra.mxu0 %v3170
        %v3389 = vpop.f32.mrf.mxu0
        %v3390 = vadd.f32 0.0, %v3389
        %3391 = vmatmul.f32.gmra.mxu0 %v3172
        %v3392 = vpop.f32.mrf.mxu0
        %v3393 = vadd.f32 0.0, %v3392
        %3394 = vmatmul.f32.gmra.mxu0 %v3336
        %v3395 = vpop.f32.mrf.mxu0
        %v3396 = vadd.f32 0.0, %v3395
        %3397 = vdwg.mxu0
        %v3398 = vadd.f32 %v3322, %v3372
        %v3399 = vadd.f32 %v3323, %v3375
        %v3400 = vadd.f32 %v3324, %v3378
        %v3401 = vadd.f32 %v3325, %v3381
        %v3402 = vadd.f32 %v3326, %v3384
        %v3403 = vadd.f32 %v3327, %v3387
        %v3404 = vadd.f32 %v3328, %v3390
        %v3405 = vadd.f32 %v3329, %v3393
        %v3406 = vadd.f32 %v3330, %v3396
        %s3407 = scalar_lea.vmem [#allocation2], 120
        %v3408 = vld [vmem:[%s3407] sm:$0xff]
        %s3409 = scalar_lea.vmem [#allocation2], 248
        %v3410 = vld [vmem:[%s3409] sm:$0xff]
        %s3411 = scalar_lea.vmem [#allocation2], 376
        %v3412 = vld [vmem:[%s3411] sm:$0xff]
        %s3413 = scalar_lea.vmem %s3, 896
        %v3414 = vld [vmem:[%s3413] sm:$0xff]
        %v3415 = vld [vmem:[%s3413 + $0x8] sm:$0xff]
        %v3416 = vld [vmem:[%s3413 + $0x10] sm:$0xff]
        %v3417 = vld [vmem:[%s3413 + $0x18] sm:$0xff]
        %v3418 = vld [vmem:[%s3413 + $0x20] sm:$0xff]
        %v3419 = vld [vmem:[%s3413 + $0x28] sm:$0xff]
        %v3420 = vld [vmem:[%s3413 + $0x30] sm:$0xff]
        %v3421 = vld [vmem:[%s3413 + $0x38] sm:$0xff]
        %v3422 = vld [vmem:[%s3413 + $0x40] sm:$0xff]
        %v3423 = vld [vmem:[%s3413 + $0x48] sm:$0xff]
        %v3424 = vld [vmem:[%s3413 + $0x50] sm:$0xff]
        %v3425 = vld [vmem:[%s3413 + $0x58] sm:$0xff]
        %v3426 = vld [vmem:[%s3413 + $0x60] sm:$0xff]
        %v3427 = vld [vmem:[%s3413 + $0x68] sm:$0xff]
        %v3428 = vld [vmem:[%s3413 + $0x70] sm:$0xff]
        %v3429 = vld [vmem:[%s3413 + $0x78] sm:$0xff]
        %3430 = vmatpush.msra.mxu0 %v3429
        %3431 = vmatpush.msra.mxu0 %v3428
        %3432 = vmatpush.msra.mxu0 %v3427
        %3433 = vmatpush.msra.mxu0 %v3426
        %3434 = vmatpush.msra.mxu0 %v3425
        %3435 = vmatpush.msra.mxu0 %v3424
        %3436 = vmatpush.msra.mxu0 %v3423
        %3437 = vmatpush.msra.mxu0 %v3422
        %3438 = vmatpush.msra.mxu0 %v3421
        %3439 = vmatpush.msra.mxu0 %v3420
        %3440 = vmatpush.msra.mxu0 %v3419
        %3441 = vmatpush.msra.mxu0 %v3418
        %3442 = vmatpush.msra.mxu0 %v3417
        %3443 = vmatpush.msra.mxu0 %v3416
        %3444 = vmatpush.msra.mxu0 %v3415
        %3445 = vmatpush.msra.mxu0 %v3414
        %3446 = vmatmul.f32.gmra.mxu0 %v3246
        %v3447 = vpop.f32.mrf.mxu0
        %v3448 = vadd.f32 0.0, %v3447
        %3449 = vmatmul.f32.gmra.mxu0 %v3248
        %v3450 = vpop.f32.mrf.mxu0
        %v3451 = vadd.f32 0.0, %v3450
        %3452 = vmatmul.f32.gmra.mxu0 %v3408
        %v3453 = vpop.f32.mrf.mxu0
        %v3454 = vadd.f32 0.0, %v3453
        %3455 = vmatmul.f32.gmra.mxu0 %v3252
        %v3456 = vpop.f32.mrf.mxu0
        %v3457 = vadd.f32 0.0, %v3456
        %3458 = vmatmul.f32.gmra.mxu0 %v3254
        %v3459 = vpop.f32.mrf.mxu0
        %v3460 = vadd.f32 0.0, %v3459
        %3461 = vmatmul.f32.gmra.mxu0 %v3410
        %v3462 = vpop.f32.mrf.mxu0
        %v3463 = vadd.f32 0.0, %v3462
        %3464 = vmatmul.f32.gmra.mxu0 %v3258
        %v3465 = vpop.f32.mrf.mxu0
        %v3466 = vadd.f32 0.0, %v3465
        %3467 = vmatmul.f32.gmra.mxu0 %v3260
        %v3468 = vpop.f32.mrf.mxu0
        %v3469 = vadd.f32 0.0, %v3468
        %3470 = vmatmul.f32.gmra.mxu0 %v3412
        %v3471 = vpop.f32.mrf.mxu0
        %v3472 = vadd.f32 0.0, %v3471
        %3473 = vdwg.mxu0
        %v3474 = vadd.f32 %v3398, %v3448
        %v3475 = vadd.f32 %v3399, %v3451
        %v3476 = vadd.f32 %v3400, %v3454
        %v3477 = vadd.f32 %v3401, %v3457
        %v3478 = vadd.f32 %v3402, %v3460
        %v3479 = vadd.f32 %v3403, %v3463
        %v3480 = vadd.f32 %v3404, %v3466
        %v3481 = vadd.f32 %v3405, %v3469
        %v3482 = vadd.f32 %v3406, %v3472
        %s3483 = scalar_lea.vmem [#allocation2], 384
        %v3484 = vld [vmem:[%s3483] sm:$0xff]
        %s3485 = scalar_lea.vmem [#allocation2], 400
        %v3486 = vld [vmem:[%s3485] sm:$0xff]
        %s3487 = scalar_lea.vmem [#allocation2], 416
        %v3488 = vld [vmem:[%s3487] sm:$0xff]
        %s3489 = scalar_lea.vmem %s3, 1024
        %v3490 = vld [vmem:[%s3489] sm:$0xff]
        %v3491 = vld [vmem:[%s3489 + $0x8] sm:$0xff]
        %v3492 = vld [vmem:[%s3489 + $0x10] sm:$0xff]
        %v3493 = vld [vmem:[%s3489 + $0x18] sm:$0xff]
        %v3494 = vld [vmem:[%s3489 + $0x20] sm:$0xff]
        %v3495 = vld [vmem:[%s3489 + $0x28] sm:$0xff]
        %v3496 = vld [vmem:[%s3489 + $0x30] sm:$0xff]
        %v3497 = vld [vmem:[%s3489 + $0x38] sm:$0xff]
        %v3498 = vld [vmem:[%s3489 + $0x40] sm:$0xff]
        %v3499 = vld [vmem:[%s3489 + $0x48] sm:$0xff]
        %v3500 = vld [vmem:[%s3489 + $0x50] sm:$0xff]
        %v3501 = vld [vmem:[%s3489 + $0x58] sm:$0xff]
        %v3502 = vld [vmem:[%s3489 + $0x60] sm:$0xff]
        %v3503 = vld [vmem:[%s3489 + $0x68] sm:$0xff]
        %v3504 = vld [vmem:[%s3489 + $0x70] sm:$0xff]
        %v3505 = vld [vmem:[%s3489 + $0x78] sm:$0xff]
        %3506 = vmatpush.msra.mxu0 %v3505
        %3507 = vmatpush.msra.mxu0 %v3504
        %3508 = vmatpush.msra.mxu0 %v3503
        %3509 = vmatpush.msra.mxu0 %v3502
        %3510 = vmatpush.msra.mxu0 %v3501
        %3511 = vmatpush.msra.mxu0 %v3500
        %3512 = vmatpush.msra.mxu0 %v3499
        %3513 = vmatpush.msra.mxu0 %v3498
        %3514 = vmatpush.msra.mxu0 %v3497
        %3515 = vmatpush.msra.mxu0 %v3496
        %3516 = vmatpush.msra.mxu0 %v3495
        %3517 = vmatpush.msra.mxu0 %v3494
        %3518 = vmatpush.msra.mxu0 %v3493
        %3519 = vmatpush.msra.mxu0 %v3492
        %3520 = vmatpush.msra.mxu0 %v3491
        %3521 = vmatpush.msra.mxu0 %v3490
        %3522 = vmatmul.f32.gmra.mxu0 %v2853
        %v3523 = vpop.f32.mrf.mxu0
        %v3524 = vadd.f32 0.0, %v3523
        %3525 = vmatmul.f32.gmra.mxu0 %v2855
        %v3526 = vpop.f32.mrf.mxu0
        %v3527 = vadd.f32 0.0, %v3526
        %3528 = vmatmul.f32.gmra.mxu0 %v2857
        %v3529 = vpop.f32.mrf.mxu0
        %v3530 = vadd.f32 0.0, %v3529
        %3531 = vmatmul.f32.gmra.mxu0 %v2859
        %v3532 = vpop.f32.mrf.mxu0
        %v3533 = vadd.f32 0.0, %v3532
        %3534 = vmatmul.f32.gmra.mxu0 %v2861
        %v3535 = vpop.f32.mrf.mxu0
        %v3536 = vadd.f32 0.0, %v3535
        %3537 = vmatmul.f32.gmra.mxu0 %v2863
        %v3538 = vpop.f32.mrf.mxu0
        %v3539 = vadd.f32 0.0, %v3538
        %3540 = vmatmul.f32.gmra.mxu0 %v3484
        %v3541 = vpop.f32.mrf.mxu0
        %v3542 = vadd.f32 0.0, %v3541
        %3543 = vmatmul.f32.gmra.mxu0 %v3486
        %v3544 = vpop.f32.mrf.mxu0
        %v3545 = vadd.f32 0.0, %v3544
        %3546 = vmatmul.f32.gmra.mxu0 %v3488
        %v3547 = vpop.f32.mrf.mxu0
        %v3548 = vadd.f32 0.0, %v3547
        %3549 = vdwg.mxu0
        %v3550 = vadd.f32 %v3474, %v3524
        %v3551 = vadd.f32 %v3475, %v3527
        %v3552 = vadd.f32 %v3476, %v3530
        %v3553 = vadd.f32 %v3477, %v3533
        %v3554 = vadd.f32 %v3478, %v3536
        %v3555 = vadd.f32 %v3479, %v3539
        %v3556 = vadd.f32 %v3480, %v3542
        %v3557 = vadd.f32 %v3481, %v3545
        %v3558 = vadd.f32 %v3482, %v3548
        %s3559 = scalar_lea.vmem [#allocation2], 392
        %v3560 = vld [vmem:[%s3559] sm:$0xff]
        %s3561 = scalar_lea.vmem [#allocation2], 408
        %v3562 = vld [vmem:[%s3561] sm:$0xff]
        %s3563 = scalar_lea.vmem [#allocation2], 424
        %v3564 = vld [vmem:[%s3563] sm:$0xff]
        %s3565 = scalar_lea.vmem %s3, 1152
        %v3566 = vld [vmem:[%s3565] sm:$0xff]
        %v3567 = vld [vmem:[%s3565 + $0x8] sm:$0xff]
        %v3568 = vld [vmem:[%s3565 + $0x10] sm:$0xff]
        %v3569 = vld [vmem:[%s3565 + $0x18] sm:$0xff]
        %v3570 = vld [vmem:[%s3565 + $0x20] sm:$0xff]
        %v3571 = vld [vmem:[%s3565 + $0x28] sm:$0xff]
        %v3572 = vld [vmem:[%s3565 + $0x30] sm:$0xff]
        %v3573 = vld [vmem:[%s3565 + $0x38] sm:$0xff]
        %v3574 = vld [vmem:[%s3565 + $0x40] sm:$0xff]
        %v3575 = vld [vmem:[%s3565 + $0x48] sm:$0xff]
        %v3576 = vld [vmem:[%s3565 + $0x50] sm:$0xff]
        %v3577 = vld [vmem:[%s3565 + $0x58] sm:$0xff]
        %v3578 = vld [vmem:[%s3565 + $0x60] sm:$0xff]
        %v3579 = vld [vmem:[%s3565 + $0x68] sm:$0xff]
        %v3580 = vld [vmem:[%s3565 + $0x70] sm:$0xff]
        %v3581 = vld [vmem:[%s3565 + $0x78] sm:$0xff]
        %3582 = vmatpush.msra.mxu0 %v3581
        %3583 = vmatpush.msra.mxu0 %v3580
        %3584 = vmatpush.msra.mxu0 %v3579
        %3585 = vmatpush.msra.mxu0 %v3578
        %3586 = vmatpush.msra.mxu0 %v3577
        %3587 = vmatpush.msra.mxu0 %v3576
        %3588 = vmatpush.msra.mxu0 %v3575
        %3589 = vmatpush.msra.mxu0 %v3574
        %3590 = vmatpush.msra.mxu0 %v3573
        %3591 = vmatpush.msra.mxu0 %v3572
        %3592 = vmatpush.msra.mxu0 %v3571
        %3593 = vmatpush.msra.mxu0 %v3570
        %3594 = vmatpush.msra.mxu0 %v3569
        %3595 = vmatpush.msra.mxu0 %v3568
        %3596 = vmatpush.msra.mxu0 %v3567
        %3597 = vmatpush.msra.mxu0 %v3566
        %3598 = vmatmul.f32.gmra.mxu0 %v2887
        %v3599 = vpop.f32.mrf.mxu0
        %v3600 = vadd.f32 0.0, %v3599
        %3601 = vmatmul.f32.gmra.mxu0 %v2889
        %v3602 = vpop.f32.mrf.mxu0
        %v3603 = vadd.f32 0.0, %v3602
        %3604 = vmatmul.f32.gmra.mxu0 %v2891
        %v3605 = vpop.f32.mrf.mxu0
        %v3606 = vadd.f32 0.0, %v3605
        %3607 = vmatmul.f32.gmra.mxu0 %v2893
        %v3608 = vpop.f32.mrf.mxu0
        %v3609 = vadd.f32 0.0, %v3608
        %3610 = vmatmul.f32.gmra.mxu0 %v2895
        %v3611 = vpop.f32.mrf.mxu0
        %v3612 = vadd.f32 0.0, %v3611
        %3613 = vmatmul.f32.gmra.mxu0 %v2897
        %v3614 = vpop.f32.mrf.mxu0
        %v3615 = vadd.f32 0.0, %v3614
        %3616 = vmatmul.f32.gmra.mxu0 %v3560
        %v3617 = vpop.f32.mrf.mxu0
        %v3618 = vadd.f32 0.0, %v3617
        %3619 = vmatmul.f32.gmra.mxu0 %v3562
        %v3620 = vpop.f32.mrf.mxu0
        %v3621 = vadd.f32 0.0, %v3620
        %3622 = vmatmul.f32.gmra.mxu0 %v3564
        %v3623 = vpop.f32.mrf.mxu0
        %v3624 = vadd.f32 0.0, %v3623
        %3625 = vdwg.mxu0
        %v3626 = vadd.f32 %v3550, %v3600
        %v3627 = vadd.f32 %v3551, %v3603
        %v3628 = vadd.f32 %v3552, %v3606
        %v3629 = vadd.f32 %v3553, %v3609
        %v3630 = vadd.f32 %v3554, %v3612
        %v3631 = vadd.f32 %v3555, %v3615
        %v3632 = vadd.f32 %v3556, %v3618
        %v3633 = vadd.f32 %v3557, %v3621
        %v3634 = vadd.f32 %v3558, %v3624
        %s3635 = scalar_lea.vmem [#allocation2], 432
        %v3636 = vld [vmem:[%s3635] sm:$0xff]
        %s3637 = scalar_lea.vmem %s3, 1280
        %v3638 = vld [vmem:[%s3637] sm:$0xff]
        %v3639 = vld [vmem:[%s3637 + $0x8] sm:$0xff]
        %v3640 = vld [vmem:[%s3637 + $0x10] sm:$0xff]
        %v3641 = vld [vmem:[%s3637 + $0x18] sm:$0xff]
        %v3642 = vld [vmem:[%s3637 + $0x20] sm:$0xff]
        %v3643 = vld [vmem:[%s3637 + $0x28] sm:$0xff]
        %v3644 = vld [vmem:[%s3637 + $0x30] sm:$0xff]
        %v3645 = vld [vmem:[%s3637 + $0x38] sm:$0xff]
        %v3646 = vld [vmem:[%s3637 + $0x40] sm:$0xff]
        %v3647 = vld [vmem:[%s3637 + $0x48] sm:$0xff]
        %v3648 = vld [vmem:[%s3637 + $0x50] sm:$0xff]
        %v3649 = vld [vmem:[%s3637 + $0x58] sm:$0xff]
        %v3650 = vld [vmem:[%s3637 + $0x60] sm:$0xff]
        %v3651 = vld [vmem:[%s3637 + $0x68] sm:$0xff]
        %v3652 = vld [vmem:[%s3637 + $0x70] sm:$0xff]
        %v3653 = vld [vmem:[%s3637 + $0x78] sm:$0xff]
        %3654 = vmatpush.msra.mxu0 %v3653
        %3655 = vmatpush.msra.mxu0 %v3652
        %3656 = vmatpush.msra.mxu0 %v3651
        %3657 = vmatpush.msra.mxu0 %v3650
        %3658 = vmatpush.msra.mxu0 %v3649
        %3659 = vmatpush.msra.mxu0 %v3648
        %3660 = vmatpush.msra.mxu0 %v3647
        %3661 = vmatpush.msra.mxu0 %v3646
        %3662 = vmatpush.msra.mxu0 %v3645
        %3663 = vmatpush.msra.mxu0 %v3644
        %3664 = vmatpush.msra.mxu0 %v3643
        %3665 = vmatpush.msra.mxu0 %v3642
        %3666 = vmatpush.msra.mxu0 %v3641
        %3667 = vmatpush.msra.mxu0 %v3640
        %3668 = vmatpush.msra.mxu0 %v3639
        %3669 = vmatpush.msra.mxu0 %v3638
        %3670 = vmatmul.f32.gmra.mxu0 %v2855
        %v3671 = vpop.f32.mrf.mxu0
        %v3672 = vadd.f32 0.0, %v3671
        %3673 = vmatmul.f32.gmra.mxu0 %v2857
        %v3674 = vpop.f32.mrf.mxu0
        %v3675 = vadd.f32 0.0, %v3674
        %3676 = vmatmul.f32.gmra.mxu0 %v3006
        %v3677 = vpop.f32.mrf.mxu0
        %v3678 = vadd.f32 0.0, %v3677
        %3679 = vmatmul.f32.gmra.mxu0 %v2861
        %v3680 = vpop.f32.mrf.mxu0
        %v3681 = vadd.f32 0.0, %v3680
        %3682 = vmatmul.f32.gmra.mxu0 %v2863
        %v3683 = vpop.f32.mrf.mxu0
        %v3684 = vadd.f32 0.0, %v3683
        %3685 = vmatmul.f32.gmra.mxu0 %v3008
        %v3686 = vpop.f32.mrf.mxu0
        %v3687 = vadd.f32 0.0, %v3686
        %3688 = vmatmul.f32.gmra.mxu0 %v3486
        %v3689 = vpop.f32.mrf.mxu0
        %v3690 = vadd.f32 0.0, %v3689
        %3691 = vmatmul.f32.gmra.mxu0 %v3488
        %v3692 = vpop.f32.mrf.mxu0
        %v3693 = vadd.f32 0.0, %v3692
        %3694 = vmatmul.f32.gmra.mxu0 %v3636
        %v3695 = vpop.f32.mrf.mxu0
        %v3696 = vadd.f32 0.0, %v3695
        %3697 = vdwg.mxu0
        %v3698 = vadd.f32 %v3626, %v3672
        %v3699 = vadd.f32 %v3627, %v3675
        %v3700 = vadd.f32 %v3628, %v3678
        %v3701 = vadd.f32 %v3629, %v3681
        %v3702 = vadd.f32 %v3630, %v3684
        %v3703 = vadd.f32 %v3631, %v3687
        %v3704 = vadd.f32 %v3632, %v3690
        %v3705 = vadd.f32 %v3633, %v3693
        %v3706 = vadd.f32 %v3634, %v3696
        %s3707 = scalar_lea.vmem [#allocation2], 440
        %v3708 = vld [vmem:[%s3707] sm:$0xff]
        %s3709 = scalar_lea.vmem %s3, 1408
        %v3710 = vld [vmem:[%s3709] sm:$0xff]
        %v3711 = vld [vmem:[%s3709 + $0x8] sm:$0xff]
        %v3712 = vld [vmem:[%s3709 + $0x10] sm:$0xff]
        %v3713 = vld [vmem:[%s3709 + $0x18] sm:$0xff]
        %v3714 = vld [vmem:[%s3709 + $0x20] sm:$0xff]
        %v3715 = vld [vmem:[%s3709 + $0x28] sm:$0xff]
        %v3716 = vld [vmem:[%s3709 + $0x30] sm:$0xff]
        %v3717 = vld [vmem:[%s3709 + $0x38] sm:$0xff]
        %v3718 = vld [vmem:[%s3709 + $0x40] sm:$0xff]
        %v3719 = vld [vmem:[%s3709 + $0x48] sm:$0xff]
        %v3720 = vld [vmem:[%s3709 + $0x50] sm:$0xff]
        %v3721 = vld [vmem:[%s3709 + $0x58] sm:$0xff]
        %v3722 = vld [vmem:[%s3709 + $0x60] sm:$0xff]
        %v3723 = vld [vmem:[%s3709 + $0x68] sm:$0xff]
        %v3724 = vld [vmem:[%s3709 + $0x70] sm:$0xff]
        %v3725 = vld [vmem:[%s3709 + $0x78] sm:$0xff]
        %3726 = vmatpush.msra.mxu0 %v3725
        %3727 = vmatpush.msra.mxu0 %v3724
        %3728 = vmatpush.msra.mxu0 %v3723
        %3729 = vmatpush.msra.mxu0 %v3722
        %3730 = vmatpush.msra.mxu0 %v3721
        %3731 = vmatpush.msra.mxu0 %v3720
        %3732 = vmatpush.msra.mxu0 %v3719
        %3733 = vmatpush.msra.mxu0 %v3718
        %3734 = vmatpush.msra.mxu0 %v3717
        %3735 = vmatpush.msra.mxu0 %v3716
        %3736 = vmatpush.msra.mxu0 %v3715
        %3737 = vmatpush.msra.mxu0 %v3714
        %3738 = vmatpush.msra.mxu0 %v3713
        %3739 = vmatpush.msra.mxu0 %v3712
        %3740 = vmatpush.msra.mxu0 %v3711
        %3741 = vmatpush.msra.mxu0 %v3710
        %3742 = vmatmul.f32.gmra.mxu0 %v2889
        %v3743 = vpop.f32.mrf.mxu0
        %v3744 = vadd.f32 0.0, %v3743
        %3745 = vmatmul.f32.gmra.mxu0 %v2891
        %v3746 = vpop.f32.mrf.mxu0
        %v3747 = vadd.f32 0.0, %v3746
        %3748 = vmatmul.f32.gmra.mxu0 %v3082
        %v3749 = vpop.f32.mrf.mxu0
        %v3750 = vadd.f32 0.0, %v3749
        %3751 = vmatmul.f32.gmra.mxu0 %v2895
        %v3752 = vpop.f32.mrf.mxu0
        %v3753 = vadd.f32 0.0, %v3752
        %3754 = vmatmul.f32.gmra.mxu0 %v2897
        %v3755 = vpop.f32.mrf.mxu0
        %v3756 = vadd.f32 0.0, %v3755
        %3757 = vmatmul.f32.gmra.mxu0 %v3084
        %v3758 = vpop.f32.mrf.mxu0
        %v3759 = vadd.f32 0.0, %v3758
        %3760 = vmatmul.f32.gmra.mxu0 %v3562
        %v3761 = vpop.f32.mrf.mxu0
        %v3762 = vadd.f32 0.0, %v3761
        %3763 = vmatmul.f32.gmra.mxu0 %v3564
        %v3764 = vpop.f32.mrf.mxu0
        %v3765 = vadd.f32 0.0, %v3764
        %3766 = vmatmul.f32.gmra.mxu0 %v3708
        %v3767 = vpop.f32.mrf.mxu0
        %v3768 = vadd.f32 0.0, %v3767
        %3769 = vdwg.mxu0
        %v3770 = vadd.f32 %v3698, %v3744
        %v3771 = vadd.f32 %v3699, %v3747
        %v3772 = vadd.f32 %v3700, %v3750
        %v3773 = vadd.f32 %v3701, %v3753
        %v3774 = vadd.f32 %v3702, %v3756
        %v3775 = vadd.f32 %v3703, %v3759
        %v3776 = vadd.f32 %v3704, %v3762
        %v3777 = vadd.f32 %v3705, %v3765
        %v3778 = vadd.f32 %v3706, %v3768
        %s3779 = scalar_lea.vmem [#allocation2], 448
        %v3780 = vld [vmem:[%s3779] sm:$0xff]
        %s3781 = scalar_lea.vmem [#allocation2], 464
        %v3782 = vld [vmem:[%s3781] sm:$0xff]
        %s3783 = scalar_lea.vmem [#allocation2], 480
        %v3784 = vld [vmem:[%s3783] sm:$0xff]
        %s3785 = scalar_lea.vmem %s3, 1536
        %v3786 = vld [vmem:[%s3785] sm:$0xff]
        %v3787 = vld [vmem:[%s3785 + $0x8] sm:$0xff]
        %v3788 = vld [vmem:[%s3785 + $0x10] sm:$0xff]
        %v3789 = vld [vmem:[%s3785 + $0x18] sm:$0xff]
        %v3790 = vld [vmem:[%s3785 + $0x20] sm:$0xff]
        %v3791 = vld [vmem:[%s3785 + $0x28] sm:$0xff]
        %v3792 = vld [vmem:[%s3785 + $0x30] sm:$0xff]
        %v3793 = vld [vmem:[%s3785 + $0x38] sm:$0xff]
        %v3794 = vld [vmem:[%s3785 + $0x40] sm:$0xff]
        %v3795 = vld [vmem:[%s3785 + $0x48] sm:$0xff]
        %v3796 = vld [vmem:[%s3785 + $0x50] sm:$0xff]
        %v3797 = vld [vmem:[%s3785 + $0x58] sm:$0xff]
        %v3798 = vld [vmem:[%s3785 + $0x60] sm:$0xff]
        %v3799 = vld [vmem:[%s3785 + $0x68] sm:$0xff]
        %v3800 = vld [vmem:[%s3785 + $0x70] sm:$0xff]
        %v3801 = vld [vmem:[%s3785 + $0x78] sm:$0xff]
        %3802 = vmatpush.msra.mxu0 %v3801
        %3803 = vmatpush.msra.mxu0 %v3800
        %3804 = vmatpush.msra.mxu0 %v3799
        %3805 = vmatpush.msra.mxu0 %v3798
        %3806 = vmatpush.msra.mxu0 %v3797
        %3807 = vmatpush.msra.mxu0 %v3796
        %3808 = vmatpush.msra.mxu0 %v3795
        %3809 = vmatpush.msra.mxu0 %v3794
        %3810 = vmatpush.msra.mxu0 %v3793
        %3811 = vmatpush.msra.mxu0 %v3792
        %3812 = vmatpush.msra.mxu0 %v3791
        %3813 = vmatpush.msra.mxu0 %v3790
        %3814 = vmatpush.msra.mxu0 %v3789
        %3815 = vmatpush.msra.mxu0 %v3788
        %3816 = vmatpush.msra.mxu0 %v3787
        %3817 = vmatpush.msra.mxu0 %v3786
        %3818 = vmatmul.f32.gmra.mxu0 %v3162
        %v3819 = vpop.f32.mrf.mxu0
        %v3820 = vadd.f32 0.0, %v3819
        %3821 = vmatmul.f32.gmra.mxu0 %v3164
        %v3822 = vpop.f32.mrf.mxu0
        %v3823 = vadd.f32 0.0, %v3822
        %3824 = vmatmul.f32.gmra.mxu0 %v3166
        %v3825 = vpop.f32.mrf.mxu0
        %v3826 = vadd.f32 0.0, %v3825
        %3827 = vmatmul.f32.gmra.mxu0 %v3168
        %v3828 = vpop.f32.mrf.mxu0
        %v3829 = vadd.f32 0.0, %v3828
        %3830 = vmatmul.f32.gmra.mxu0 %v3170
        %v3831 = vpop.f32.mrf.mxu0
        %v3832 = vadd.f32 0.0, %v3831
        %3833 = vmatmul.f32.gmra.mxu0 %v3172
        %v3834 = vpop.f32.mrf.mxu0
        %v3835 = vadd.f32 0.0, %v3834
        %3836 = vmatmul.f32.gmra.mxu0 %v3780
        %v3837 = vpop.f32.mrf.mxu0
        %v3838 = vadd.f32 0.0, %v3837
        %3839 = vmatmul.f32.gmra.mxu0 %v3782
        %v3840 = vpop.f32.mrf.mxu0
        %v3841 = vadd.f32 0.0, %v3840
        %3842 = vmatmul.f32.gmra.mxu0 %v3784
        %v3843 = vpop.f32.mrf.mxu0
        %v3844 = vadd.f32 0.0, %v3843
        %3845 = vdwg.mxu0
        %v3846 = vadd.f32 %v3770, %v3820
        %v3847 = vadd.f32 %v3771, %v3823
        %v3848 = vadd.f32 %v3772, %v3826
        %v3849 = vadd.f32 %v3773, %v3829
        %v3850 = vadd.f32 %v3774, %v3832
        %v3851 = vadd.f32 %v3775, %v3835
        %v3852 = vadd.f32 %v3776, %v3838
        %v3853 = vadd.f32 %v3777, %v3841
        %v3854 = vadd.f32 %v3778, %v3844
        %s3855 = scalar_lea.vmem [#allocation2], 456
        %v3856 = vld [vmem:[%s3855] sm:$0xff]
        %s3857 = scalar_lea.vmem [#allocation2], 472
        %v3858 = vld [vmem:[%s3857] sm:$0xff]
        %s3859 = scalar_lea.vmem [#allocation2], 488
        %v3860 = vld [vmem:[%s3859] sm:$0xff]
        %s3861 = scalar_lea.vmem %s3, 1664
        %v3862 = vld [vmem:[%s3861] sm:$0xff]
        %v3863 = vld [vmem:[%s3861 + $0x8] sm:$0xff]
        %v3864 = vld [vmem:[%s3861 + $0x10] sm:$0xff]
        %v3865 = vld [vmem:[%s3861 + $0x18] sm:$0xff]
        %v3866 = vld [vmem:[%s3861 + $0x20] sm:$0xff]
        %v3867 = vld [vmem:[%s3861 + $0x28] sm:$0xff]
        %v3868 = vld [vmem:[%s3861 + $0x30] sm:$0xff]
        %v3869 = vld [vmem:[%s3861 + $0x38] sm:$0xff]
        %v3870 = vld [vmem:[%s3861 + $0x40] sm:$0xff]
        %v3871 = vld [vmem:[%s3861 + $0x48] sm:$0xff]
        %v3872 = vld [vmem:[%s3861 + $0x50] sm:$0xff]
        %v3873 = vld [vmem:[%s3861 + $0x58] sm:$0xff]
        %v3874 = vld [vmem:[%s3861 + $0x60] sm:$0xff]
        %v3875 = vld [vmem:[%s3861 + $0x68] sm:$0xff]
        %v3876 = vld [vmem:[%s3861 + $0x70] sm:$0xff]
        %v3877 = vld [vmem:[%s3861 + $0x78] sm:$0xff]
        %3878 = vmatpush.msra.mxu0 %v3877
        %3879 = vmatpush.msra.mxu0 %v3876
        %3880 = vmatpush.msra.mxu0 %v3875
        %3881 = vmatpush.msra.mxu0 %v3874
        %3882 = vmatpush.msra.mxu0 %v3873
        %3883 = vmatpush.msra.mxu0 %v3872
        %3884 = vmatpush.msra.mxu0 %v3871
        %3885 = vmatpush.msra.mxu0 %v3870
        %3886 = vmatpush.msra.mxu0 %v3869
        %3887 = vmatpush.msra.mxu0 %v3868
        %3888 = vmatpush.msra.mxu0 %v3867
        %3889 = vmatpush.msra.mxu0 %v3866
        %3890 = vmatpush.msra.mxu0 %v3865
        %3891 = vmatpush.msra.mxu0 %v3864
        %3892 = vmatpush.msra.mxu0 %v3863
        %3893 = vmatpush.msra.mxu0 %v3862
        %3894 = vmatmul.f32.gmra.mxu0 %v3250
        %v3895 = vpop.f32.mrf.mxu0
        %v3896 = vadd.f32 0.0, %v3895
        %3897 = vmatmul.f32.gmra.mxu0 %v3252
        %v3898 = vpop.f32.mrf.mxu0
        %v3899 = vadd.f32 0.0, %v3898
        %3900 = vmatmul.f32.gmra.mxu0 %v3254
        %v3901 = vpop.f32.mrf.mxu0
        %v3902 = vadd.f32 0.0, %v3901
        %3903 = vmatmul.f32.gmra.mxu0 %v3256
        %v3904 = vpop.f32.mrf.mxu0
        %v3905 = vadd.f32 0.0, %v3904
        %3906 = vmatmul.f32.gmra.mxu0 %v3258
        %v3907 = vpop.f32.mrf.mxu0
        %v3908 = vadd.f32 0.0, %v3907
        %3909 = vmatmul.f32.gmra.mxu0 %v3260
        %v3910 = vpop.f32.mrf.mxu0
        %v3911 = vadd.f32 0.0, %v3910
        %3912 = vmatmul.f32.gmra.mxu0 %v3856
        %v3913 = vpop.f32.mrf.mxu0
        %v3914 = vadd.f32 0.0, %v3913
        %3915 = vmatmul.f32.gmra.mxu0 %v3858
        %v3916 = vpop.f32.mrf.mxu0
        %v3917 = vadd.f32 0.0, %v3916
        %3918 = vmatmul.f32.gmra.mxu0 %v3860
        %v3919 = vpop.f32.mrf.mxu0
        %v3920 = vadd.f32 0.0, %v3919
        %3921 = vdwg.mxu0
        %v3922 = vadd.f32 %v3846, %v3896
        %v3923 = vadd.f32 %v3847, %v3899
        %v3924 = vadd.f32 %v3848, %v3902
        %v3925 = vadd.f32 %v3849, %v3905
        %v3926 = vadd.f32 %v3850, %v3908
        %v3927 = vadd.f32 %v3851, %v3911
        %v3928 = vadd.f32 %v3852, %v3914
        %v3929 = vadd.f32 %v3853, %v3917
        %v3930 = vadd.f32 %v3854, %v3920
        %s3931 = scalar_lea.vmem [#allocation2], 496
        %v3932 = vld [vmem:[%s3931] sm:$0xff]
        %s3933 = scalar_lea.vmem %s3, 1792
        %v3934 = vld [vmem:[%s3933] sm:$0xff]
        %v3935 = vld [vmem:[%s3933 + $0x8] sm:$0xff]
        %v3936 = vld [vmem:[%s3933 + $0x10] sm:$0xff]
        %v3937 = vld [vmem:[%s3933 + $0x18] sm:$0xff]
        %v3938 = vld [vmem:[%s3933 + $0x20] sm:$0xff]
        %v3939 = vld [vmem:[%s3933 + $0x28] sm:$0xff]
        %v3940 = vld [vmem:[%s3933 + $0x30] sm:$0xff]
        %v3941 = vld [vmem:[%s3933 + $0x38] sm:$0xff]
        %v3942 = vld [vmem:[%s3933 + $0x40] sm:$0xff]
        %v3943 = vld [vmem:[%s3933 + $0x48] sm:$0xff]
        %v3944 = vld [vmem:[%s3933 + $0x50] sm:$0xff]
        %v3945 = vld [vmem:[%s3933 + $0x58] sm:$0xff]
        %v3946 = vld [vmem:[%s3933 + $0x60] sm:$0xff]
        %v3947 = vld [vmem:[%s3933 + $0x68] sm:$0xff]
        %v3948 = vld [vmem:[%s3933 + $0x70] sm:$0xff]
        %v3949 = vld [vmem:[%s3933 + $0x78] sm:$0xff]
        %3950 = vmatpush.msra.mxu0 %v3949
        %3951 = vmatpush.msra.mxu0 %v3948
        %3952 = vmatpush.msra.mxu0 %v3947
        %3953 = vmatpush.msra.mxu0 %v3946
        %3954 = vmatpush.msra.mxu0 %v3945
        %3955 = vmatpush.msra.mxu0 %v3944
        %3956 = vmatpush.msra.mxu0 %v3943
        %3957 = vmatpush.msra.mxu0 %v3942
        %3958 = vmatpush.msra.mxu0 %v3941
        %3959 = vmatpush.msra.mxu0 %v3940
        %3960 = vmatpush.msra.mxu0 %v3939
        %3961 = vmatpush.msra.mxu0 %v3938
        %3962 = vmatpush.msra.mxu0 %v3937
        %3963 = vmatpush.msra.mxu0 %v3936
        %3964 = vmatpush.msra.mxu0 %v3935
        %3965 = vmatpush.msra.mxu0 %v3934
        %3966 = vmatmul.f32.gmra.mxu0 %v3164
        %v3967 = vpop.f32.mrf.mxu0
        %v3968 = vadd.f32 0.0, %v3967
        %3969 = vmatmul.f32.gmra.mxu0 %v3166
        %v3970 = vpop.f32.mrf.mxu0
        %v3971 = vadd.f32 0.0, %v3970
        %3972 = vmatmul.f32.gmra.mxu0 %v3334
        %v3973 = vpop.f32.mrf.mxu0
        %v3974 = vadd.f32 0.0, %v3973
        %3975 = vmatmul.f32.gmra.mxu0 %v3170
        %v3976 = vpop.f32.mrf.mxu0
        %v3977 = vadd.f32 0.0, %v3976
        %3978 = vmatmul.f32.gmra.mxu0 %v3172
        %v3979 = vpop.f32.mrf.mxu0
        %v3980 = vadd.f32 0.0, %v3979
        %3981 = vmatmul.f32.gmra.mxu0 %v3336
        %v3982 = vpop.f32.mrf.mxu0
        %v3983 = vadd.f32 0.0, %v3982
        %3984 = vmatmul.f32.gmra.mxu0 %v3782
        %v3985 = vpop.f32.mrf.mxu0
        %v3986 = vadd.f32 0.0, %v3985
        %3987 = vmatmul.f32.gmra.mxu0 %v3784
        %v3988 = vpop.f32.mrf.mxu0
        %v3989 = vadd.f32 0.0, %v3988
        %3990 = vmatmul.f32.gmra.mxu0 %v3932
        %v3991 = vpop.f32.mrf.mxu0
        %v3992 = vadd.f32 0.0, %v3991
        %3993 = vdwg.mxu0
        %v3994 = vadd.f32 %v3922, %v3968
        %v3995 = vadd.f32 %v3923, %v3971
        %v3996 = vadd.f32 %v3924, %v3974
        %v3997 = vadd.f32 %v3925, %v3977
        %v3998 = vadd.f32 %v3926, %v3980
        %v3999 = vadd.f32 %v3927, %v3983
        %v4000 = vadd.f32 %v3928, %v3986
        %v4001 = vadd.f32 %v3929, %v3989
        %v4002 = vadd.f32 %v3930, %v3992
        %s4003 = scalar_lea.vmem [#allocation2], 504
        %v4004 = vld [vmem:[%s4003] sm:$0xff]
        %s4005 = scalar_lea.vmem %s3, 1920
        %v4006 = vld [vmem:[%s4005] sm:$0xff]
        %v4007 = vld [vmem:[%s4005 + $0x8] sm:$0xff]
        %v4008 = vld [vmem:[%s4005 + $0x10] sm:$0xff]
        %v4009 = vld [vmem:[%s4005 + $0x18] sm:$0xff]
        %v4010 = vld [vmem:[%s4005 + $0x20] sm:$0xff]
        %v4011 = vld [vmem:[%s4005 + $0x28] sm:$0xff]
        %v4012 = vld [vmem:[%s4005 + $0x30] sm:$0xff]
        %v4013 = vld [vmem:[%s4005 + $0x38] sm:$0xff]
        %v4014 = vld [vmem:[%s4005 + $0x40] sm:$0xff]
        %v4015 = vld [vmem:[%s4005 + $0x48] sm:$0xff]
        %v4016 = vld [vmem:[%s4005 + $0x50] sm:$0xff]
        %v4017 = vld [vmem:[%s4005 + $0x58] sm:$0xff]
        %v4018 = vld [vmem:[%s4005 + $0x60] sm:$0xff]
        %v4019 = vld [vmem:[%s4005 + $0x68] sm:$0xff]
        %v4020 = vld [vmem:[%s4005 + $0x70] sm:$0xff]
        %v4021 = vld [vmem:[%s4005 + $0x78] sm:$0xff]
        %4022 = vmatpush.msra.mxu0 %v4021
        %4023 = vmatpush.msra.mxu0 %v4020
        %4024 = vmatpush.msra.mxu0 %v4019
        %4025 = vmatpush.msra.mxu0 %v4018
        %4026 = vmatpush.msra.mxu0 %v4017
        %4027 = vmatpush.msra.mxu0 %v4016
        %4028 = vmatpush.msra.mxu0 %v4015
        %4029 = vmatpush.msra.mxu0 %v4014
        %4030 = vmatpush.msra.mxu0 %v4013
        %4031 = vmatpush.msra.mxu0 %v4012
        %4032 = vmatpush.msra.mxu0 %v4011
        %4033 = vmatpush.msra.mxu0 %v4010
        %4034 = vmatpush.msra.mxu0 %v4009
        %4035 = vmatpush.msra.mxu0 %v4008
        %4036 = vmatpush.msra.mxu0 %v4007
        %4037 = vmatpush.msra.mxu0 %v4006
        %4038 = vmatmul.f32.gmra.mxu0 %v3252
        %v4039 = vpop.f32.mrf.mxu0
        %v4040 = vadd.f32 0.0, %v4039
        %4041 = vmatmul.f32.gmra.mxu0 %v3254
        %v4042 = vpop.f32.mrf.mxu0
        %v4043 = vadd.f32 0.0, %v4042
        %4044 = vmatmul.f32.gmra.mxu0 %v3410
        %v4045 = vpop.f32.mrf.mxu0
        %v4046 = vadd.f32 0.0, %v4045
        %4047 = vmatmul.f32.gmra.mxu0 %v3258
        %v4048 = vpop.f32.mrf.mxu0
        %v4049 = vadd.f32 0.0, %v4048
        %4050 = vmatmul.f32.gmra.mxu0 %v3260
        %v4051 = vpop.f32.mrf.mxu0
        %v4052 = vadd.f32 0.0, %v4051
        %4053 = vmatmul.f32.gmra.mxu0 %v3412
        %v4054 = vpop.f32.mrf.mxu0
        %v4055 = vadd.f32 0.0, %v4054
        %4056 = vmatmul.f32.gmra.mxu0 %v3858
        %v4057 = vpop.f32.mrf.mxu0
        %v4058 = vadd.f32 0.0, %v4057
        %4059 = vmatmul.f32.gmra.mxu0 %v3860
        %v4060 = vpop.f32.mrf.mxu0
        %v4061 = vadd.f32 0.0, %v4060
        %4062 = vmatmul.f32.gmra.mxu0 %v4004
        %v4063 = vpop.f32.mrf.mxu0
        %v4064 = vadd.f32 0.0, %v4063
        %4065 = vdwg.mxu0
        %v4066 = vadd.f32 %v3994, %v4040
        %v4067 = vadd.f32 %v3995, %v4043
        %v4068 = vadd.f32 %v3996, %v4046
        %v4069 = vadd.f32 %v3997, %v4049
        %v4070 = vadd.f32 %v3998, %v4052
        %v4071 = vadd.f32 %v3999, %v4055
        %v4072 = vadd.f32 %v4000, %v4058
        %v4073 = vadd.f32 %v4001, %v4061
        %v4074 = vadd.f32 %v4002, %v4064
        %v4075 = vld [vmem:[%s4] sm:$0x1]
        %v4077 = vperm.slane %v4075, 0
        %v4079 = vadd.f32 %v4066, %v4077
        %v4080 = vadd.f32 %v4067, %v4077
        %v4081 = vadd.f32 %v4068, %v4077
        %v4082 = vadd.f32 %v4069, %v4077
        %v4083 = vadd.f32 %v4070, %v4077
        %v4084 = vadd.f32 %v4071, %v4077
        %v4085 = vadd.f32 %v4072, %v4077
        %v4086 = vadd.f32 %v4073, %v4077
        %v4087 = vadd.f32 %v4074, %v4077
        %v4088 = vmax.f32 %v4079, 0.0
        %v4089 = vmax.f32 %v4080, 0.0
        %v4090 = vmax.f32 %v4081, 0.0
        %v4091 = vmax.f32 %v4082, 0.0
        %v4092 = vmax.f32 %v4083, 0.0
        %v4093 = vmax.f32 %v4084, 0.0
        %v4094 = vmax.f32 %v4085, 0.0
        %v4095 = vmax.f32 %v4086, 0.0
        %v4096 = vmax.f32 %v4087, 0.0
        %v4097 = vld [vmem:[%s5] sm:$0xff]
        %v4098 = vld [vmem:[%s5 + $0x8] sm:$0xff]
        %v4099 = vld [vmem:[%s5 + $0x10] sm:$0xff]
        %v4100 = vld [vmem:[%s5 + $0x18] sm:$0xff]
        %v4101 = vld [vmem:[%s5 + $0x20] sm:$0xff]
        %v4102 = vld [vmem:[%s5 + $0x28] sm:$0xff]
        %v4103 = vld [vmem:[%s5 + $0x30] sm:$0xff]
        %v4104 = vld [vmem:[%s5 + $0x38] sm:$0xff]
        %v4105 = vld [vmem:[%s5 + $0x40] sm:$0xff]
        %v4106 = vld [vmem:[%s5 + $0x48] sm:$0xff]
        %v4107 = vld [vmem:[%s5 + $0x50] sm:$0xff]
        %v4108 = vld [vmem:[%s5 + $0x58] sm:$0xff]
        %v4109 = vld [vmem:[%s5 + $0x60] sm:$0xff]
        %v4110 = vld [vmem:[%s5 + $0x68] sm:$0xff]
        %v4111 = vld [vmem:[%s5 + $0x70] sm:$0xff]
        %v4112 = vld [vmem:[%s5 + $0x78] sm:$0xff]
        %s4113 = scalar_lea.vmem %s5, 128
        %v4114 = vld [vmem:[%s4113] sm:$0xff]
        %v4115 = vld [vmem:[%s4113 + $0x8] sm:$0xff]
        %v4116 = vld [vmem:[%s4113 + $0x10] sm:$0xff]
        %v4117 = vld [vmem:[%s4113 + $0x18] sm:$0xff]
        %v4118 = vld [vmem:[%s4113 + $0x20] sm:$0xff]
        %v4119 = vld [vmem:[%s4113 + $0x28] sm:$0xff]
        %v4120 = vld [vmem:[%s4113 + $0x30] sm:$0xff]
        %v4121 = vld [vmem:[%s4113 + $0x38] sm:$0xff]
        %v4122 = vld [vmem:[%s4113 + $0x40] sm:$0xff]
        %v4123 = vld [vmem:[%s4113 + $0x48] sm:$0xff]
        %v4124 = vld [vmem:[%s4113 + $0x50] sm:$0xff]
        %v4125 = vld [vmem:[%s4113 + $0x58] sm:$0xff]
        %v4126 = vld [vmem:[%s4113 + $0x60] sm:$0xff]
        %v4127 = vld [vmem:[%s4113 + $0x68] sm:$0xff]
        %v4128 = vld [vmem:[%s4113 + $0x70] sm:$0xff]
        %v4129 = vld [vmem:[%s4113 + $0x78] sm:$0xff]
        %4130 = vmatpush.msra.mxu0 %v4129
        %4131 = vmatpush.msra.mxu0 %v4128
        %4132 = vmatpush.msra.mxu0 %v4127
        %4133 = vmatpush.msra.mxu0 %v4126
        %4134 = vmatpush.msra.mxu0 %v4125
        %4135 = vmatpush.msra.mxu0 %v4124
        %4136 = vmatpush.msra.mxu0 %v4123
        %4137 = vmatpush.msra.mxu0 %v4122
        %4138 = vmatpush.msra.mxu0 %v4121
        %4139 = vmatpush.msra.mxu0 %v4120
        %4140 = vmatpush.msra.mxu0 %v4119
        %4141 = vmatpush.msra.mxu0 %v4118
        %4142 = vmatpush.msra.mxu0 %v4117
        %4143 = vmatpush.msra.mxu0 %v4116
        %4144 = vmatpush.msra.mxu0 %v4115
        %4145 = vmatpush.msra.mxu0 %v4114
        %4146 = vmatmul.f32.gmra.mxu0 %v4089
        %v4147 = vpop.f32.mrf.mxu0
        %v4148 = vadd.f32 0.0, %v4147
        %4149 = vdwg.mxu0
        %4150 = vmatpush.msra.mxu0 %v4112
        %4151 = vmatpush.msra.mxu0 %v4111
        %4152 = vmatpush.msra.mxu0 %v4110
        %4153 = vmatpush.msra.mxu0 %v4109
        %4154 = vmatpush.msra.mxu0 %v4108
        %4155 = vmatpush.msra.mxu0 %v4107
        %4156 = vmatpush.msra.mxu0 %v4106
        %4157 = vmatpush.msra.mxu0 %v4105
        %4158 = vmatpush.msra.mxu0 %v4104
        %4159 = vmatpush.msra.mxu0 %v4103
        %4160 = vmatpush.msra.mxu0 %v4102
        %4161 = vmatpush.msra.mxu0 %v4101
        %4162 = vmatpush.msra.mxu0 %v4100
        %4163 = vmatpush.msra.mxu0 %v4099
        %4164 = vmatpush.msra.mxu0 %v4098
        %4165 = vmatpush.msra.mxu0 %v4097
        %4166 = vmatmul.f32.gmra.mxu0 %v4088
        %v4167 = vpop.f32.mrf.mxu0
        %v4168 = vadd.f32 %v4148, %v4167
        %4169 = vdwg.mxu0
        %s4170 = scalar_lea.vmem %s5, 256
        %v4171 = vld [vmem:[%s4170] sm:$0xff]
        %v4172 = vld [vmem:[%s4170 + $0x8] sm:$0xff]
        %v4173 = vld [vmem:[%s4170 + $0x10] sm:$0xff]
        %v4174 = vld [vmem:[%s4170 + $0x18] sm:$0xff]
        %v4175 = vld [vmem:[%s4170 + $0x20] sm:$0xff]
        %v4176 = vld [vmem:[%s4170 + $0x28] sm:$0xff]
        %v4177 = vld [vmem:[%s4170 + $0x30] sm:$0xff]
        %v4178 = vld [vmem:[%s4170 + $0x38] sm:$0xff]
        %v4179 = vld [vmem:[%s4170 + $0x40] sm:$0xff]
        %v4180 = vld [vmem:[%s4170 + $0x48] sm:$0xff]
        %v4181 = vld [vmem:[%s4170 + $0x50] sm:$0xff]
        %v4182 = vld [vmem:[%s4170 + $0x58] sm:$0xff]
        %v4183 = vld [vmem:[%s4170 + $0x60] sm:$0xff]
        %v4184 = vld [vmem:[%s4170 + $0x68] sm:$0xff]
        %v4185 = vld [vmem:[%s4170 + $0x70] sm:$0xff]
        %v4186 = vld [vmem:[%s4170 + $0x78] sm:$0xff]
        %4187 = vmatpush.msra.mxu0 %v4186
        %4188 = vmatpush.msra.mxu0 %v4185
        %4189 = vmatpush.msra.mxu0 %v4184
        %4190 = vmatpush.msra.mxu0 %v4183
        %4191 = vmatpush.msra.mxu0 %v4182
        %4192 = vmatpush.msra.mxu0 %v4181
        %4193 = vmatpush.msra.mxu0 %v4180
        %4194 = vmatpush.msra.mxu0 %v4179
        %4195 = vmatpush.msra.mxu0 %v4178
        %4196 = vmatpush.msra.mxu0 %v4177
        %4197 = vmatpush.msra.mxu0 %v4176
        %4198 = vmatpush.msra.mxu0 %v4175
        %4199 = vmatpush.msra.mxu0 %v4174
        %4200 = vmatpush.msra.mxu0 %v4173
        %4201 = vmatpush.msra.mxu0 %v4172
        %4202 = vmatpush.msra.mxu0 %v4171
        %4203 = vmatmul.f32.gmra.mxu0 %v4090
        %v4204 = vpop.f32.mrf.mxu0
        %v4205 = vadd.f32 0.0, %v4204
        %4206 = vdwg.mxu0
        %v4207 = vadd.f32 %v4168, %v4205
        %s4208 = scalar_lea.vmem %s5, 384
        %v4209 = vld [vmem:[%s4208] sm:$0xff]
        %v4210 = vld [vmem:[%s4208 + $0x8] sm:$0xff]
        %v4211 = vld [vmem:[%s4208 + $0x10] sm:$0xff]
        %v4212 = vld [vmem:[%s4208 + $0x18] sm:$0xff]
        %v4213 = vld [vmem:[%s4208 + $0x20] sm:$0xff]
        %v4214 = vld [vmem:[%s4208 + $0x28] sm:$0xff]
        %v4215 = vld [vmem:[%s4208 + $0x30] sm:$0xff]
        %v4216 = vld [vmem:[%s4208 + $0x38] sm:$0xff]
        %v4217 = vld [vmem:[%s4208 + $0x40] sm:$0xff]
        %v4218 = vld [vmem:[%s4208 + $0x48] sm:$0xff]
        %v4219 = vld [vmem:[%s4208 + $0x50] sm:$0xff]
        %v4220 = vld [vmem:[%s4208 + $0x58] sm:$0xff]
        %v4221 = vld [vmem:[%s4208 + $0x60] sm:$0xff]
        %v4222 = vld [vmem:[%s4208 + $0x68] sm:$0xff]
        %v4223 = vld [vmem:[%s4208 + $0x70] sm:$0xff]
        %v4224 = vld [vmem:[%s4208 + $0x78] sm:$0xff]
        %4225 = vmatpush.msra.mxu0 %v4224
        %4226 = vmatpush.msra.mxu0 %v4223
        %4227 = vmatpush.msra.mxu0 %v4222
        %4228 = vmatpush.msra.mxu0 %v4221
        %4229 = vmatpush.msra.mxu0 %v4220
        %4230 = vmatpush.msra.mxu0 %v4219
        %4231 = vmatpush.msra.mxu0 %v4218
        %4232 = vmatpush.msra.mxu0 %v4217
        %4233 = vmatpush.msra.mxu0 %v4216
        %4234 = vmatpush.msra.mxu0 %v4215
        %4235 = vmatpush.msra.mxu0 %v4214
        %4236 = vmatpush.msra.mxu0 %v4213
        %4237 = vmatpush.msra.mxu0 %v4212
        %4238 = vmatpush.msra.mxu0 %v4211
        %4239 = vmatpush.msra.mxu0 %v4210
        %4240 = vmatpush.msra.mxu0 %v4209
        %4241 = vmatmul.f32.gmra.mxu0 %v4091
        %v4242 = vpop.f32.mrf.mxu0
        %v4243 = vadd.f32 0.0, %v4242
        %4244 = vdwg.mxu0
        %v4245 = vadd.f32 %v4207, %v4243
        %s4246 = scalar_lea.vmem %s5, 512
        %v4247 = vld [vmem:[%s4246] sm:$0xff]
        %v4248 = vld [vmem:[%s4246 + $0x8] sm:$0xff]
        %v4249 = vld [vmem:[%s4246 + $0x10] sm:$0xff]
        %v4250 = vld [vmem:[%s4246 + $0x18] sm:$0xff]
        %v4251 = vld [vmem:[%s4246 + $0x20] sm:$0xff]
        %v4252 = vld [vmem:[%s4246 + $0x28] sm:$0xff]
        %v4253 = vld [vmem:[%s4246 + $0x30] sm:$0xff]
        %v4254 = vld [vmem:[%s4246 + $0x38] sm:$0xff]
        %v4255 = vld [vmem:[%s4246 + $0x40] sm:$0xff]
        %v4256 = vld [vmem:[%s4246 + $0x48] sm:$0xff]
        %v4257 = vld [vmem:[%s4246 + $0x50] sm:$0xff]
        %v4258 = vld [vmem:[%s4246 + $0x58] sm:$0xff]
        %v4259 = vld [vmem:[%s4246 + $0x60] sm:$0xff]
        %v4260 = vld [vmem:[%s4246 + $0x68] sm:$0xff]
        %v4261 = vld [vmem:[%s4246 + $0x70] sm:$0xff]
        %v4262 = vld [vmem:[%s4246 + $0x78] sm:$0xff]
        %4263 = vmatpush.msra.mxu0 %v4262
        %4264 = vmatpush.msra.mxu0 %v4261
        %4265 = vmatpush.msra.mxu0 %v4260
        %4266 = vmatpush.msra.mxu0 %v4259
        %4267 = vmatpush.msra.mxu0 %v4258
        %4268 = vmatpush.msra.mxu0 %v4257
        %4269 = vmatpush.msra.mxu0 %v4256
        %4270 = vmatpush.msra.mxu0 %v4255
        %4271 = vmatpush.msra.mxu0 %v4254
        %4272 = vmatpush.msra.mxu0 %v4253
        %4273 = vmatpush.msra.mxu0 %v4252
        %4274 = vmatpush.msra.mxu0 %v4251
        %4275 = vmatpush.msra.mxu0 %v4250
        %4276 = vmatpush.msra.mxu0 %v4249
        %4277 = vmatpush.msra.mxu0 %v4248
        %4278 = vmatpush.msra.mxu0 %v4247
        %4279 = vmatmul.f32.gmra.mxu0 %v4092
        %v4280 = vpop.f32.mrf.mxu0
        %v4281 = vadd.f32 0.0, %v4280
        %4282 = vdwg.mxu0
        %v4283 = vadd.f32 %v4245, %v4281
        %s4284 = scalar_lea.vmem %s5, 640
        %v4285 = vld [vmem:[%s4284] sm:$0xff]
        %v4286 = vld [vmem:[%s4284 + $0x8] sm:$0xff]
        %v4287 = vld [vmem:[%s4284 + $0x10] sm:$0xff]
        %v4288 = vld [vmem:[%s4284 + $0x18] sm:$0xff]
        %v4289 = vld [vmem:[%s4284 + $0x20] sm:$0xff]
        %v4290 = vld [vmem:[%s4284 + $0x28] sm:$0xff]
        %v4291 = vld [vmem:[%s4284 + $0x30] sm:$0xff]
        %v4292 = vld [vmem:[%s4284 + $0x38] sm:$0xff]
        %v4293 = vld [vmem:[%s4284 + $0x40] sm:$0xff]
        %v4294 = vld [vmem:[%s4284 + $0x48] sm:$0xff]
        %v4295 = vld [vmem:[%s4284 + $0x50] sm:$0xff]
        %v4296 = vld [vmem:[%s4284 + $0x58] sm:$0xff]
        %v4297 = vld [vmem:[%s4284 + $0x60] sm:$0xff]
        %v4298 = vld [vmem:[%s4284 + $0x68] sm:$0xff]
        %v4299 = vld [vmem:[%s4284 + $0x70] sm:$0xff]
        %v4300 = vld [vmem:[%s4284 + $0x78] sm:$0xff]
        %4301 = vmatpush.msra.mxu0 %v4300
        %4302 = vmatpush.msra.mxu0 %v4299
        %4303 = vmatpush.msra.mxu0 %v4298
        %4304 = vmatpush.msra.mxu0 %v4297
        %4305 = vmatpush.msra.mxu0 %v4296
        %4306 = vmatpush.msra.mxu0 %v4295
        %4307 = vmatpush.msra.mxu0 %v4294
        %4308 = vmatpush.msra.mxu0 %v4293
        %4309 = vmatpush.msra.mxu0 %v4292
        %4310 = vmatpush.msra.mxu0 %v4291
        %4311 = vmatpush.msra.mxu0 %v4290
        %4312 = vmatpush.msra.mxu0 %v4289
        %4313 = vmatpush.msra.mxu0 %v4288
        %4314 = vmatpush.msra.mxu0 %v4287
        %4315 = vmatpush.msra.mxu0 %v4286
        %4316 = vmatpush.msra.mxu0 %v4285
        %4317 = vmatmul.f32.gmra.mxu0 %v4093
        %v4318 = vpop.f32.mrf.mxu0
        %v4319 = vadd.f32 0.0, %v4318
        %4320 = vdwg.mxu0
        %v4321 = vadd.f32 %v4283, %v4319
        %s4322 = scalar_lea.vmem %s5, 768
        %v4323 = vld [vmem:[%s4322] sm:$0xff]
        %v4324 = vld [vmem:[%s4322 + $0x8] sm:$0xff]
        %v4325 = vld [vmem:[%s4322 + $0x10] sm:$0xff]
        %v4326 = vld [vmem:[%s4322 + $0x18] sm:$0xff]
        %v4327 = vld [vmem:[%s4322 + $0x20] sm:$0xff]
        %v4328 = vld [vmem:[%s4322 + $0x28] sm:$0xff]
        %v4329 = vld [vmem:[%s4322 + $0x30] sm:$0xff]
        %v4330 = vld [vmem:[%s4322 + $0x38] sm:$0xff]
        %v4331 = vld [vmem:[%s4322 + $0x40] sm:$0xff]
        %v4332 = vld [vmem:[%s4322 + $0x48] sm:$0xff]
        %v4333 = vld [vmem:[%s4322 + $0x50] sm:$0xff]
        %v4334 = vld [vmem:[%s4322 + $0x58] sm:$0xff]
        %v4335 = vld [vmem:[%s4322 + $0x60] sm:$0xff]
        %v4336 = vld [vmem:[%s4322 + $0x68] sm:$0xff]
        %v4337 = vld [vmem:[%s4322 + $0x70] sm:$0xff]
        %v4338 = vld [vmem:[%s4322 + $0x78] sm:$0xff]
        %4339 = vmatpush.msra.mxu0 %v4338
        %4340 = vmatpush.msra.mxu0 %v4337
        %4341 = vmatpush.msra.mxu0 %v4336
        %4342 = vmatpush.msra.mxu0 %v4335
        %4343 = vmatpush.msra.mxu0 %v4334
        %4344 = vmatpush.msra.mxu0 %v4333
        %4345 = vmatpush.msra.mxu0 %v4332
        %4346 = vmatpush.msra.mxu0 %v4331
        %4347 = vmatpush.msra.mxu0 %v4330
        %4348 = vmatpush.msra.mxu0 %v4329
        %4349 = vmatpush.msra.mxu0 %v4328
        %4350 = vmatpush.msra.mxu0 %v4327
        %4351 = vmatpush.msra.mxu0 %v4326
        %4352 = vmatpush.msra.mxu0 %v4325
        %4353 = vmatpush.msra.mxu0 %v4324
        %4354 = vmatpush.msra.mxu0 %v4323
        %4355 = vmatmul.f32.gmra.mxu0 %v4094
        %v4356 = vpop.f32.mrf.mxu0
        %v4357 = vadd.f32 0.0, %v4356
        %4358 = vdwg.mxu0
        %v4359 = vadd.f32 %v4321, %v4357
        %s4360 = scalar_lea.vmem %s5, 896
        %v4361 = vld [vmem:[%s4360] sm:$0xff]
        %v4362 = vld [vmem:[%s4360 + $0x8] sm:$0xff]
        %v4363 = vld [vmem:[%s4360 + $0x10] sm:$0xff]
        %v4364 = vld [vmem:[%s4360 + $0x18] sm:$0xff]
        %v4365 = vld [vmem:[%s4360 + $0x20] sm:$0xff]
        %v4366 = vld [vmem:[%s4360 + $0x28] sm:$0xff]
        %v4367 = vld [vmem:[%s4360 + $0x30] sm:$0xff]
        %v4368 = vld [vmem:[%s4360 + $0x38] sm:$0xff]
        %v4369 = vld [vmem:[%s4360 + $0x40] sm:$0xff]
        %v4370 = vld [vmem:[%s4360 + $0x48] sm:$0xff]
        %v4371 = vld [vmem:[%s4360 + $0x50] sm:$0xff]
        %v4372 = vld [vmem:[%s4360 + $0x58] sm:$0xff]
        %v4373 = vld [vmem:[%s4360 + $0x60] sm:$0xff]
        %v4374 = vld [vmem:[%s4360 + $0x68] sm:$0xff]
        %v4375 = vld [vmem:[%s4360 + $0x70] sm:$0xff]
        %v4376 = vld [vmem:[%s4360 + $0x78] sm:$0xff]
        %4377 = vmatpush.msra.mxu0 %v4376
        %4378 = vmatpush.msra.mxu0 %v4375
        %4379 = vmatpush.msra.mxu0 %v4374
        %4380 = vmatpush.msra.mxu0 %v4373
        %4381 = vmatpush.msra.mxu0 %v4372
        %4382 = vmatpush.msra.mxu0 %v4371
        %4383 = vmatpush.msra.mxu0 %v4370
        %4384 = vmatpush.msra.mxu0 %v4369
        %4385 = vmatpush.msra.mxu0 %v4368
        %4386 = vmatpush.msra.mxu0 %v4367
        %4387 = vmatpush.msra.mxu0 %v4366
        %4388 = vmatpush.msra.mxu0 %v4365
        %4389 = vmatpush.msra.mxu0 %v4364
        %4390 = vmatpush.msra.mxu0 %v4363
        %4391 = vmatpush.msra.mxu0 %v4362
        %4392 = vmatpush.msra.mxu0 %v4361
        %4393 = vmatmul.f32.gmra.mxu0 %v4095
        %v4394 = vpop.f32.mrf.mxu0
        %v4395 = vadd.f32 0.0, %v4394
        %4396 = vdwg.mxu0
        %v4397 = vadd.f32 %v4359, %v4395
        %s4398 = scalar_lea.vmem %s5, 1024
        %v4399 = vld [vmem:[%s4398] sm:$0xff]
        %v4400 = vld [vmem:[%s4398 + $0x8] sm:$0xff]
        %v4401 = vld [vmem:[%s4398 + $0x10] sm:$0xff]
        %v4402 = vld [vmem:[%s4398 + $0x18] sm:$0xff]
        %v4403 = vld [vmem:[%s4398 + $0x20] sm:$0xff]
        %v4404 = vld [vmem:[%s4398 + $0x28] sm:$0xff]
        %v4405 = vld [vmem:[%s4398 + $0x30] sm:$0xff]
        %v4406 = vld [vmem:[%s4398 + $0x38] sm:$0xff]
        %v4407 = vld [vmem:[%s4398 + $0x40] sm:$0xff]
        %v4408 = vld [vmem:[%s4398 + $0x48] sm:$0xff]
        %v4409 = vld [vmem:[%s4398 + $0x50] sm:$0xff]
        %v4410 = vld [vmem:[%s4398 + $0x58] sm:$0xff]
        %v4411 = vld [vmem:[%s4398 + $0x60] sm:$0xff]
        %v4412 = vld [vmem:[%s4398 + $0x68] sm:$0xff]
        %v4413 = vld [vmem:[%s4398 + $0x70] sm:$0xff]
        %v4414 = vld [vmem:[%s4398 + $0x78] sm:$0xff]
        %4415 = vmatpush.msra.mxu0 %v4414
        %4416 = vmatpush.msra.mxu0 %v4413
        %4417 = vmatpush.msra.mxu0 %v4412
        %4418 = vmatpush.msra.mxu0 %v4411
        %4419 = vmatpush.msra.mxu0 %v4410
        %4420 = vmatpush.msra.mxu0 %v4409
        %4421 = vmatpush.msra.mxu0 %v4408
        %4422 = vmatpush.msra.mxu0 %v4407
        %4423 = vmatpush.msra.mxu0 %v4406
        %4424 = vmatpush.msra.mxu0 %v4405
        %4425 = vmatpush.msra.mxu0 %v4404
        %4426 = vmatpush.msra.mxu0 %v4403
        %4427 = vmatpush.msra.mxu0 %v4402
        %4428 = vmatpush.msra.mxu0 %v4401
        %4429 = vmatpush.msra.mxu0 %v4400
        %4430 = vmatpush.msra.mxu0 %v4399
        %4431 = vmatmul.f32.gmra.mxu0 %v4096
        %v4432 = vpop.f32.mrf.mxu0
        %v4433 = vadd.f32 0.0, %v4432
        %4434 = vdwg.mxu0
        %v4435 = vadd.f32 %v4397, %v4433
        %v4436 = vld [vmem:[%s6] sm:$0x1]
        %v4438 = vperm.slane %v4436, 0
        %v4440 = vadd.f32 %v4435, %v4438
        %v4441 = vmax.f32 %v4440, 0.0
        %4442 = vst [vmem:[%s631] sm:$0xff] %v4441
        %s4443 = sand.u32 %s181, 1
        %s4444 = scalar_lea.sflag [#allocation5], %s4443
        %s4445 = sand.u32 %s181, 1
        %s4446 = smul.addr %s4445, 8
        %s4447 = scalar_lea.vmem [#allocation4], %s4446
        // Predicated region
        $region87: #{encoder_forward.1} parent=81 // pred_check
          %p4448 = pneg %p191
        $region88: #{encoder_forward.1} parent=81 // pred_check_branch
          %4450 = sbr.rel (%p4448) target = $region90
        $region89: #{encoder_forward.1} parent=81 // pred_region
          %4452 = vsyncadd %s4444, 0
          %s4453 = smul.addr %s21, 8
          %s4454 = scalar_lea.hbm %s7, %s4453
          %s4456 = sshll.u32 %s4447, 4
          %s4457 = int_to_ptr.vmem [resolvable:$true] %s4456
          %s4458 = sshll.u32 %s4454, 4
          %s4459 = int_to_ptr.hbm [resolvable:$true] %s4458
          %4461 = dma.vmem_to_hbm [thread:$0]  %s4457, 128, %s4459, %s4444
        $region90: #{encoder_forward.1} parent=81 // pred_fallthru
          _
      $region82: #{encoder_forward.1} parent=5 // pred_fallthru
        _
      %p4462 = scmp.le.s32.totalorder 2, %s16
      // Predicated region
      $region91: #{encoder_forward.1} parent=5 // pred_check
        %p4463 = pneg %p4462
      $region92: #{encoder_forward.1} parent=5 // pred_check_branch
        %4465 = sbr.rel (%p4463) target = $region94
      $region93: #{encoder_forward.1} parent=5 // pred_region
        %s4466 = ssub.s32 %s16, 2
        // Predicated region
        $region95: #{encoder_forward.1} parent=93 // pred_check
          %p4467 = pneg %p197
        $region96: #{encoder_forward.1} parent=93 // pred_check_branch
          %4469 = sbr.rel (%p4467) target = $region98
        $region97: #{encoder_forward.1} parent=93 // pred_region
          %s4470 = sand.u32 %s182, 1
          %s4471 = scalar_lea.sflag [#allocation5], %s4470
          %s4472 = sand.u32 %s182, 1
          %s4473 = smul.addr %s4472, 8
          %s4474 = scalar_lea.vmem [#allocation4], %s4473
          %4476 = dma.done %s4471, 128
        $region98: #{encoder_forward.1} parent=93 // pred_fallthru
          _
      $region94: #{encoder_forward.1} parent=5 // pred_fallthru
        _
    $region6: #{encoder_forward.1} parent=1 // loop_footer
      %s20 = sadd.s32 1, %s16
    $region7: #{encoder_forward.1} parent=1 // loop_footer_branch
      %15 = sbr.rel target = $region3
    $region8: #{encoder_forward.1} parent=1 // loop_exit
      _
    %4477 = vsyncpa [#allocation5], 1
    %s4478 = scalar_lea.sflag [#allocation5], 1
    %4479 = vsyncpa %s4478, 1

</llo_original>
